<compile_context>
chip_gen: v6e
topology: v6e:2x2x1
jax: 0.10.0
libtpu: 0.0.40
codegen_flags: <defaults>
</compile_context>

<pallas_src>
import functools

import jax
import jax.numpy as jnp
from jax.experimental import pallas as pl
from jax.experimental.pallas import tpu as pltpu

_GEMM_DTYPE = jnp.bfloat16   # MXU operand dtype + inter-layer activation storage dtype
_BN_EPS = 1e-5
_K = 4                       # conv / deconv kernel size

_DOWN = [("conv1", 3, 8), ("conv2", 8, 16), ("conv3", 16, 32), ("conv4", 32, 64)]
_UP = [("deconv1", 64, 32), ("deconv2", 32, 16), ("deconv3", 16, 8), ("deconv4", 8, 3)]

# Sub-pixel decomposition of ConvTranspose2d(k=4, s=2, p=1): output row 2p+rh reads input
# rows {p-1, p} (rh=0) or {p, p+1} (rh=1); matching kernel taps in order of increasing
# input row:
_PHASE_TAPS = ((3, 1), (2, 0))   # _PHASE_TAPS[parity][dh] -> original 4-tap kernel index


# ----------------------------------------------------------------------------
# Fused per-layer Pallas kernel: GEMM + BN stats + affine + ReLU   (or bias + Tanh)
# ----------------------------------------------------------------------------
def _fused_layer_kernel(a_ref, w_ref, p0_ref, p1_ref, o_ref, *, act, inv_m, n_phase):
    """a : (P, K, M) bf16 im2col patches  (output pixels on the 128-lane axis)
       w : (P, C, K) bf16 weights         (output channels on the sublane axis)
       p0/p1: (C, 1) f32                  (gamma, beta) for BN layers, (bias, unused) for tanh
       o : (P, C, M) bf16 (BN/ReLU) or f32 (final tanh)."""
    # One clean 2-D MXU matmul per phase (P is 1 for down layers, 4 for up layers),
    # f32 accumulation. All epilogue math stays f32 (v5e VPU/EUP have no bf16 path).
    ys = [jnp.dot(w_ref[p], a_ref[p], preferred_element_type=jnp.float32)
          for p in range(n_phase)]

    if act == "tanh":
        bias = p0_ref[...]                                   # (C, 1)
        for p in range(n_phase):
            o_ref[p] = jnp.tanh(ys[p] + bias).astype(o_ref.dtype)
    else:
        # Training-mode BatchNorm: batch mean, biased batch variance via E[y^2]-mean^2.
        # (The conv bias cancels exactly under this normalization, so it is never added.)
        sum_y = sum(jnp.sum(y, axis=1, keepdims=True) for y in ys)        # (C, 1)
        sum_sq = sum(jnp.sum(y * y, axis=1, keepdims=True) for y in ys)   # (C, 1)
        mean = sum_y * inv_m
        var = sum_sq * inv_m - mean * mean
        scale = p0_ref[...] * jax.lax.rsqrt(var + _BN_EPS)
        shift = p1_ref[...] - mean * scale
        for p in range(n_phase):
            # bf16 cast only at the final store.
            o_ref[p] = jnp.maximum(ys[p] * scale + shift, 0.0).astype(o_ref.dtype)


def fused_conv_bn_act(a, w, p0, p1, act, out_dtype):
    """a: (P, K, M) bf16, w: (P, C, K) bf16, p0/p1: (C,) f32. Whole layer in ONE gridless
    kernel call (largest per-call footprint here is well under 0.5 MiB)."""
    P, K, M = a.shape
    C = w.shape[1]
    assert w.shape == (P, C, K)
    assert a.dtype == _GEMM_DTYPE and w.dtype == _GEMM_DTYPE
    vmem = pl.BlockSpec(memory_space=pltpu.MemorySpace.VMEM)
    kern = functools.partial(_fused_layer_kernel, act=act,
                             inv_m=1.0 / float(P * M), n_phase=P)
    return pl.pallas_call(
        kern,
        out_shape=jax.ShapeDtypeStruct((P, C, M), out_dtype),
        in_specs=[vmem, vmem, vmem, vmem],
        out_specs=vmem,
    )(a, w,
      p0.reshape(C, 1).astype(jnp.float32),
      p1.reshape(C, 1).astype(jnp.float32))


# ----------------------------------------------------------------------------
# XLA glue: channel-major im2col (K-major / pixel-minor), layer wrappers
# ----------------------------------------------------------------------------
def _im2col_cm(x_cnhw, k, stride, pad_h, pad_w):
    """x is channel-major (C, N, H, W). Returns the transposed column matrix
    (K, M) = (k*k*C, N*Ho*Wo); K ordered (kh, kw, c), M ordered (n, oh, ow).
    No channel transpose is needed in this layout."""
    C, N, H, W = x_cnhw.shape
    xp = jnp.pad(x_cnhw, ((0, 0), (0, 0), pad_h, pad_w))
    Hp = H + pad_h[0] + pad_h[1]
    Wp = W + pad_w[0] + pad_w[1]
    Ho = (Hp - k) // stride + 1
    Wo = (Wp - k) // stride + 1
    pats = []
    for kh in range(k):
        for kw in range(k):
            pats.append(xp[:, :, kh:kh + stride * (Ho - 1) + 1:stride,
                           kw:kw + stride * (Wo - 1) + 1:stride])
    col = jnp.stack(pats, axis=0)                  # (k*k, C, N, Ho, Wo)
    return col.reshape(k * k * C, N * Ho * Wo), (N, Ho, Wo)


def _down_layer(x_cm, p):
    """Conv2d(k=4, s=2, p=1) + BatchNorm + ReLU -> one fused pallas_call.
    In: (Cin, N, H, W) bf16, out: (Cout, N, H/2, W/2) bf16 (no transposes)."""
    col, (N, Ho, Wo) = _im2col_cm(x_cm, k=_K, stride=2, pad_h=(1, 1), pad_w=(1, 1))
    out = fused_conv_bn_act(col[None], p["w"], p["gamma"], p["beta"],
                            act="relu", out_dtype=_GEMM_DTYPE)
    C = out.shape[1]
    return out.reshape(C, N, Ho, Wo)


def _up_layer(x_cm, p, act):
    """ConvTranspose2d(k=4, s=2, p=1) [+ BN + ReLU | + bias + Tanh] -> one fused call.
    Sub-pixel decomposition: output parity phase (rh, rw) is a 2x2 stride-1 conv.
    In: (Cin, N, H, W) bf16, out: (Cout, N, 2H, 2W)."""
    C, N, H, W = x_cm.shape
    cols = []
    for rh in range(2):
        for rw in range(2):
            ph = (1, 0) if rh == 0 else (0, 1)
            pw = (1, 0) if rw == 0 else (0, 1)
            col, _ = _im2col_cm(x_cm, k=2, stride=1, pad_h=ph, pad_w=pw)
            cols.append(col)
    a = jnp.stack(cols, axis=0)                    # (4, 4*Cin, N*H*W) bf16
    if act == "tanh":
        out = fused_conv_bn_act(a, p["w"], p["b"], jnp.zeros_like(p["b"]),
                                act="tanh", out_dtype=jnp.float32)
    else:
        out = fused_conv_bn_act(a, p["w"], p["gamma"], p["beta"],
                                act="relu", out_dtype=_GEMM_DTYPE)
    Co = out.shape[1]
    # Sub-pixel interleave (the one remaining per-layer transpose; the following skip add
    # fuses into it). TODO(synk): fold this into the consumer's im2col at real sizes.
    y = out.reshape(2, 2, Co, N, H, W)             # (rh, rw, c, n, p, q)
    y = jnp.transpose(y, (2, 3, 4, 0, 5, 1))       # (c, n, p, rh, q, rw)
    return y.reshape(Co, N, 2 * H, 2 * W)


# ----------------------------------------------------------------------------
# Parameters
# ----------------------------------------------------------------------------
def _deconv_phase_weights(w_pt):
    """(cin, cout, 4, 4) PyTorch ConvTranspose2d weight -> (4, cout, 4*cin) per-phase
    GEMM weights; phase order (rh, rw), K order (dh, dw, cin)."""
    ws = []
    for rh in range(2):
        for rw in range(2):
            sel = jnp.take(w_pt, jnp.array(_PHASE_TAPS[rh]), axis=2)
            sel = jnp.take(sel, jnp.array(_PHASE_TAPS[rw]), axis=3)   # (cin, cout, 2, 2)
            sel = jnp.transpose(sel, (1, 2, 3, 0))                    # (cout, dh, dw, cin)
            ws.append(sel.reshape(sel.shape[0], -1))
    return jnp.stack(ws, axis=0)


def init_params(key):
    params = {}
    keys = jax.random.split(key, 4 * (len(_DOWN) + len(_UP)))
    idx = 0

    def rnd(shape, scale=0.1):
        nonlocal idx
        v = scale * jax.random.normal(keys[idx], shape, dtype=jnp.float32)
        idx += 1
        return v

    for name, cin, cout in _DOWN:
        w_pt = rnd((cout, cin, _K, _K))            # PyTorch Conv2d layout (cout,cin,kh,kw)
        params[name] = dict(
            w_pt=w_pt,                             # f32, kept only for the pure-JAX reference
            # pre-cast bf16 GEMM weight, (1, cout, 16*cin), K ordered (kh, kw, cin)
            w=jnp.transpose(w_pt, (0, 2, 3, 1)).reshape(cout, -1)[None].astype(_GEMM_DTYPE),
            b=rnd((cout,)),                        # unused by the kernel (BN cancels it)
            gamma=1.0 + rnd((cout,)),
            beta=rnd((cout,)),
        )
    for name, cin, cout in _UP:
        w_pt = rnd((cin, cout, _K, _K))            # PyTorch ConvTranspose2d layout
        p = dict(
            w_pt=w_pt,
            w=_deconv_phase_weights(w_pt).astype(_GEMM_DTYPE),   # (4, cout, 4*cin) bf16
            b=rnd((cout,)),
        )
        if name != "deconv4":                      # deconv4 has no BatchNorm (just Tanh)
            p["gamma"] = 1.0 + rnd((cout,))
            p["beta"] = rnd((cout,))
        params[name] = p
    return params


# ----------------------------------------------------------------------------
# Forward pass (Pallas path). Public interface is NCHW in / NCHW out like PyTorch.
# ----------------------------------------------------------------------------
def generator_forward(params, x_nchw):
    # Single cast to bf16 + channel-major layout at the network boundary.
    x = jnp.transpose(x_nchw, (1, 0, 2, 3)).astype(_GEMM_DTYPE)     # (C, N, H, W)
    x1 = _down_layer(x, params["conv1"])
    x2 = _down_layer(x1, params["conv2"])
    x3 = _down_layer(x2, params["conv3"])
    x4 = _down_layer(x3, params["conv4"])
    x5 = _up_layer(x4, params["deconv1"], act="relu")
    x6 = _up_layer(x5 + x3, params["deconv2"], act="relu")   # skip adds fuse with interleave
    x7 = _up_layer(x6 + x2, params["deconv3"], act="relu")
    x8 = _up_layer(x7 + x1, params["deconv4"], act="tanh")   # f32 output
    return jnp.transpose(x8, (1, 0, 2, 3))                   # back to NCHW


# ----------------------------------------------------------------------------
# Pure-JAX reference (lax convolutions) -- only used for the self-check in __main__.
# Uses bf16 matmul operands and bf16 inter-layer storage so it tracks the kernel path.
# ----------------------------------------------------------------------------
def reference_forward(params, x_nchw):
    dn = ("NHWC", "HWIO", "NHWC")
    dt = _GEMM_DTYPE

    def bn_relu(y, p):
        mean = jnp.mean(y, axis=(0, 1, 2))
        var = jnp.mean(jnp.square(y - mean), axis=(0, 1, 2))
        out = jnp.maximum((y - mean) * jax.lax.rsqrt(var + _BN_EPS) * p["gamma"] + p["beta"], 0.0)
        return out.astype(dt).astype(jnp.float32)   # mimic bf16 inter-layer storage

    def down(xx, p):
        w = jnp.transpose(p["w_pt"], (2, 3, 1, 0))                  # HWIO
        y = jax.lax.conv_general_dilated(
            xx.astype(dt), w.astype(dt), window_strides=(2, 2),
            padding=((1, 1), (1, 1)), dimension_numbers=dn,
            preferred_element_type=jnp.float32) + p["b"]
        return bn_relu(y, p)

    def up(xx, p):
        w = jnp.transpose(jnp.flip(p["w_pt"], axis=(2, 3)), (2, 3, 0, 1))   # flipped, HWIO
        return jax.lax.conv_general_dilated(
            xx.astype(dt), w.astype(dt), window_strides=(1, 1),
            padding=((2, 2), (2, 2)), lhs_dilation=(2, 2), dimension_numbers=dn,
            preferred_element_type=jnp.float32) + p["b"]

    x = jnp.transpose(x_nchw, (0, 2, 3, 1)).astype(jnp.float32)
    x1 = down(x, params["conv1"])
    x2 = down(x1, params["conv2"])
    x3 = down(x2, params["conv3"])
    x4 = down(x3, params["conv4"])
    x5 = bn_relu(up(x4, params["deconv1"]), params["deconv1"])
    x6 = bn_relu(up(x5 + x3, params["deconv2"]), params["deconv2"])
    x7 = bn_relu(up(x6 + x2, params["deconv3"]), params["deconv3"])
    x8 = jnp.tanh(up(x7 + x1, params["deconv4"]))
    return jnp.transpose(x8, (0, 3, 1, 2))


if __name__ == "__main__":
    key = jax.random.PRNGKey(0)
    pkey, xkey = jax.random.split(key)
    params = init_params(pkey)
    # 32x32 input (still small) so the bottleneck conv4 BatchNorm sees 8 samples per
    # channel -> the end-to-end numeric self-check below is well-conditioned.
    x = jax.random.normal(xkey, (2, 3, 32, 32), dtype=jnp.float32)  # NCHW

    fwd = jax.jit(generator_forward)
    out = jax.block_until_ready(fwd(params, x))

    assert out.shape == (2, 3, 32, 32), out.shape
    assert bool(jnp.all(jnp.isfinite(out)))
    assert bool(jnp.all(jnp.abs(out) <= 1.0 + 1e-6))                # final Tanh range

    # Self-check against the pure-JAX (lax conv) reference. Both paths use bf16 matmul
    # operands and bf16 inter-layer storage, so remaining differences are accumulation
    # order + one bf16 rounding in the skip adds; structural bugs would show as O(0.3+).
    ref = jax.block_until_ready(jax.jit(reference_forward)(params, x))
    max_diff = float(jnp.max(jnp.abs(out - ref)))
    assert max_diff < 0.1, f"mismatch vs reference: max |diff| = {max_diff}"

    print("KERNEL_OK")
</pallas_src>

<mosaic_0001>
module attributes {stable_mosaic.version = 11 : i64} {
  func.func @_fused_layer_kernel(%arg0: memref<1x48x512xbf16, #tpu.memory_space<vmem>>, %arg1: memref<1x8x48xbf16, #tpu.memory_space<vmem>>, %arg2: memref<8x1xf32, #tpu.memory_space<vmem>>, %arg3: memref<8x1xf32, #tpu.memory_space<vmem>>, %arg4: memref<1x8x512xbf16, #tpu.memory_space<vmem>>) attributes {dimension_semantics = [], scalar_prefetch = 0 : i64, scratch_operands = 0 : i64, tpu.core_type = #tpu.core_type<tc>} {
    %c0 = arith.constant 0 : index
    %c0_0 = arith.constant 0 : index
    %c0_1 = arith.constant 0 : index
    %0 = vector.load %arg1[%c0, %c0_0, %c0_1] : memref<1x8x48xbf16, #tpu.memory_space<vmem>>, vector<1x8x48xbf16>
    %1 = vector.shape_cast %0 : vector<1x8x48xbf16> to vector<8x48xbf16>
    %c0_2 = arith.constant 0 : index
    %c0_3 = arith.constant 0 : index
    %c0_4 = arith.constant 0 : index
    %2 = vector.load %arg0[%c0_2, %c0_3, %c0_4] : memref<1x48x512xbf16, #tpu.memory_space<vmem>>, vector<1x48x512xbf16>
    %3 = vector.shape_cast %2 : vector<1x48x512xbf16> to vector<48x512xbf16>
    %cst = arith.constant dense<0.000000e+00> : vector<8x512xf32>
    %4 = tpu.matmul %1, %3, %cst {dimension_numbers = #tpu.dot_dimension_numbers<[1], [0], [0], [1], [0, 0, 1, 1], [], []>} : vector<8x48xbf16>, vector<48x512xbf16>, vector<8x512xf32> -> vector<8x512xf32>
    %cst_5 = arith.constant dense<0.000000e+00> : vector<8xf32>
    %5 = vector.multi_reduction <add>, %4, %cst_5 [1] : vector<8x512xf32> to vector<8xf32>
    %6 = vector.shape_cast %5 : vector<8xf32> to vector<8x1xf32>
    %cst_6 = arith.constant 0.000000e+00 : f32
    %7 = vector.broadcast %cst_6 : f32 to vector<8x1xf32>
    %8 = arith.addf %7, %6 : vector<8x1xf32>
    %9 = arith.mulf %4, %4 : vector<8x512xf32>
    %cst_7 = arith.constant dense<0.000000e+00> : vector<8xf32>
    %10 = vector.multi_reduction <add>, %9, %cst_7 [1] : vector<8x512xf32> to vector<8xf32>
    %11 = vector.shape_cast %10 : vector<8xf32> to vector<8x1xf32>
    %cst_8 = arith.constant 0.000000e+00 : f32
    %12 = vector.broadcast %cst_8 : f32 to vector<8x1xf32>
    %13 = arith.addf %12, %11 : vector<8x1xf32>
    %cst_9 = arith.constant 0.001953125 : f32
    %14 = vector.broadcast %cst_9 : f32 to vector<8x1xf32>
    %15 = arith.mulf %8, %14 : vector<8x1xf32>
    %cst_10 = arith.constant 0.001953125 : f32
    %16 = vector.broadcast %cst_10 : f32 to vector<8x1xf32>
    %17 = arith.mulf %13, %16 : vector<8x1xf32>
    %18 = arith.mulf %15, %15 : vector<8x1xf32>
    %19 = arith.subf %17, %18 : vector<8x1xf32>
    %c0_11 = arith.constant 0 : index
    %c0_12 = arith.constant 0 : index
    %20 = vector.load %arg2[%c0_11, %c0_12] : memref<8x1xf32, #tpu.memory_space<vmem>>, vector<8x1xf32>
    %cst_13 = arith.constant 9.99999974E-6 : f32
    %21 = vector.broadcast %cst_13 : f32 to vector<8x1xf32>
    %22 = arith.addf %19, %21 : vector<8x1xf32>
    %23 = math.rsqrt %22 : vector<8x1xf32>
    %24 = arith.mulf %20, %23 : vector<8x1xf32>
    %c0_14 = arith.constant 0 : index
    %c0_15 = arith.constant 0 : index
    %25 = vector.load %arg3[%c0_14, %c0_15] : memref<8x1xf32, #tpu.memory_space<vmem>>, vector<8x1xf32>
    %26 = arith.mulf %15, %24 : vector<8x1xf32>
    %27 = arith.subf %25, %26 : vector<8x1xf32>
    %28 = vector.broadcast %24 : vector<8x1xf32> to vector<8x512xf32>
    %29 = arith.mulf %4, %28 : vector<8x512xf32>
    %30 = vector.broadcast %27 : vector<8x1xf32> to vector<8x512xf32>
    %31 = arith.addf %29, %30 : vector<8x512xf32>
    %cst_16 = arith.constant 0.000000e+00 : f32
    %32 = vector.broadcast %cst_16 : f32 to vector<8x512xf32>
    %33 = arith.maximumf %31, %32 : vector<8x512xf32>
    %34 = arith.truncf %33 : vector<8x512xf32> to vector<8x512xbf16>
    %c0_17 = arith.constant 0 : index
    %c0_18 = arith.constant 0 : index
    %c0_19 = arith.constant 0 : index
    %35 = vector.load %arg4[%c0_17, %c0_18, %c0_19] : memref<1x8x512xbf16, #tpu.memory_space<vmem>>, vector<1x8x512xbf16>
    %36 = vector.shape_cast %35 : vector<1x8x512xbf16> to vector<8x512xbf16>
    %37 = vector.shape_cast %34 : vector<8x512xbf16> to vector<1x8x512xbf16>
    tpu.vector_store %arg4[%c0_17, %c0_18, %c0_19], %37 {strides = array<i32>} : memref<1x8x512xbf16, #tpu.memory_space<vmem>>, vector<1x8x512xbf16>,
    return
  }
}

module attributes {stable_mosaic.version = 11 : i64} {
  func.func @_fused_layer_kernel(%arg0: memref<1x128x128xbf16, #tpu.memory_space<vmem>>, %arg1: memref<1x16x128xbf16, #tpu.memory_space<vmem>>, %arg2: memref<16x1xf32, #tpu.memory_space<vmem>>, %arg3: memref<16x1xf32, #tpu.memory_space<vmem>>, %arg4: memref<1x16x128xbf16, #tpu.memory_space<vmem>>) attributes {dimension_semantics = [], scalar_prefetch = 0 : i64, scratch_operands = 0 : i64, tpu.core_type = #tpu.core_type<tc>} {
    %c0 = arith.constant 0 : index
    %c0_0 = arith.constant 0 : index
    %c0_1 = arith.constant 0 : index
    %0 = vector.load %arg1[%c0, %c0_0, %c0_1] : memref<1x16x128xbf16, #tpu.memory_space<vmem>>, vector<1x16x128xbf16>
    %1 = vector.shape_cast %0 : vector<1x16x128xbf16> to vector<16x128xbf16>
    %c0_2 = arith.constant 0 : index
    %c0_3 = arith.constant 0 : index
    %c0_4 = arith.constant 0 : index
    %2 = vector.load %arg0[%c0_2, %c0_3, %c0_4] : memref<1x128x128xbf16, #tpu.memory_space<vmem>>, vector<1x128x128xbf16>
    %3 = vector.shape_cast %2 : vector<1x128x128xbf16> to vector<128x128xbf16>
    %cst = arith.constant dense<0.000000e+00> : vector<16x128xf32>
    %4 = tpu.matmul %1, %3, %cst {dimension_numbers = #tpu.dot_dimension_numbers<[1], [0], [0], [1], [0, 0, 1, 1], [], []>} : vector<16x128xbf16>, vector<128x128xbf16>, vector<16x128xf32> -> vector<16x128xf32>
    %cst_5 = arith.constant dense<0.000000e+00> : vector<16xf32>
    %5 = vector.multi_reduction <add>, %4, %cst_5 [1] : vector<16x128xf32> to vector<16xf32>
    %6 = vector.shape_cast %5 : vector<16xf32> to vector<16x1xf32>
    %cst_6 = arith.constant 0.000000e+00 : f32
    %7 = vector.broadcast %cst_6 : f32 to vector<16x1xf32>
    %8 = arith.addf %7, %6 : vector<16x1xf32>
    %9 = arith.mulf %4, %4 : vector<16x128xf32>
    %cst_7 = arith.constant dense<0.000000e+00> : vector<16xf32>
    %10 = vector.multi_reduction <add>, %9, %cst_7 [1] : vector<16x128xf32> to vector<16xf32>
    %11 = vector.shape_cast %10 : vector<16xf32> to vector<16x1xf32>
    %cst_8 = arith.constant 0.000000e+00 : f32
    %12 = vector.broadcast %cst_8 : f32 to vector<16x1xf32>
    %13 = arith.addf %12, %11 : vector<16x1xf32>
    %cst_9 = arith.constant 7.812500e-03 : f32
    %14 = vector.broadcast %cst_9 : f32 to vector<16x1xf32>
    %15 = arith.mulf %8, %14 : vector<16x1xf32>
    %cst_10 = arith.constant 7.812500e-03 : f32
    %16 = vector.broadcast %cst_10 : f32 to vector<16x1xf32>
    %17 = arith.mulf %13, %16 : vector<16x1xf32>
    %18 = arith.mulf %15, %15 : vector<16x1xf32>
    %19 = arith.subf %17, %18 : vector<16x1xf32>
    %c0_11 = arith.constant 0 : index
    %c0_12 = arith.constant 0 : index
    %20 = vector.load %arg2[%c0_11, %c0_12] : memref<16x1xf32, #tpu.memory_space<vmem>>, vector<16x1xf32>
    %cst_13 = arith.constant 9.99999974E-6 : f32
    %21 = vector.broadcast %cst_13 : f32 to vector<16x1xf32>
    %22 = arith.addf %19, %21 : vector<16x1xf32>
    %23 = math.rsqrt %22 : vector<16x1xf32>
    %24 = arith.mulf %20, %23 : vector<16x1xf32>
    %c0_14 = arith.constant 0 : index
    %c0_15 = arith.constant 0 : index
    %25 = vector.load %arg3[%c0_14, %c0_15] : memref<16x1xf32, #tpu.memory_space<vmem>>, vector<16x1xf32>
    %26 = arith.mulf %15, %24 : vector<16x1xf32>
    %27 = arith.subf %25, %26 : vector<16x1xf32>
    %28 = vector.broadcast %24 : vector<16x1xf32> to vector<16x128xf32>
    %29 = arith.mulf %4, %28 : vector<16x128xf32>
    %30 = vector.broadcast %27 : vector<16x1xf32> to vector<16x128xf32>
    %31 = arith.addf %29, %30 : vector<16x128xf32>
    %cst_16 = arith.constant 0.000000e+00 : f32
    %32 = vector.broadcast %cst_16 : f32 to vector<16x128xf32>
    %33 = arith.maximumf %31, %32 : vector<16x128xf32>
    %34 = arith.truncf %33 : vector<16x128xf32> to vector<16x128xbf16>
    %c0_17 = arith.constant 0 : index
    %c0_18 = arith.constant 0 : index
    %c0_19 = arith.constant 0 : index
    %35 = vector.load %arg4[%c0_17, %c0_18, %c0_19] : memref<1x16x128xbf16, #tpu.memory_space<vmem>>, vector<1x16x128xbf16>
    %36 = vector.shape_cast %35 : vector<1x16x128xbf16> to vector<16x128xbf16>
    %37 = vector.shape_cast %34 : vector<16x128xbf16> to vector<1x16x128xbf16>
    tpu.vector_store %arg4[%c0_17, %c0_18, %c0_19], %37 {strides = array<i32>} : memref<1x16x128xbf16, #tpu.memory_space<vmem>>, vector<1x16x128xbf16>,
    return
  }
}

module attributes {stable_mosaic.version = 11 : i64} {
  func.func @_fused_layer_kernel(%arg0: memref<1x256x32xbf16, #tpu.memory_space<vmem>>, %arg1: memref<1x32x256xbf16, #tpu.memory_space<vmem>>, %arg2: memref<32x1xf32, #tpu.memory_space<vmem>>, %arg3: memref<32x1xf32, #tpu.memory_space<vmem>>, %arg4: memref<1x32x32xbf16, #tpu.memory_space<vmem>>) attributes {dimension_semantics = [], scalar_prefetch = 0 : i64, scratch_operands = 0 : i64, tpu.core_type = #tpu.core_type<tc>} {
    %c0 = arith.constant 0 : index
    %c0_0 = arith.constant 0 : index
    %c0_1 = arith.constant 0 : index
    %0 = vector.load %arg1[%c0, %c0_0, %c0_1] : memref<1x32x256xbf16, #tpu.memory_space<vmem>>, vector<1x32x256xbf16>
    %1 = vector.shape_cast %0 : vector<1x32x256xbf16> to vector<32x256xbf16>
    %c0_2 = arith.constant 0 : index
    %c0_3 = arith.constant 0 : index
    %c0_4 = arith.constant 0 : index
    %2 = vector.load %arg0[%c0_2, %c0_3, %c0_4] : memref<1x256x32xbf16, #tpu.memory_space<vmem>>, vector<1x256x32xbf16>
    %3 = vector.shape_cast %2 : vector<1x256x32xbf16> to vector<256x32xbf16>
    %cst = arith.constant dense<0.000000e+00> : vector<32x32xf32>
    %4 = tpu.matmul %1, %3, %cst {dimension_numbers = #tpu.dot_dimension_numbers<[1], [0], [0], [1], [0, 0, 1, 1], [], []>} : vector<32x256xbf16>, vector<256x32xbf16>, vector<32x32xf32> -> vector<32x32xf32>
    %cst_5 = arith.constant dense<0.000000e+00> : vector<32xf32>
    %5 = vector.multi_reduction <add>, %4, %cst_5 [1] : vector<32x32xf32> to vector<32xf32>
    %6 = vector.shape_cast %5 : vector<32xf32> to vector<32x1xf32>
    %cst_6 = arith.constant 0.000000e+00 : f32
    %7 = vector.broadcast %cst_6 : f32 to vector<32x1xf32>
    %8 = arith.addf %7, %6 : vector<32x1xf32>
    %9 = arith.mulf %4, %4 : vector<32x32xf32>
    %cst_7 = arith.constant dense<0.000000e+00> : vector<32xf32>
    %10 = vector.multi_reduction <add>, %9, %cst_7 [1] : vector<32x32xf32> to vector<32xf32>
    %11 = vector.shape_cast %10 : vector<32xf32> to vector<32x1xf32>
    %cst_8 = arith.constant 0.000000e+00 : f32
    %12 = vector.broadcast %cst_8 : f32 to vector<32x1xf32>
    %13 = arith.addf %12, %11 : vector<32x1xf32>
    %cst_9 = arith.constant 3.125000e-02 : f32
    %14 = vector.broadcast %cst_9 : f32 to vector<32x1xf32>
    %15 = arith.mulf %8, %14 : vector<32x1xf32>
    %cst_10 = arith.constant 3.125000e-02 : f32
    %16 = vector.broadcast %cst_10 : f32 to vector<32x1xf32>
    %17 = arith.mulf %13, %16 : vector<32x1xf32>
    %18 = arith.mulf %15, %15 : vector<32x1xf32>
    %19 = arith.subf %17, %18 : vector<32x1xf32>
    %c0_11 = arith.constant 0 : index
    %c0_12 = arith.constant 0 : index
    %20 = vector.load %arg2[%c0_11, %c0_12] : memref<32x1xf32, #tpu.memory_space<vmem>>, vector<32x1xf32>
    %cst_13 = arith.constant 9.99999974E-6 : f32
    %21 = vector.broadcast %cst_13 : f32 to vector<32x1xf32>
    %22 = arith.addf %19, %21 : vector<32x1xf32>
    %23 = math.rsqrt %22 : vector<32x1xf32>
    %24 = arith.mulf %20, %23 : vector<32x1xf32>
    %c0_14 = arith.constant 0 : index
    %c0_15 = arith.constant 0 : index
    %25 = vector.load %arg3[%c0_14, %c0_15] : memref<32x1xf32, #tpu.memory_space<vmem>>, vector<32x1xf32>
    %26 = arith.mulf %15, %24 : vector<32x1xf32>
    %27 = arith.subf %25, %26 : vector<32x1xf32>
    %28 = vector.broadcast %24 : vector<32x1xf32> to vector<32x32xf32>
    %29 = arith.mulf %4, %28 : vector<32x32xf32>
    %30 = vector.broadcast %27 : vector<32x1xf32> to vector<32x32xf32>
    %31 = arith.addf %29, %30 : vector<32x32xf32>
    %cst_16 = arith.constant 0.000000e+00 : f32
    %32 = vector.broadcast %cst_16 : f32 to vector<32x32xf32>
    %33 = arith.maximumf %31, %32 : vector<32x32xf32>
    %34 = arith.truncf %33 : vector<32x32xf32> to vector<32x32xbf16>
    %c0_17 = arith.constant 0 : index
    %c0_18 = arith.constant 0 : index
    %c0_19 = arith.constant 0 : index
    %35 = vector.load %arg4[%c0_17, %c0_18, %c0_19] : memref<1x32x32xbf16, #tpu.memory_space<vmem>>, vector<1x32x32xbf16>
    %36 = vector.shape_cast %35 : vector<1x32x32xbf16> to vector<32x32xbf16>
    %37 = vector.shape_cast %34 : vector<32x32xbf16> to vector<1x32x32xbf16>
    tpu.vector_store %arg4[%c0_17, %c0_18, %c0_19], %37 {strides = array<i32>} : memref<1x32x32xbf16, #tpu.memory_space<vmem>>, vector<1x32x32xbf16>,
    return
  }
}

module attributes {stable_mosaic.version = 11 : i64} {
  func.func @_fused_layer_kernel(%arg0: memref<1x512x8xbf16, #tpu.memory_space<vmem>>, %arg1: memref<1x64x512xbf16, #tpu.memory_space<vmem>>, %arg2: memref<64x1xf32, #tpu.memory_space<vmem>>, %arg3: memref<64x1xf32, #tpu.memory_space<vmem>>, %arg4: memref<1x64x8xbf16, #tpu.memory_space<vmem>>) attributes {dimension_semantics = [], scalar_prefetch = 0 : i64, scratch_operands = 0 : i64, tpu.core_type = #tpu.core_type<tc>} {
    %c0 = arith.constant 0 : index
    %c0_0 = arith.constant 0 : index
    %c0_1 = arith.constant 0 : index
    %0 = vector.load %arg1[%c0, %c0_0, %c0_1] : memref<1x64x512xbf16, #tpu.memory_space<vmem>>, vector<1x64x512xbf16>
    %1 = vector.shape_cast %0 : vector<1x64x512xbf16> to vector<64x512xbf16>
    %c0_2 = arith.constant 0 : index
    %c0_3 = arith.constant 0 : index
    %c0_4 = arith.constant 0 : index
    %2 = vector.load %arg0[%c0_2, %c0_3, %c0_4] : memref<1x512x8xbf16, #tpu.memory_space<vmem>>, vector<1x512x8xbf16>
    %3 = vector.shape_cast %2 : vector<1x512x8xbf16> to vector<512x8xbf16>
    %cst = arith.constant dense<0.000000e+00> : vector<64x8xf32>
    %4 = tpu.matmul %1, %3, %cst {dimension_numbers = #tpu.dot_dimension_numbers<[1], [0], [0], [1], [0, 0, 1, 1], [], []>} : vector<64x512xbf16>, vector<512x8xbf16>, vector<64x8xf32> -> vector<64x8xf32>
    %cst_5 = arith.constant dense<0.000000e+00> : vector<64xf32>
    %5 = vector.multi_reduction <add>, %4, %cst_5 [1] : vector<64x8xf32> to vector<64xf32>
    %6 = vector.shape_cast %5 : vector<64xf32> to vector<64x1xf32>
    %cst_6 = arith.constant 0.000000e+00 : f32
    %7 = vector.broadcast %cst_6 : f32 to vector<64x1xf32>
    %8 = arith.addf %7, %6 : vector<64x1xf32>
    %9 = arith.mulf %4, %4 : vector<64x8xf32>
    %cst_7 = arith.constant dense<0.000000e+00> : vector<64xf32>
    %10 = vector.multi_reduction <add>, %9, %cst_7 [1] : vector<64x8xf32> to vector<64xf32>
    %11 = vector.shape_cast %10 : vector<64xf32> to vector<64x1xf32>
    %cst_8 = arith.constant 0.000000e+00 : f32
    %12 = vector.broadcast %cst_8 : f32 to vector<64x1xf32>
    %13 = arith.addf %12, %11 : vector<64x1xf32>
    %cst_9 = arith.constant 1.250000e-01 : f32
    %14 = vector.broadcast %cst_9 : f32 to vector<64x1xf32>
    %15 = arith.mulf %8, %14 : vector<64x1xf32>
    %cst_10 = arith.constant 1.250000e-01 : f32
    %16 = vector.broadcast %cst_10 : f32 to vector<64x1xf32>
    %17 = arith.mulf %13, %16 : vector<64x1xf32>
    %18 = arith.mulf %15, %15 : vector<64x1xf32>
    %19 = arith.subf %17, %18 : vector<64x1xf32>
    %c0_11 = arith.constant 0 : index
    %c0_12 = arith.constant 0 : index
    %20 = vector.load %arg2[%c0_11, %c0_12] : memref<64x1xf32, #tpu.memory_space<vmem>>, vector<64x1xf32>
    %cst_13 = arith.constant 9.99999974E-6 : f32
    %21 = vector.broadcast %cst_13 : f32 to vector<64x1xf32>
    %22 = arith.addf %19, %21 : vector<64x1xf32>
    %23 = math.rsqrt %22 : vector<64x1xf32>
    %24 = arith.mulf %20, %23 : vector<64x1xf32>
    %c0_14 = arith.constant 0 : index
    %c0_15 = arith.constant 0 : index
    %25 = vector.load %arg3[%c0_14, %c0_15] : memref<64x1xf32, #tpu.memory_space<vmem>>, vector<64x1xf32>
    %26 = arith.mulf %15, %24 : vector<64x1xf32>
    %27 = arith.subf %25, %26 : vector<64x1xf32>
    %28 = vector.broadcast %24 : vector<64x1xf32> to vector<64x8xf32>
    %29 = arith.mulf %4, %28 : vector<64x8xf32>
    %30 = vector.broadcast %27 : vector<64x1xf32> to vector<64x8xf32>
    %31 = arith.addf %29, %30 : vector<64x8xf32>
    %cst_16 = arith.constant 0.000000e+00 : f32
    %32 = vector.broadcast %cst_16 : f32 to vector<64x8xf32>
    %33 = arith.maximumf %31, %32 : vector<64x8xf32>
    %34 = arith.truncf %33 : vector<64x8xf32> to vector<64x8xbf16>
    %c0_17 = arith.constant 0 : index
    %c0_18 = arith.constant 0 : index
    %c0_19 = arith.constant 0 : index
    %35 = vector.load %arg4[%c0_17, %c0_18, %c0_19] : memref<1x64x8xbf16, #tpu.memory_space<vmem>>, vector<1x64x8xbf16>
    %36 = vector.shape_cast %35 : vector<1x64x8xbf16> to vector<64x8xbf16>
    %37 = vector.shape_cast %34 : vector<64x8xbf16> to vector<1x64x8xbf16>
    tpu.vector_store %arg4[%c0_17, %c0_18, %c0_19], %37 {strides = array<i32>} : memref<1x64x8xbf16, #tpu.memory_space<vmem>>, vector<1x64x8xbf16>,
    return
  }
}

module attributes {stable_mosaic.version = 11 : i64} {
  func.func @_fused_layer_kernel(%arg0: memref<4x256x8xbf16, #tpu.memory_space<vmem>>, %arg1: memref<4x32x256xbf16, #tpu.memory_space<vmem>>, %arg2: memref<32x1xf32, #tpu.memory_space<vmem>>, %arg3: memref<32x1xf32, #tpu.memory_space<vmem>>, %arg4: memref<4x32x8xbf16, #tpu.memory_space<vmem>>) attributes {dimension_semantics = [], scalar_prefetch = 0 : i64, scratch_operands = 0 : i64, tpu.core_type = #tpu.core_type<tc>} {
    %c0 = arith.constant 0 : index
    %c0_0 = arith.constant 0 : index
    %c0_1 = arith.constant 0 : index
    %0 = vector.load %arg1[%c0, %c0_0, %c0_1] : memref<4x32x256xbf16, #tpu.memory_space<vmem>>, vector<1x32x256xbf16>
    %1 = vector.shape_cast %0 : vector<1x32x256xbf16> to vector<32x256xbf16>
    %c0_2 = arith.constant 0 : index
    %c0_3 = arith.constant 0 : index
    %c0_4 = arith.constant 0 : index
    %2 = vector.load %arg0[%c0_2, %c0_3, %c0_4] : memref<4x256x8xbf16, #tpu.memory_space<vmem>>, vector<1x256x8xbf16>
    %3 = vector.shape_cast %2 : vector<1x256x8xbf16> to vector<256x8xbf16>
    %cst = arith.constant dense<0.000000e+00> : vector<32x8xf32>
    %4 = tpu.matmul %1, %3, %cst {dimension_numbers = #tpu.dot_dimension_numbers<[1], [0], [0], [1], [0, 0, 1, 1], [], []>} : vector<32x256xbf16>, vector<256x8xbf16>, vector<32x8xf32> -> vector<32x8xf32>
    %c1 = arith.constant 1 : index
    %c0_5 = arith.constant 0 : index
    %c0_6 = arith.constant 0 : index
    %5 = vector.load %arg1[%c1, %c0_5, %c0_6] : memref<4x32x256xbf16, #tpu.memory_space<vmem>>, vector<1x32x256xbf16>
    %6 = vector.shape_cast %5 : vector<1x32x256xbf16> to vector<32x256xbf16>
    %c1_7 = arith.constant 1 : index
    %c0_8 = arith.constant 0 : index
    %c0_9 = arith.constant 0 : index
    %7 = vector.load %arg0[%c1_7, %c0_8, %c0_9] : memref<4x256x8xbf16, #tpu.memory_space<vmem>>, vector<1x256x8xbf16>
    %8 = vector.shape_cast %7 : vector<1x256x8xbf16> to vector<256x8xbf16>
    %cst_10 = arith.constant dense<0.000000e+00> : vector<32x8xf32>
    %9 = tpu.matmul %6, %8, %cst_10 {dimension_numbers = #tpu.dot_dimension_numbers<[1], [0], [0], [1], [0, 0, 1, 1], [], []>} : vector<32x256xbf16>, vector<256x8xbf16>, vector<32x8xf32> -> vector<32x8xf32>
    %c2 = arith.constant 2 : index
    %c0_11 = arith.constant 0 : index
    %c0_12 = arith.constant 0 : index
    %10 = vector.load %arg1[%c2, %c0_11, %c0_12] : memref<4x32x256xbf16, #tpu.memory_space<vmem>>, vector<1x32x256xbf16>
    %11 = vector.shape_cast %10 : vector<1x32x256xbf16> to vector<32x256xbf16>
    %c2_13 = arith.constant 2 : index
    %c0_14 = arith.constant 0 : index
    %c0_15 = arith.constant 0 : index
    %12 = vector.load %arg0[%c2_13, %c0_14, %c0_15] : memref<4x256x8xbf16, #tpu.memory_space<vmem>>, vector<1x256x8xbf16>
    %13 = vector.shape_cast %12 : vector<1x256x8xbf16> to vector<256x8xbf16>
    %cst_16 = arith.constant dense<0.000000e+00> : vector<32x8xf32>
    %14 = tpu.matmul %11, %13, %cst_16 {dimension_numbers = #tpu.dot_dimension_numbers<[1], [0], [0], [1], [0, 0, 1, 1], [], []>} : vector<32x256xbf16>, vector<256x8xbf16>, vector<32x8xf32> -> vector<32x8xf32>
    %c3 = arith.constant 3 : index
    %c0_17 = arith.constant 0 : index
    %c0_18 = arith.constant 0 : index
    %15 = vector.load %arg1[%c3, %c0_17, %c0_18] : memref<4x32x256xbf16, #tpu.memory_space<vmem>>, vector<1x32x256xbf16>
    %16 = vector.shape_cast %15 : vector<1x32x256xbf16> to vector<32x256xbf16>
    %c3_19 = arith.constant 3 : index
    %c0_20 = arith.constant 0 : index
    %c0_21 = arith.constant 0 : index
    %17 = vector.load %arg0[%c3_19, %c0_20, %c0_21] : memref<4x256x8xbf16, #tpu.memory_space<vmem>>, vector<1x256x8xbf16>
    %18 = vector.shape_cast %17 : vector<1x256x8xbf16> to vector<256x8xbf16>
    %cst_22 = arith.constant dense<0.000000e+00> : vector<32x8xf32>
    %19 = tpu.matmul %16, %18, %cst_22 {dimension_numbers = #tpu.dot_dimension_numbers<[1], [0], [0], [1], [0, 0, 1, 1], [], []>} : vector<32x256xbf16>, vector<256x8xbf16>, vector<32x8xf32> -> vector<32x8xf32>
    %cst_23 = arith.constant dense<0.000000e+00> : vector<32xf32>
    %20 = vector.multi_reduction <add>, %4, %cst_23 [1] : vector<32x8xf32> to vector<32xf32>
    %21 = vector.shape_cast %20 : vector<32xf32> to vector<32x1xf32>
    %cst_24 = arith.constant 0.000000e+00 : f32
    %22 = vector.broadcast %cst_24 : f32 to vector<32x1xf32>
    %23 = arith.addf %22, %21 : vector<32x1xf32>
    %cst_25 = arith.constant dense<0.000000e+00> : vector<32xf32>
    %24 = vector.multi_reduction <add>, %9, %cst_25 [1] : vector<32x8xf32> to vector<32xf32>
    %25 = vector.shape_cast %24 : vector<32xf32> to vector<32x1xf32>
    %26 = arith.addf %23, %25 : vector<32x1xf32>
    %cst_26 = arith.constant dense<0.000000e+00> : vector<32xf32>
    %27 = vector.multi_reduction <add>, %14, %cst_26 [1] : vector<32x8xf32> to vector<32xf32>
    %28 = vector.shape_cast %27 : vector<32xf32> to vector<32x1xf32>
    %29 = arith.addf %26, %28 : vector<32x1xf32>
    %cst_27 = arith.constant dense<0.000000e+00> : vector<32xf32>
    %30 = vector.multi_reduction <add>, %19, %cst_27 [1] : vector<32x8xf32> to vector<32xf32>
    %31 = vector.shape_cast %30 : vector<32xf32> to vector<32x1xf32>
    %32 = arith.addf %29, %31 : vector<32x1xf32>
    %33 = arith.mulf %4, %4 : vector<32x8xf32>
    %cst_28 = arith.constant dense<0.000000e+00> : vector<32xf32>
    %34 = vector.multi_reduction <add>, %33, %cst_28 [1] : vector<32x8xf32> to vector<32xf32>
    %35 = vector.shape_cast %34 : vector<32xf32> to vector<32x1xf32>
    %cst_29 = arith.constant 0.000000e+00 : f32
    %36 = vector.broadcast %cst_29 : f32 to vector<32x1xf32>
    %37 = arith.addf %36, %35 : vector<32x1xf32>
    %38 = arith.mulf %9, %9 : vector<32x8xf32>
    %cst_30 = arith.constant dense<0.000000e+00> : vector<32xf32>
    %39 = vector.multi_reduction <add>, %38, %cst_30 [1] : vector<32x8xf32> to vector<32xf32>
    %40 = vector.shape_cast %39 : vector<32xf32> to vector<32x1xf32>
    %41 = arith.addf %37, %40 : vector<32x1xf32>
    %42 = arith.mulf %14, %14 : vector<32x8xf32>
    %cst_31 = arith.constant dense<0.000000e+00> : vector<32xf32>
    %43 = vector.multi_reduction <add>, %42, %cst_31 [1] : vector<32x8xf32> to vector<32xf32>
    %44 = vector.shape_cast %43 : vector<32xf32> to vector<32x1xf32>
    %45 = arith.addf %41, %44 : vector<32x1xf32>
    %46 = arith.mulf %19, %19 : vector<32x8xf32>
    %cst_32 = arith.constant dense<0.000000e+00> : vector<32xf32>
    %47 = vector.multi_reduction <add>, %46, %cst_32 [1] : vector<32x8xf32> to vector<32xf32>
    %48 = vector.shape_cast %47 : vector<32xf32> to vector<32x1xf32>
    %49 = arith.addf %45, %48 : vector<32x1xf32>
    %cst_33 = arith.constant 3.125000e-02 : f32
    %50 = vector.broadcast %cst_33 : f32 to vector<32x1xf32>
    %51 = arith.mulf %32, %50 : vector<32x1xf32>
    %cst_34 = arith.constant 3.125000e-02 : f32
    %52 = vector.broadcast %cst_34 : f32 to vector<32x1xf32>
    %53 = arith.mulf %49, %52 : vector<32x1xf32>
    %54 = arith.mulf %51, %51 : vector<32x1xf32>
    %55 = arith.subf %53, %54 : vector<32x1xf32>
    %c0_35 = arith.constant 0 : index
    %c0_36 = arith.constant 0 : index
    %56 = vector.load %arg2[%c0_35, %c0_36] : memref<32x1xf32, #tpu.memory_space<vmem>>, vector<32x1xf32>
    %cst_37 = arith.constant 9.99999974E-6 : f32
    %57 = vector.broadcast %cst_37 : f32 to vector<32x1xf32>
    %58 = arith.addf %55, %57 : vector<32x1xf32>
    %59 = math.rsqrt %58 : vector<32x1xf32>
    %60 = arith.mulf %56, %59 : vector<32x1xf32>
    %c0_38 = arith.constant 0 : index
    %c0_39 = arith.constant 0 : index
    %61 = vector.load %arg3[%c0_38, %c0_39] : memref<32x1xf32, #tpu.memory_space<vmem>>, vector<32x1xf32>
    %62 = arith.mulf %51, %60 : vector<32x1xf32>
    %63 = arith.subf %61, %62 : vector<32x1xf32>
    %64 = vector.broadcast %60 : vector<32x1xf32> to vector<32x8xf32>
    %65 = arith.mulf %4, %64 : vector<32x8xf32>
    %66 = vector.broadcast %63 : vector<32x1xf32> to vector<32x8xf32>
    %67 = arith.addf %65, %66 : vector<32x8xf32>
    %cst_40 = arith.constant 0.000000e+00 : f32
    %68 = vector.broadcast %cst_40 : f32 to vector<32x8xf32>
    %69 = arith.maximumf %67, %68 : vector<32x8xf32>
    %70 = arith.truncf %69 : vector<32x8xf32> to vector<32x8xbf16>
    %c0_41 = arith.constant 0 : index
    %c0_42 = arith.constant 0 : index
    %c0_43 = arith.constant 0 : index
    %71 = vector.load %arg4[%c0_41, %c0_42, %c0_43] : memref<4x32x8xbf16, #tpu.memory_space<vmem>>, vector<1x32x8xbf16>
    %72 = vector.shape_cast %71 : vector<1x32x8xbf16> to vector<32x8xbf16>
    %73 = vector.shape_cast %70 : vector<32x8xbf16> to vector<1x32x8xbf16>
    tpu.vector_store %arg4[%c0_41, %c0_42, %c0_43], %73 {strides = array<i32>} : memref<4x32x8xbf16, #tpu.memory_space<vmem>>, vector<1x32x8xbf16>,
    %74 = vector.broadcast %60 : vector<32x1xf32> to vector<32x8xf32>
    %75 = arith.mulf %9, %74 : vector<32x8xf32>
    %76 = vector.broadcast %63 : vector<32x1xf32> to vector<32x8xf32>
    %77 = arith.addf %75, %76 : vector<32x8xf32>
    %cst_44 = arith.constant 0.000000e+00 : f32
    %78 = vector.broadcast %cst_44 : f32 to vector<32x8xf32>
    %79 = arith.maximumf %77, %78 : vector<32x8xf32>
    %80 = arith.truncf %79 : vector<32x8xf32> to vector<32x8xbf16>
    %c1_45 = arith.constant 1 : index
    %c0_46 = arith.constant 0 : index
    %c0_47 = arith.constant 0 : index
    %81 = vector.load %arg4[%c1_45, %c0_46, %c0_47] : memref<4x32x8xbf16, #tpu.memory_space<vmem>>, vector<1x32x8xbf16>
    %82 = vector.shape_cast %81 : vector<1x32x8xbf16> to vector<32x8xbf16>
    %83 = vector.shape_cast %80 : vector<32x8xbf16> to vector<1x32x8xbf16>
    tpu.vector_store %arg4[%c1_45, %c0_46, %c0_47], %83 {strides = array<i32>} : memref<4x32x8xbf16, #tpu.memory_space<vmem>>, vector<1x32x8xbf16>,
    %84 = vector.broadcast %60 : vector<32x1xf32> to vector<32x8xf32>
    %85 = arith.mulf %14, %84 : vector<32x8xf32>
    %86 = vector.broadcast %63 : vector<32x1xf32> to vector<32x8xf32>
    %87 = arith.addf %85, %86 : vector<32x8xf32>
    %cst_48 = arith.constant 0.000000e+00 : f32
    %88 = vector.broadcast %cst_48 : f32 to vector<32x8xf32>
    %89 = arith.maximumf %87, %88 : vector<32x8xf32>
    %90 = arith.truncf %89 : vector<32x8xf32> to vector<32x8xbf16>
    %c2_49 = arith.constant 2 : index
    %c0_50 = arith.constant 0 : index
    %c0_51 = arith.constant 0 : index
    %91 = vector.load %arg4[%c2_49, %c0_50, %c0_51] : memref<4x32x8xbf16, #tpu.memory_space<vmem>>, vector<1x32x8xbf16>
    %92 = vector.shape_cast %91 : vector<1x32x8xbf16> to vector<32x8xbf16>
    %93 = vector.shape_cast %90 : vector<32x8xbf16> to vector<1x32x8xbf16>
    tpu.vector_store %arg4[%c2_49, %c0_50, %c0_51], %93 {strides = array<i32>} : memref<4x32x8xbf16, #tpu.memory_space<vmem>>, vector<1x32x8xbf16>,
    %94 = vector.broadcast %60 : vector<32x1xf32> to vector<32x8xf32>
    %95 = arith.mulf %19, %94 : vector<32x8xf32>
    %96 = vector.broadcast %63 : vector<32x1xf32> to vector<32x8xf32>
    %97 = arith.addf %95, %96 : vector<32x8xf32>
    %cst_52 = arith.constant 0.000000e+00 : f32
    %98 = vector.broadcast %cst_52 : f32 to vector<32x8xf32>
    %99 = arith.maximumf %97, %98 : vector<32x8xf32>
    %100 = arith.truncf %99 : vector<32x8xf32> to vector<32x8xbf16>
    %c3_53 = arith.constant 3 : index
    %c0_54 = arith.constant 0 : index
    %c0_55 = arith.constant 0 : index
    %101 = vector.load %arg4[%c3_53, %c0_54, %c0_55] : memref<4x32x8xbf16, #tpu.memory_space<vmem>>, vector<1x32x8xbf16>
    %102 = vector.shape_cast %101 : vector<1x32x8xbf16> to vector<32x8xbf16>
    %103 = vector.shape_cast %100 : vector<32x8xbf16> to vector<1x32x8xbf16>
    tpu.vector_store %arg4[%c3_53, %c0_54, %c0_55], %103 {strides = array<i32>} : memref<4x32x8xbf16, #tpu.memory_space<vmem>>, vector<1x32x8xbf16>,
    return
  }
}

module attributes {stable_mosaic.version = 11 : i64} {
  func.func @_fused_layer_kernel(%arg0: memref<4x128x32xbf16, #tpu.memory_space<vmem>>, %arg1: memref<4x16x128xbf16, #tpu.memory_space<vmem>>, %arg2: memref<16x1xf32, #tpu.memory_space<vmem>>, %arg3: memref<16x1xf32, #tpu.memory_space<vmem>>, %arg4: memref<4x16x32xbf16, #tpu.memory_space<vmem>>) attributes {dimension_semantics = [], scalar_prefetch = 0 : i64, scratch_operands = 0 : i64, tpu.core_type = #tpu.core_type<tc>} {
    %c0 = arith.constant 0 : index
    %c0_0 = arith.constant 0 : index
    %c0_1 = arith.constant 0 : index
    %0 = vector.load %arg1[%c0, %c0_0, %c0_1] : memref<4x16x128xbf16, #tpu.memory_space<vmem>>, vector<1x16x128xbf16>
    %1 = vector.shape_cast %0 : vector<1x16x128xbf16> to vector<16x128xbf16>
    %c0_2 = arith.constant 0 : index
    %c0_3 = arith.constant 0 : index
    %c0_4 = arith.constant 0 : index
    %2 = vector.load %arg0[%c0_2, %c0_3, %c0_4] : memref<4x128x32xbf16, #tpu.memory_space<vmem>>, vector<1x128x32xbf16>
    %3 = vector.shape_cast %2 : vector<1x128x32xbf16> to vector<128x32xbf16>
    %cst = arith.constant dense<0.000000e+00> : vector<16x32xf32>
    %4 = tpu.matmul %1, %3, %cst {dimension_numbers = #tpu.dot_dimension_numbers<[1], [0], [0], [1], [0, 0, 1, 1], [], []>} : vector<16x128xbf16>, vector<128x32xbf16>, vector<16x32xf32> -> vector<16x32xf32>
    %c1 = arith.constant 1 : index
    %c0_5 = arith.constant 0 : index
    %c0_6 = arith.constant 0 : index
    %5 = vector.load %arg1[%c1, %c0_5, %c0_6] : memref<4x16x128xbf16, #tpu.memory_space<vmem>>, vector<1x16x128xbf16>
    %6 = vector.shape_cast %5 : vector<1x16x128xbf16> to vector<16x128xbf16>
    %c1_7 = arith.constant 1 : index
    %c0_8 = arith.constant 0 : index
    %c0_9 = arith.constant 0 : index
    %7 = vector.load %arg0[%c1_7, %c0_8, %c0_9] : memref<4x128x32xbf16, #tpu.memory_space<vmem>>, vector<1x128x32xbf16>
    %8 = vector.shape_cast %7 : vector<1x128x32xbf16> to vector<128x32xbf16>
    %cst_10 = arith.constant dense<0.000000e+00> : vector<16x32xf32>
    %9 = tpu.matmul %6, %8, %cst_10 {dimension_numbers = #tpu.dot_dimension_numbers<[1], [0], [0], [1], [0, 0, 1, 1], [], []>} : vector<16x128xbf16>, vector<128x32xbf16>, vector<16x32xf32> -> vector<16x32xf32>
    %c2 = arith.constant 2 : index
    %c0_11 = arith.constant 0 : index
    %c0_12 = arith.constant 0 : index
    %10 = vector.load %arg1[%c2, %c0_11, %c0_12] : memref<4x16x128xbf16, #tpu.memory_space<vmem>>, vector<1x16x128xbf16>
    %11 = vector.shape_cast %10 : vector<1x16x128xbf16> to vector<16x128xbf16>
    %c2_13 = arith.constant 2 : index
    %c0_14 = arith.constant 0 : index
    %c0_15 = arith.constant 0 : index
    %12 = vector.load %arg0[%c2_13, %c0_14, %c0_15] : memref<4x128x32xbf16, #tpu.memory_space<vmem>>, vector<1x128x32xbf16>
    %13 = vector.shape_cast %12 : vector<1x128x32xbf16> to vector<128x32xbf16>
    %cst_16 = arith.constant dense<0.000000e+00> : vector<16x32xf32>
    %14 = tpu.matmul %11, %13, %cst_16 {dimension_numbers = #tpu.dot_dimension_numbers<[1], [0], [0], [1], [0, 0, 1, 1], [], []>} : vector<16x128xbf16>, vector<128x32xbf16>, vector<16x32xf32> -> vector<16x32xf32>
    %c3 = arith.constant 3 : index
    %c0_17 = arith.constant 0 : index
    %c0_18 = arith.constant 0 : index
    %15 = vector.load %arg1[%c3, %c0_17, %c0_18] : memref<4x16x128xbf16, #tpu.memory_space<vmem>>, vector<1x16x128xbf16>
    %16 = vector.shape_cast %15 : vector<1x16x128xbf16> to vector<16x128xbf16>
    %c3_19 = arith.constant 3 : index
    %c0_20 = arith.constant 0 : index
    %c0_21 = arith.constant 0 : index
    %17 = vector.load %arg0[%c3_19, %c0_20, %c0_21] : memref<4x128x32xbf16, #tpu.memory_space<vmem>>, vector<1x128x32xbf16>
    %18 = vector.shape_cast %17 : vector<1x128x32xbf16> to vector<128x32xbf16>
    %cst_22 = arith.constant dense<0.000000e+00> : vector<16x32xf32>
    %19 = tpu.matmul %16, %18, %cst_22 {dimension_numbers = #tpu.dot_dimension_numbers<[1], [0], [0], [1], [0, 0, 1, 1], [], []>} : vector<16x128xbf16>, vector<128x32xbf16>, vector<16x32xf32> -> vector<16x32xf32>
    %cst_23 = arith.constant dense<0.000000e+00> : vector<16xf32>
    %20 = vector.multi_reduction <add>, %4, %cst_23 [1] : vector<16x32xf32> to vector<16xf32>
    %21 = vector.shape_cast %20 : vector<16xf32> to vector<16x1xf32>
    %cst_24 = arith.constant 0.000000e+00 : f32
    %22 = vector.broadcast %cst_24 : f32 to vector<16x1xf32>
    %23 = arith.addf %22, %21 : vector<16x1xf32>
    %cst_25 = arith.constant dense<0.000000e+00> : vector<16xf32>
    %24 = vector.multi_reduction <add>, %9, %cst_25 [1] : vector<16x32xf32> to vector<16xf32>
    %25 = vector.shape_cast %24 : vector<16xf32> to vector<16x1xf32>
    %26 = arith.addf %23, %25 : vector<16x1xf32>
    %cst_26 = arith.constant dense<0.000000e+00> : vector<16xf32>
    %27 = vector.multi_reduction <add>, %14, %cst_26 [1] : vector<16x32xf32> to vector<16xf32>
    %28 = vector.shape_cast %27 : vector<16xf32> to vector<16x1xf32>
    %29 = arith.addf %26, %28 : vector<16x1xf32>
    %cst_27 = arith.constant dense<0.000000e+00> : vector<16xf32>
    %30 = vector.multi_reduction <add>, %19, %cst_27 [1] : vector<16x32xf32> to vector<16xf32>
    %31 = vector.shape_cast %30 : vector<16xf32> to vector<16x1xf32>
    %32 = arith.addf %29, %31 : vector<16x1xf32>
    %33 = arith.mulf %4, %4 : vector<16x32xf32>
    %cst_28 = arith.constant dense<0.000000e+00> : vector<16xf32>
    %34 = vector.multi_reduction <add>, %33, %cst_28 [1] : vector<16x32xf32> to vector<16xf32>
    %35 = vector.shape_cast %34 : vector<16xf32> to vector<16x1xf32>
    %cst_29 = arith.constant 0.000000e+00 : f32
    %36 = vector.broadcast %cst_29 : f32 to vector<16x1xf32>
    %37 = arith.addf %36, %35 : vector<16x1xf32>
    %38 = arith.mulf %9, %9 : vector<16x32xf32>
    %cst_30 = arith.constant dense<0.000000e+00> : vector<16xf32>
    %39 = vector.multi_reduction <add>, %38, %cst_30 [1] : vector<16x32xf32> to vector<16xf32>
    %40 = vector.shape_cast %39 : vector<16xf32> to vector<16x1xf32>
    %41 = arith.addf %37, %40 : vector<16x1xf32>
    %42 = arith.mulf %14, %14 : vector<16x32xf32>
    %cst_31 = arith.constant dense<0.000000e+00> : vector<16xf32>
    %43 = vector.multi_reduction <add>, %42, %cst_31 [1] : vector<16x32xf32> to vector<16xf32>
    %44 = vector.shape_cast %43 : vector<16xf32> to vector<16x1xf32>
    %45 = arith.addf %41, %44 : vector<16x1xf32>
    %46 = arith.mulf %19, %19 : vector<16x32xf32>
    %cst_32 = arith.constant dense<0.000000e+00> : vector<16xf32>
    %47 = vector.multi_reduction <add>, %46, %cst_32 [1] : vector<16x32xf32> to vector<16xf32>
    %48 = vector.shape_cast %47 : vector<16xf32> to vector<16x1xf32>
    %49 = arith.addf %45, %48 : vector<16x1xf32>
    %cst_33 = arith.constant 7.812500e-03 : f32
    %50 = vector.broadcast %cst_33 : f32 to vector<16x1xf32>
    %51 = arith.mulf %32, %50 : vector<16x1xf32>
    %cst_34 = arith.constant 7.812500e-03 : f32
    %52 = vector.broadcast %cst_34 : f32 to vector<16x1xf32>
    %53 = arith.mulf %49, %52 : vector<16x1xf32>
    %54 = arith.mulf %51, %51 : vector<16x1xf32>
    %55 = arith.subf %53, %54 : vector<16x1xf32>
    %c0_35 = arith.constant 0 : index
    %c0_36 = arith.constant 0 : index
    %56 = vector.load %arg2[%c0_35, %c0_36] : memref<16x1xf32, #tpu.memory_space<vmem>>, vector<16x1xf32>
    %cst_37 = arith.constant 9.99999974E-6 : f32
    %57 = vector.broadcast %cst_37 : f32 to vector<16x1xf32>
    %58 = arith.addf %55, %57 : vector<16x1xf32>
    %59 = math.rsqrt %58 : vector<16x1xf32>
    %60 = arith.mulf %56, %59 : vector<16x1xf32>
    %c0_38 = arith.constant 0 : index
    %c0_39 = arith.constant 0 : index
    %61 = vector.load %arg3[%c0_38, %c0_39] : memref<16x1xf32, #tpu.memory_space<vmem>>, vector<16x1xf32>
    %62 = arith.mulf %51, %60 : vector<16x1xf32>
    %63 = arith.subf %61, %62 : vector<16x1xf32>
    %64 = vector.broadcast %60 : vector<16x1xf32> to vector<16x32xf32>
    %65 = arith.mulf %4, %64 : vector<16x32xf32>
    %66 = vector.broadcast %63 : vector<16x1xf32> to vector<16x32xf32>
    %67 = arith.addf %65, %66 : vector<16x32xf32>
    %cst_40 = arith.constant 0.000000e+00 : f32
    %68 = vector.broadcast %cst_40 : f32 to vector<16x32xf32>
    %69 = arith.maximumf %67, %68 : vector<16x32xf32>
    %70 = arith.truncf %69 : vector<16x32xf32> to vector<16x32xbf16>
    %c0_41 = arith.constant 0 : index
    %c0_42 = arith.constant 0 : index
    %c0_43 = arith.constant 0 : index
    %71 = vector.load %arg4[%c0_41, %c0_42, %c0_43] : memref<4x16x32xbf16, #tpu.memory_space<vmem>>, vector<1x16x32xbf16>
    %72 = vector.shape_cast %71 : vector<1x16x32xbf16> to vector<16x32xbf16>
    %73 = vector.shape_cast %70 : vector<16x32xbf16> to vector<1x16x32xbf16>
    tpu.vector_store %arg4[%c0_41, %c0_42, %c0_43], %73 {strides = array<i32>} : memref<4x16x32xbf16, #tpu.memory_space<vmem>>, vector<1x16x32xbf16>,
    %74 = vector.broadcast %60 : vector<16x1xf32> to vector<16x32xf32>
    %75 = arith.mulf %9, %74 : vector<16x32xf32>
    %76 = vector.broadcast %63 : vector<16x1xf32> to vector<16x32xf32>
    %77 = arith.addf %75, %76 : vector<16x32xf32>
    %cst_44 = arith.constant 0.000000e+00 : f32
    %78 = vector.broadcast %cst_44 : f32 to vector<16x32xf32>
    %79 = arith.maximumf %77, %78 : vector<16x32xf32>
    %80 = arith.truncf %79 : vector<16x32xf32> to vector<16x32xbf16>
    %c1_45 = arith.constant 1 : index
    %c0_46 = arith.constant 0 : index
    %c0_47 = arith.constant 0 : index
    %81 = vector.load %arg4[%c1_45, %c0_46, %c0_47] : memref<4x16x32xbf16, #tpu.memory_space<vmem>>, vector<1x16x32xbf16>
    %82 = vector.shape_cast %81 : vector<1x16x32xbf16> to vector<16x32xbf16>
    %83 = vector.shape_cast %80 : vector<16x32xbf16> to vector<1x16x32xbf16>
    tpu.vector_store %arg4[%c1_45, %c0_46, %c0_47], %83 {strides = array<i32>} : memref<4x16x32xbf16, #tpu.memory_space<vmem>>, vector<1x16x32xbf16>,
    %84 = vector.broadcast %60 : vector<16x1xf32> to vector<16x32xf32>
    %85 = arith.mulf %14, %84 : vector<16x32xf32>
    %86 = vector.broadcast %63 : vector<16x1xf32> to vector<16x32xf32>
    %87 = arith.addf %85, %86 : vector<16x32xf32>
    %cst_48 = arith.constant 0.000000e+00 : f32
    %88 = vector.broadcast %cst_48 : f32 to vector<16x32xf32>
    %89 = arith.maximumf %87, %88 : vector<16x32xf32>
    %90 = arith.truncf %89 : vector<16x32xf32> to vector<16x32xbf16>
    %c2_49 = arith.constant 2 : index
    %c0_50 = arith.constant 0 : index
    %c0_51 = arith.constant 0 : index
    %91 = vector.load %arg4[%c2_49, %c0_50, %c0_51] : memref<4x16x32xbf16, #tpu.memory_space<vmem>>, vector<1x16x32xbf16>
    %92 = vector.shape_cast %91 : vector<1x16x32xbf16> to vector<16x32xbf16>
    %93 = vector.shape_cast %90 : vector<16x32xbf16> to vector<1x16x32xbf16>
    tpu.vector_store %arg4[%c2_49, %c0_50, %c0_51], %93 {strides = array<i32>} : memref<4x16x32xbf16, #tpu.memory_space<vmem>>, vector<1x16x32xbf16>,
    %94 = vector.broadcast %60 : vector<16x1xf32> to vector<16x32xf32>
    %95 = arith.mulf %19, %94 : vector<16x32xf32>
    %96 = vector.broadcast %63 : vector<16x1xf32> to vector<16x32xf32>
    %97 = arith.addf %95, %96 : vector<16x32xf32>
    %cst_52 = arith.constant 0.000000e+00 : f32
    %98 = vector.broadcast %cst_52 : f32 to vector<16x32xf32>
    %99 = arith.maximumf %97, %98 : vector<16x32xf32>
    %100 = arith.truncf %99 : vector<16x32xf32> to vector<16x32xbf16>
    %c3_53 = arith.constant 3 : index
    %c0_54 = arith.constant 0 : index
    %c0_55 = arith.constant 0 : index
    %101 = vector.load %arg4[%c3_53, %c0_54, %c0_55] : memref<4x16x32xbf16, #tpu.memory_space<vmem>>, vector<1x16x32xbf16>
    %102 = vector.shape_cast %101 : vector<1x16x32xbf16> to vector<16x32xbf16>
    %103 = vector.shape_cast %100 : vector<16x32xbf16> to vector<1x16x32xbf16>
    tpu.vector_store %arg4[%c3_53, %c0_54, %c0_55], %103 {strides = array<i32>} : memref<4x16x32xbf16, #tpu.memory_space<vmem>>, vector<1x16x32xbf16>,
    return
  }
}

module attributes {stable_mosaic.version = 11 : i64} {
  func.func @_fused_layer_kernel(%arg0: memref<4x64x128xbf16, #tpu.memory_space<vmem>>, %arg1: memref<4x8x64xbf16, #tpu.memory_space<vmem>>, %arg2: memref<8x1xf32, #tpu.memory_space<vmem>>, %arg3: memref<8x1xf32, #tpu.memory_space<vmem>>, %arg4: memref<4x8x128xbf16, #tpu.memory_space<vmem>>) attributes {dimension_semantics = [], scalar_prefetch = 0 : i64, scratch_operands = 0 : i64, tpu.core_type = #tpu.core_type<tc>} {
    %c0 = arith.constant 0 : index
    %c0_0 = arith.constant 0 : index
    %c0_1 = arith.constant 0 : index
    %0 = vector.load %arg1[%c0, %c0_0, %c0_1] : memref<4x8x64xbf16, #tpu.memory_space<vmem>>, vector<1x8x64xbf16>
    %1 = vector.shape_cast %0 : vector<1x8x64xbf16> to vector<8x64xbf16>
    %c0_2 = arith.constant 0 : index
    %c0_3 = arith.constant 0 : index
    %c0_4 = arith.constant 0 : index
    %2 = vector.load %arg0[%c0_2, %c0_3, %c0_4] : memref<4x64x128xbf16, #tpu.memory_space<vmem>>, vector<1x64x128xbf16>
    %3 = vector.shape_cast %2 : vector<1x64x128xbf16> to vector<64x128xbf16>
    %cst = arith.constant dense<0.000000e+00> : vector<8x128xf32>
    %4 = tpu.matmul %1, %3, %cst {dimension_numbers = #tpu.dot_dimension_numbers<[1], [0], [0], [1], [0, 0, 1, 1], [], []>} : vector<8x64xbf16>, vector<64x128xbf16>, vector<8x128xf32> -> vector<8x128xf32>
    %c1 = arith.constant 1 : index
    %c0_5 = arith.constant 0 : index
    %c0_6 = arith.constant 0 : index
    %5 = vector.load %arg1[%c1, %c0_5, %c0_6] : memref<4x8x64xbf16, #tpu.memory_space<vmem>>, vector<1x8x64xbf16>
    %6 = vector.shape_cast %5 : vector<1x8x64xbf16> to vector<8x64xbf16>
    %c1_7 = arith.constant 1 : index
    %c0_8 = arith.constant 0 : index
    %c0_9 = arith.constant 0 : index
    %7 = vector.load %arg0[%c1_7, %c0_8, %c0_9] : memref<4x64x128xbf16, #tpu.memory_space<vmem>>, vector<1x64x128xbf16>
    %8 = vector.shape_cast %7 : vector<1x64x128xbf16> to vector<64x128xbf16>
    %cst_10 = arith.constant dense<0.000000e+00> : vector<8x128xf32>
    %9 = tpu.matmul %6, %8, %cst_10 {dimension_numbers = #tpu.dot_dimension_numbers<[1], [0], [0], [1], [0, 0, 1, 1], [], []>} : vector<8x64xbf16>, vector<64x128xbf16>, vector<8x128xf32> -> vector<8x128xf32>
    %c2 = arith.constant 2 : index
    %c0_11 = arith.constant 0 : index
    %c0_12 = arith.constant 0 : index
    %10 = vector.load %arg1[%c2, %c0_11, %c0_12] : memref<4x8x64xbf16, #tpu.memory_space<vmem>>, vector<1x8x64xbf16>
    %11 = vector.shape_cast %10 : vector<1x8x64xbf16> to vector<8x64xbf16>
    %c2_13 = arith.constant 2 : index
    %c0_14 = arith.constant 0 : index
    %c0_15 = arith.constant 0 : index
    %12 = vector.load %arg0[%c2_13, %c0_14, %c0_15] : memref<4x64x128xbf16, #tpu.memory_space<vmem>>, vector<1x64x128xbf16>
    %13 = vector.shape_cast %12 : vector<1x64x128xbf16> to vector<64x128xbf16>
    %cst_16 = arith.constant dense<0.000000e+00> : vector<8x128xf32>
    %14 = tpu.matmul %11, %13, %cst_16 {dimension_numbers = #tpu.dot_dimension_numbers<[1], [0], [0], [1], [0, 0, 1, 1], [], []>} : vector<8x64xbf16>, vector<64x128xbf16>, vector<8x128xf32> -> vector<8x128xf32>
    %c3 = arith.constant 3 : index
    %c0_17 = arith.constant 0 : index
    %c0_18 = arith.constant 0 : index
    %15 = vector.load %arg1[%c3, %c0_17, %c0_18] : memref<4x8x64xbf16, #tpu.memory_space<vmem>>, vector<1x8x64xbf16>
    %16 = vector.shape_cast %15 : vector<1x8x64xbf16> to vector<8x64xbf16>
    %c3_19 = arith.constant 3 : index
    %c0_20 = arith.constant 0 : index
    %c0_21 = arith.constant 0 : index
    %17 = vector.load %arg0[%c3_19, %c0_20, %c0_21] : memref<4x64x128xbf16, #tpu.memory_space<vmem>>, vector<1x64x128xbf16>
    %18 = vector.shape_cast %17 : vector<1x64x128xbf16> to vector<64x128xbf16>
    %cst_22 = arith.constant dense<0.000000e+00> : vector<8x128xf32>
    %19 = tpu.matmul %16, %18, %cst_22 {dimension_numbers = #tpu.dot_dimension_numbers<[1], [0], [0], [1], [0, 0, 1, 1], [], []>} : vector<8x64xbf16>, vector<64x128xbf16>, vector<8x128xf32> -> vector<8x128xf32>
    %cst_23 = arith.constant dense<0.000000e+00> : vector<8xf32>
    %20 = vector.multi_reduction <add>, %4, %cst_23 [1] : vector<8x128xf32> to vector<8xf32>
    %21 = vector.shape_cast %20 : vector<8xf32> to vector<8x1xf32>
    %cst_24 = arith.constant 0.000000e+00 : f32
    %22 = vector.broadcast %cst_24 : f32 to vector<8x1xf32>
    %23 = arith.addf %22, %21 : vector<8x1xf32>
    %cst_25 = arith.constant dense<0.000000e+00> : vector<8xf32>
    %24 = vector.multi_reduction <add>, %9, %cst_25 [1] : vector<8x128xf32> to vector<8xf32>
    %25 = vector.shape_cast %24 : vector<8xf32> to vector<8x1xf32>
    %26 = arith.addf %23, %25 : vector<8x1xf32>
    %cst_26 = arith.constant dense<0.000000e+00> : vector<8xf32>
    %27 = vector.multi_reduction <add>, %14, %cst_26 [1] : vector<8x128xf32> to vector<8xf32>
    %28 = vector.shape_cast %27 : vector<8xf32> to vector<8x1xf32>
    %29 = arith.addf %26, %28 : vector<8x1xf32>
    %cst_27 = arith.constant dense<0.000000e+00> : vector<8xf32>
    %30 = vector.multi_reduction <add>, %19, %cst_27 [1] : vector<8x128xf32> to vector<8xf32>
    %31 = vector.shape_cast %30 : vector<8xf32> to vector<8x1xf32>
    %32 = arith.addf %29, %31 : vector<8x1xf32>
    %33 = arith.mulf %4, %4 : vector<8x128xf32>
    %cst_28 = arith.constant dense<0.000000e+00> : vector<8xf32>
    %34 = vector.multi_reduction <add>, %33, %cst_28 [1] : vector<8x128xf32> to vector<8xf32>
    %35 = vector.shape_cast %34 : vector<8xf32> to vector<8x1xf32>
    %cst_29 = arith.constant 0.000000e+00 : f32
    %36 = vector.broadcast %cst_29 : f32 to vector<8x1xf32>
    %37 = arith.addf %36, %35 : vector<8x1xf32>
    %38 = arith.mulf %9, %9 : vector<8x128xf32>
    %cst_30 = arith.constant dense<0.000000e+00> : vector<8xf32>
    %39 = vector.multi_reduction <add>, %38, %cst_30 [1] : vector<8x128xf32> to vector<8xf32>
    %40 = vector.shape_cast %39 : vector<8xf32> to vector<8x1xf32>
    %41 = arith.addf %37, %40 : vector<8x1xf32>
    %42 = arith.mulf %14, %14 : vector<8x128xf32>
    %cst_31 = arith.constant dense<0.000000e+00> : vector<8xf32>
    %43 = vector.multi_reduction <add>, %42, %cst_31 [1] : vector<8x128xf32> to vector<8xf32>
    %44 = vector.shape_cast %43 : vector<8xf32> to vector<8x1xf32>
    %45 = arith.addf %41, %44 : vector<8x1xf32>
    %46 = arith.mulf %19, %19 : vector<8x128xf32>
    %cst_32 = arith.constant dense<0.000000e+00> : vector<8xf32>
    %47 = vector.multi_reduction <add>, %46, %cst_32 [1] : vector<8x128xf32> to vector<8xf32>
    %48 = vector.shape_cast %47 : vector<8xf32> to vector<8x1xf32>
    %49 = arith.addf %45, %48 : vector<8x1xf32>
    %cst_33 = arith.constant 0.001953125 : f32
    %50 = vector.broadcast %cst_33 : f32 to vector<8x1xf32>
    %51 = arith.mulf %32, %50 : vector<8x1xf32>
    %cst_34 = arith.constant 0.001953125 : f32
    %52 = vector.broadcast %cst_34 : f32 to vector<8x1xf32>
    %53 = arith.mulf %49, %52 : vector<8x1xf32>
    %54 = arith.mulf %51, %51 : vector<8x1xf32>
    %55 = arith.subf %53, %54 : vector<8x1xf32>
    %c0_35 = arith.constant 0 : index
    %c0_36 = arith.constant 0 : index
    %56 = vector.load %arg2[%c0_35, %c0_36] : memref<8x1xf32, #tpu.memory_space<vmem>>, vector<8x1xf32>
    %cst_37 = arith.constant 9.99999974E-6 : f32
    %57 = vector.broadcast %cst_37 : f32 to vector<8x1xf32>
    %58 = arith.addf %55, %57 : vector<8x1xf32>
    %59 = math.rsqrt %58 : vector<8x1xf32>
    %60 = arith.mulf %56, %59 : vector<8x1xf32>
    %c0_38 = arith.constant 0 : index
    %c0_39 = arith.constant 0 : index
    %61 = vector.load %arg3[%c0_38, %c0_39] : memref<8x1xf32, #tpu.memory_space<vmem>>, vector<8x1xf32>
    %62 = arith.mulf %51, %60 : vector<8x1xf32>
    %63 = arith.subf %61, %62 : vector<8x1xf32>
    %64 = vector.broadcast %60 : vector<8x1xf32> to vector<8x128xf32>
    %65 = arith.mulf %4, %64 : vector<8x128xf32>
    %66 = vector.broadcast %63 : vector<8x1xf32> to vector<8x128xf32>
    %67 = arith.addf %65, %66 : vector<8x128xf32>
    %cst_40 = arith.constant 0.000000e+00 : f32
    %68 = vector.broadcast %cst_40 : f32 to vector<8x128xf32>
    %69 = arith.maximumf %67, %68 : vector<8x128xf32>
    %70 = arith.truncf %69 : vector<8x128xf32> to vector<8x128xbf16>
    %c0_41 = arith.constant 0 : index
    %c0_42 = arith.constant 0 : index
    %c0_43 = arith.constant 0 : index
    %71 = vector.load %arg4[%c0_41, %c0_42, %c0_43] : memref<4x8x128xbf16, #tpu.memory_space<vmem>>, vector<1x8x128xbf16>
    %72 = vector.shape_cast %71 : vector<1x8x128xbf16> to vector<8x128xbf16>
    %73 = vector.shape_cast %70 : vector<8x128xbf16> to vector<1x8x128xbf16>
    tpu.vector_store %arg4[%c0_41, %c0_42, %c0_43], %73 {strides = array<i32>} : memref<4x8x128xbf16, #tpu.memory_space<vmem>>, vector<1x8x128xbf16>,
    %74 = vector.broadcast %60 : vector<8x1xf32> to vector<8x128xf32>
    %75 = arith.mulf %9, %74 : vector<8x128xf32>
    %76 = vector.broadcast %63 : vector<8x1xf32> to vector<8x128xf32>
    %77 = arith.addf %75, %76 : vector<8x128xf32>
    %cst_44 = arith.constant 0.000000e+00 : f32
    %78 = vector.broadcast %cst_44 : f32 to vector<8x128xf32>
    %79 = arith.maximumf %77, %78 : vector<8x128xf32>
    %80 = arith.truncf %79 : vector<8x128xf32> to vector<8x128xbf16>
    %c1_45 = arith.constant 1 : index
    %c0_46 = arith.constant 0 : index
    %c0_47 = arith.constant 0 : index
    %81 = vector.load %arg4[%c1_45, %c0_46, %c0_47] : memref<4x8x128xbf16, #tpu.memory_space<vmem>>, vector<1x8x128xbf16>
    %82 = vector.shape_cast %81 : vector<1x8x128xbf16> to vector<8x128xbf16>
    %83 = vector.shape_cast %80 : vector<8x128xbf16> to vector<1x8x128xbf16>
    tpu.vector_store %arg4[%c1_45, %c0_46, %c0_47], %83 {strides = array<i32>} : memref<4x8x128xbf16, #tpu.memory_space<vmem>>, vector<1x8x128xbf16>,
    %84 = vector.broadcast %60 : vector<8x1xf32> to vector<8x128xf32>
    %85 = arith.mulf %14, %84 : vector<8x128xf32>
    %86 = vector.broadcast %63 : vector<8x1xf32> to vector<8x128xf32>
    %87 = arith.addf %85, %86 : vector<8x128xf32>
    %cst_48 = arith.constant 0.000000e+00 : f32
    %88 = vector.broadcast %cst_48 : f32 to vector<8x128xf32>
    %89 = arith.maximumf %87, %88 : vector<8x128xf32>
    %90 = arith.truncf %89 : vector<8x128xf32> to vector<8x128xbf16>
    %c2_49 = arith.constant 2 : index
    %c0_50 = arith.constant 0 : index
    %c0_51 = arith.constant 0 : index
    %91 = vector.load %arg4[%c2_49, %c0_50, %c0_51] : memref<4x8x128xbf16, #tpu.memory_space<vmem>>, vector<1x8x128xbf16>
    %92 = vector.shape_cast %91 : vector<1x8x128xbf16> to vector<8x128xbf16>
    %93 = vector.shape_cast %90 : vector<8x128xbf16> to vector<1x8x128xbf16>
    tpu.vector_store %arg4[%c2_49, %c0_50, %c0_51], %93 {strides = array<i32>} : memref<4x8x128xbf16, #tpu.memory_space<vmem>>, vector<1x8x128xbf16>,
    %94 = vector.broadcast %60 : vector<8x1xf32> to vector<8x128xf32>
    %95 = arith.mulf %19, %94 : vector<8x128xf32>
    %96 = vector.broadcast %63 : vector<8x1xf32> to vector<8x128xf32>
    %97 = arith.addf %95, %96 : vector<8x128xf32>
    %cst_52 = arith.constant 0.000000e+00 : f32
    %98 = vector.broadcast %cst_52 : f32 to vector<8x128xf32>
    %99 = arith.maximumf %97, %98 : vector<8x128xf32>
    %100 = arith.truncf %99 : vector<8x128xf32> to vector<8x128xbf16>
    %c3_53 = arith.constant 3 : index
    %c0_54 = arith.constant 0 : index
    %c0_55 = arith.constant 0 : index
    %101 = vector.load %arg4[%c3_53, %c0_54, %c0_55] : memref<4x8x128xbf16, #tpu.memory_space<vmem>>, vector<1x8x128xbf16>
    %102 = vector.shape_cast %101 : vector<1x8x128xbf16> to vector<8x128xbf16>
    %103 = vector.shape_cast %100 : vector<8x128xbf16> to vector<1x8x128xbf16>
    tpu.vector_store %arg4[%c3_53, %c0_54, %c0_55], %103 {strides = array<i32>} : memref<4x8x128xbf16, #tpu.memory_space<vmem>>, vector<1x8x128xbf16>,
    return
  }
}

module attributes {stable_mosaic.version = 11 : i64} {
  func.func @_fused_layer_kernel(%arg0: memref<4x32x512xbf16, #tpu.memory_space<vmem>>, %arg1: memref<4x3x32xbf16, #tpu.memory_space<vmem>>, %arg2: memref<3x1xf32, #tpu.memory_space<vmem>>, %arg3: memref<3x1xf32, #tpu.memory_space<vmem>>, %arg4: memref<4x3x512xf32, #tpu.memory_space<vmem>>) attributes {dimension_semantics = [], scalar_prefetch = 0 : i64, scratch_operands = 0 : i64, tpu.core_type = #tpu.core_type<tc>} {
    %c0 = arith.constant 0 : index
    %c0_0 = arith.constant 0 : index
    %c0_1 = arith.constant 0 : index
    %0 = vector.load %arg1[%c0, %c0_0, %c0_1] : memref<4x3x32xbf16, #tpu.memory_space<vmem>>, vector<1x3x32xbf16>
    %1 = vector.shape_cast %0 : vector<1x3x32xbf16> to vector<3x32xbf16>
    %c0_2 = arith.constant 0 : index
    %c0_3 = arith.constant 0 : index
    %c0_4 = arith.constant 0 : index
    %2 = vector.load %arg0[%c0_2, %c0_3, %c0_4] : memref<4x32x512xbf16, #tpu.memory_space<vmem>>, vector<1x32x512xbf16>
    %3 = vector.shape_cast %2 : vector<1x32x512xbf16> to vector<32x512xbf16>
    %cst = arith.constant dense<0.000000e+00> : vector<3x512xf32>
    %4 = tpu.matmul %1, %3, %cst {dimension_numbers = #tpu.dot_dimension_numbers<[1], [0], [0], [1], [0, 0, 1, 1], [], []>} : vector<3x32xbf16>, vector<32x512xbf16>, vector<3x512xf32> -> vector<3x512xf32>
    %c1 = arith.constant 1 : index
    %c0_5 = arith.constant 0 : index
    %c0_6 = arith.constant 0 : index
    %5 = vector.load %arg1[%c1, %c0_5, %c0_6] : memref<4x3x32xbf16, #tpu.memory_space<vmem>>, vector<1x3x32xbf16>
    %6 = vector.shape_cast %5 : vector<1x3x32xbf16> to vector<3x32xbf16>
    %c1_7 = arith.constant 1 : index
    %c0_8 = arith.constant 0 : index
    %c0_9 = arith.constant 0 : index
    %7 = vector.load %arg0[%c1_7, %c0_8, %c0_9] : memref<4x32x512xbf16, #tpu.memory_space<vmem>>, vector<1x32x512xbf16>
    %8 = vector.shape_cast %7 : vector<1x32x512xbf16> to vector<32x512xbf16>
    %cst_10 = arith.constant dense<0.000000e+00> : vector<3x512xf32>
    %9 = tpu.matmul %6, %8, %cst_10 {dimension_numbers = #tpu.dot_dimension_numbers<[1], [0], [0], [1], [0, 0, 1, 1], [], []>} : vector<3x32xbf16>, vector<32x512xbf16>, vector<3x512xf32> -> vector<3x512xf32>
    %c2 = arith.constant 2 : index
    %c0_11 = arith.constant 0 : index
    %c0_12 = arith.constant 0 : index
    %10 = vector.load %arg1[%c2, %c0_11, %c0_12] : memref<4x3x32xbf16, #tpu.memory_space<vmem>>, vector<1x3x32xbf16>
    %11 = vector.shape_cast %10 : vector<1x3x32xbf16> to vector<3x32xbf16>
    %c2_13 = arith.constant 2 : index
    %c0_14 = arith.constant 0 : index
    %c0_15 = arith.constant 0 : index
    %12 = vector.load %arg0[%c2_13, %c0_14, %c0_15] : memref<4x32x512xbf16, #tpu.memory_space<vmem>>, vector<1x32x512xbf16>
    %13 = vector.shape_cast %12 : vector<1x32x512xbf16> to vector<32x512xbf16>
    %cst_16 = arith.constant dense<0.000000e+00> : vector<3x512xf32>
    %14 = tpu.matmul %11, %13, %cst_16 {dimension_numbers = #tpu.dot_dimension_numbers<[1], [0], [0], [1], [0, 0, 1, 1], [], []>} : vector<3x32xbf16>, vector<32x512xbf16>, vector<3x512xf32> -> vector<3x512xf32>
    %c3 = arith.constant 3 : index
    %c0_17 = arith.constant 0 : index
    %c0_18 = arith.constant 0 : index
    %15 = vector.load %arg1[%c3, %c0_17, %c0_18] : memref<4x3x32xbf16, #tpu.memory_space<vmem>>, vector<1x3x32xbf16>
    %16 = vector.shape_cast %15 : vector<1x3x32xbf16> to vector<3x32xbf16>
    %c3_19 = arith.constant 3 : index
    %c0_20 = arith.constant 0 : index
    %c0_21 = arith.constant 0 : index
    %17 = vector.load %arg0[%c3_19, %c0_20, %c0_21] : memref<4x32x512xbf16, #tpu.memory_space<vmem>>, vector<1x32x512xbf16>
    %18 = vector.shape_cast %17 : vector<1x32x512xbf16> to vector<32x512xbf16>
    %cst_22 = arith.constant dense<0.000000e+00> : vector<3x512xf32>
    %19 = tpu.matmul %16, %18, %cst_22 {dimension_numbers = #tpu.dot_dimension_numbers<[1], [0], [0], [1], [0, 0, 1, 1], [], []>} : vector<3x32xbf16>, vector<32x512xbf16>, vector<3x512xf32> -> vector<3x512xf32>
    %c0_23 = arith.constant 0 : index
    %c0_24 = arith.constant 0 : index
    %20 = vector.load %arg2[%c0_23, %c0_24] : memref<3x1xf32, #tpu.memory_space<vmem>>, vector<3x1xf32>
    %21 = vector.broadcast %20 : vector<3x1xf32> to vector<3x512xf32>
    %22 = arith.addf %4, %21 : vector<3x512xf32>
    %23 = math.tanh %22 : vector<3x512xf32>
    %c0_25 = arith.constant 0 : index
    %c0_26 = arith.constant 0 : index
    %c0_27 = arith.constant 0 : index
    %24 = vector.load %arg4[%c0_25, %c0_26, %c0_27] : memref<4x3x512xf32, #tpu.memory_space<vmem>>, vector<1x3x512xf32>
    %25 = vector.shape_cast %24 : vector<1x3x512xf32> to vector<3x512xf32>
    %26 = vector.shape_cast %23 : vector<3x512xf32> to vector<1x3x512xf32>
    tpu.vector_store %arg4[%c0_25, %c0_26, %c0_27], %26 {strides = array<i32>} : memref<4x3x512xf32, #tpu.memory_space<vmem>>, vector<1x3x512xf32>,
    %27 = vector.broadcast %20 : vector<3x1xf32> to vector<3x512xf32>
    %28 = arith.addf %9, %27 : vector<3x512xf32>
    %29 = math.tanh %28 : vector<3x512xf32>
    %c1_28 = arith.constant 1 : index
    %c0_29 = arith.constant 0 : index
    %c0_30 = arith.constant 0 : index
    %30 = vector.load %arg4[%c1_28, %c0_29, %c0_30] : memref<4x3x512xf32, #tpu.memory_space<vmem>>, vector<1x3x512xf32>
    %31 = vector.shape_cast %30 : vector<1x3x512xf32> to vector<3x512xf32>
    %32 = vector.shape_cast %29 : vector<3x512xf32> to vector<1x3x512xf32>
    tpu.vector_store %arg4[%c1_28, %c0_29, %c0_30], %32 {strides = array<i32>} : memref<4x3x512xf32, #tpu.memory_space<vmem>>, vector<1x3x512xf32>,
    %33 = vector.broadcast %20 : vector<3x1xf32> to vector<3x512xf32>
    %34 = arith.addf %14, %33 : vector<3x512xf32>
    %35 = math.tanh %34 : vector<3x512xf32>
    %c2_31 = arith.constant 2 : index
    %c0_32 = arith.constant 0 : index
    %c0_33 = arith.constant 0 : index
    %36 = vector.load %arg4[%c2_31, %c0_32, %c0_33] : memref<4x3x512xf32, #tpu.memory_space<vmem>>, vector<1x3x512xf32>
    %37 = vector.shape_cast %36 : vector<1x3x512xf32> to vector<3x512xf32>
    %38 = vector.shape_cast %35 : vector<3x512xf32> to vector<1x3x512xf32>
    tpu.vector_store %arg4[%c2_31, %c0_32, %c0_33], %38 {strides = array<i32>} : memref<4x3x512xf32, #tpu.memory_space<vmem>>, vector<1x3x512xf32>,
    %39 = vector.broadcast %20 : vector<3x1xf32> to vector<3x512xf32>
    %40 = arith.addf %19, %39 : vector<3x512xf32>
    %41 = math.tanh %40 : vector<3x512xf32>
    %c3_34 = arith.constant 3 : index
    %c0_35 = arith.constant 0 : index
    %c0_36 = arith.constant 0 : index
    %42 = vector.load %arg4[%c3_34, %c0_35, %c0_36] : memref<4x3x512xf32, #tpu.memory_space<vmem>>, vector<1x3x512xf32>
    %43 = vector.shape_cast %42 : vector<1x3x512xf32> to vector<3x512xf32>
    %44 = vector.shape_cast %41 : vector<3x512xf32> to vector<1x3x512xf32>
    tpu.vector_store %arg4[%c3_34, %c0_35, %c0_36], %44 {strides = array<i32>} : memref<4x3x512xf32, #tpu.memory_space<vmem>>, vector<1x3x512xf32>,
    return
  }
}

</mosaic_0001>

<llo_original>
// kernel: generator_forward.8
$region0: #{generator_forward.8}
  #allocation0 [shape = 'u32[]', space=smem, size = 0x4, offset = 0x4, fixed_abs, tag = 'smem constant byte address 0x4 - core index']
  #allocation1 [shape = 'u32[144,128]{1,0:T(1,128)}', space=vmem, size = 0x12000, scoped, tag = 'internal scratch']
  %s0 = inlined_call_operand.vmem [shape: bf16[1,48,512], index: 0, kind: input, shape index: {}]
  %s1 = inlined_call_operand.vmem [shape: bf16[1,8,48], index: 1, kind: input, shape index: {}]
  %s2 = inlined_call_operand.vmem [shape: f32[8,1], index: 2, kind: input, shape index: {}]
  %s3 = inlined_call_operand.vmem [shape: f32[8,1], index: 3, kind: input, shape index: {}]
  %s4 = inlined_call_operand.vmem [shape: bf16[1,8,512], index: 4, kind: output, shape index: {}]
  %s5 = sld [smem:[#allocation0]]
  $region26: #{generator_forward.8} parent=0
    _
  %s7 = ssub.s32 1, %s5
  %s8 = scalar_select 0, %s7, %s5
  // Predicated region
  $region2: #{generator_forward.8} parent=0 // pred_check
    _
  $region3: #{generator_forward.8} parent=0 // pred_check_branch
    %10 = sbr.rel (0) target = $region5
  $region4: #{generator_forward.8} parent=0 // pred_region
    _
  $region5: #{generator_forward.8} parent=0 // pred_fallthru
    _
  // Predicated region
  $region6: #{generator_forward.8} parent=0 // pred_check
    _
  $region7: #{generator_forward.8} parent=0 // pred_check_branch
    %12 = sbr.rel (0) target = $region9
  $region8: #{generator_forward.8} parent=0 // pred_region
    _
  $region9: #{generator_forward.8} parent=0 // pred_fallthru
    _
  // Predicated region
  $region10: #{generator_forward.8} parent=0 // pred_check
    _
  $region11: #{generator_forward.8} parent=0 // pred_check_branch
    %14 = sbr.rel (0) target = $region13
  $region12: #{generator_forward.8} parent=0 // pred_region
    _
  $region13: #{generator_forward.8} parent=0 // pred_fallthru
    _
  // Predicated region
  $region14: #{generator_forward.8} parent=0 // pred_check
    _
  $region15: #{generator_forward.8} parent=0 // pred_check_branch
    %16 = sbr.rel (0) target = $region17
  $region16: #{generator_forward.8} parent=0 // pred_region
    _
  $region17: #{generator_forward.8} parent=0 // pred_fallthru
    _
  %v18 = vld [vmem:[%s1] sm:$0xf]
  %v19 = vld [vmem:[%s0] sm:$0xff]
  %v20 = vld [vmem:[%s0 + $0x8] sm:$0xff]
  %v21 = vld [vmem:[%s0 + $0x10] sm:$0xff]
  %v22 = vld [vmem:[%s0 + $0x18] sm:$0xff]
  %v23 = vld [vmem:[%s0 + $0x20] sm:$0xff]
  %v24 = vld [vmem:[%s0 + $0x28] sm:$0xff]
  %v25 = vld [vmem:[%s0 + $0x30] sm:$0xff]
  %v26 = vld [vmem:[%s0 + $0x38] sm:$0xff]
  %v27 = vld [vmem:[%s0 + $0x40] sm:$0xff]
  %v28 = vld [vmem:[%s0 + $0x48] sm:$0xff]
  %v29 = vld [vmem:[%s0 + $0x50] sm:$0xff]
  %v30 = vld [vmem:[%s0 + $0x58] sm:$0xff]
  %v43 = vunpack.c.l.b16 %v19
  %v44 = vunpack.c.h.b16 %v19
  %v45 = vunpack.c.l.b16 %v20
  %v46 = vunpack.c.h.b16 %v20
  %v47 = vunpack.c.l.b16 %v21
  %v48 = vunpack.c.h.b16 %v21
  %v49 = vunpack.c.l.b16 %v22
  %v50 = vunpack.c.h.b16 %v22
  %v51 = vunpack.c.l.b16 %v23
  %v52 = vunpack.c.h.b16 %v23
  %v53 = vunpack.c.l.b16 %v24
  %v54 = vunpack.c.h.b16 %v24
  %v55 = vunpack.c.l.b16 %v25
  %v56 = vunpack.c.h.b16 %v25
  %v57 = vunpack.c.l.b16 %v26
  %v58 = vunpack.c.h.b16 %v26
  %v59 = vunpack.c.l.b16 %v27
  %v60 = vunpack.c.h.b16 %v27
  %v61 = vunpack.c.l.b16 %v28
  %v62 = vunpack.c.h.b16 %v28
  %v63 = vunpack.c.l.b16 %v29
  %v64 = vunpack.c.h.b16 %v29
  %v65 = vunpack.c.l.b16 %v30
  %v66 = vunpack.c.h.b16 %v30
  %v67 = vpack.c.b16 %v47, %v43
  %v68 = vpack.c.b16 %v48, %v44
  %v69 = vpack.c.b16 %v49, %v45
  %v70 = vpack.c.b16 %v50, %v46
  %v71 = vpack.c.b16 %v55, %v51
  %v72 = vpack.c.b16 %v56, %v52
  %v73 = vpack.c.b16 %v57, %v53
  %v74 = vpack.c.b16 %v58, %v54
  %v75 = vpack.c.b16 %v63, %v59
  %v76 = vpack.c.b16 %v64, %v60
  %v77 = vpack.c.b16 %v65, %v61
  %v78 = vpack.c.b16 %v66, %v62
  %vm91 = vcmask 392192
  %v93 = vsel %vm91, %v18, 0
  %95 = vmatprep.subr.bf16.mxu0 0
  %96 = vmatpush1.bf16.msra.mxu0 0
  %97 = vmatprep.subr.bf16.mxu0 0
  %98 = vmatpush1.bf16.msra.mxu0 0
  %99 = vmatprep.subr.bf16.mxu0 0
  %100 = vmatpush1.bf16.msra.mxu0 0
  %101 = vmatprep.subr.bf16.mxu0 0
  %102 = vmatpush1.bf16.msra.mxu0 0
  %103 = vmatprep.subr.bf16.mxu0 0
  %104 = vmatpush1.bf16.msra.mxu0 0
  %105 = vmatprep.subr.bf16.mxu0 %v76
  %106 = vmatpush1.bf16.msra.mxu0 %v75
  %107 = vmatprep.subr.bf16.mxu0 %v72
  %108 = vmatpush1.bf16.msra.mxu0 %v71
  %109 = vmatprep.subr.bf16.mxu0 %v68
  %110 = vmatpush1.bf16.msra.mxu0 %v67
  %111 = vmatprep.subr.bf16.mxu0 0
  %112 = vmatpush2.bf16.msra.mxu0 0
  %113 = vmatprep.subr.bf16.mxu0 0
  %114 = vmatpush2.bf16.msra.mxu0 0
  %115 = vmatprep.subr.bf16.mxu0 0
  %116 = vmatpush2.bf16.msra.mxu0 0
  %117 = vmatprep.subr.bf16.mxu0 0
  %118 = vmatpush2.bf16.msra.mxu0 0
  %119 = vmatprep.subr.bf16.mxu0 0
  %120 = vmatpush2.bf16.msra.mxu0 0
  %121 = vmatprep.subr.bf16.mxu0 0
  %122 = vmatpush2.bf16.msra.mxu0 0
  %123 = vmatprep.subr.bf16.mxu0 0
  %124 = vmatpush2.bf16.msra.mxu0 0
  %125 = vmatprep.subr.bf16.mxu0 0
  %126 = vmatpush2.bf16.msra.mxu0 0
  %127 = vmatprep.mubr.bf16.mxu0 0
  %128 = vmatmul.mubr.bf16.gmra.mxu0 %v93
  %v129 = vpop.f32.mrf.mxu0
  %v130 = vadd.f32 0.0, %v129
  %v131 = vpop.f32.mrf.mxu0
  %v132 = vadd.f32 0.0, %v131
  %v133 = vpop.f32.mrf.mxu0
  %v134 = vpop.f32.mrf.mxu0
  %135 = vdwg.mxu0
  %136 = vmatprep.subr.bf16.mxu0 0
  %137 = vmatpush1.bf16.msra.mxu0 0
  %138 = vmatprep.subr.bf16.mxu0 0
  %139 = vmatpush1.bf16.msra.mxu0 0
  %140 = vmatprep.subr.bf16.mxu0 0
  %141 = vmatpush1.bf16.msra.mxu0 0
  %142 = vmatprep.subr.bf16.mxu0 0
  %143 = vmatpush1.bf16.msra.mxu0 0
  %144 = vmatprep.subr.bf16.mxu0 0
  %145 = vmatpush1.bf16.msra.mxu0 0
  %146 = vmatprep.subr.bf16.mxu0 %v78
  %147 = vmatpush1.bf16.msra.mxu0 %v77
  %148 = vmatprep.subr.bf16.mxu0 %v74
  %149 = vmatpush1.bf16.msra.mxu0 %v73
  %150 = vmatprep.subr.bf16.mxu0 %v70
  %151 = vmatpush1.bf16.msra.mxu0 %v69
  %152 = vmatprep.subr.bf16.mxu0 0
  %153 = vmatpush2.bf16.msra.mxu0 0
  %154 = vmatprep.subr.bf16.mxu0 0
  %155 = vmatpush2.bf16.msra.mxu0 0
  %156 = vmatprep.subr.bf16.mxu0 0
  %157 = vmatpush2.bf16.msra.mxu0 0
  %158 = vmatprep.subr.bf16.mxu0 0
  %159 = vmatpush2.bf16.msra.mxu0 0
  %160 = vmatprep.subr.bf16.mxu0 0
  %161 = vmatpush2.bf16.msra.mxu0 0
  %162 = vmatprep.subr.bf16.mxu0 0
  %163 = vmatpush2.bf16.msra.mxu0 0
  %164 = vmatprep.subr.bf16.mxu0 0
  %165 = vmatpush2.bf16.msra.mxu0 0
  %166 = vmatprep.subr.bf16.mxu0 0
  %167 = vmatpush2.bf16.msra.mxu0 0
  %168 = vmatprep.mubr.bf16.mxu0 0
  %169 = vmatmul.mubr.bf16.gmra.mxu0 %v93
  %v170 = vpop.f32.mrf.mxu0
  %v171 = vadd.f32 0.0, %v170
  %v172 = vpop.f32.mrf.mxu0
  %v173 = vadd.f32 0.0, %v172
  %v174 = vpop.f32.mrf.mxu0
  %v175 = vpop.f32.mrf.mxu0
  %176 = vdwg.mxu0
  %v177 = vadd.f32 %v130, %v132
  %v178 = vadd.f32 %v177, %v171
  %v179 = vadd.f32 %v178, %v173
  %180 = vadd.xlane.f32.xlu0 %v179
  %v181 = vpop.xlane.xlu0 %180
  %v182 = vadd.f32 %v181, 0.0
  %v183 = vmul.f32 %v130, %v130
  %v184 = vmul.f32 %v132, %v132
  %v185 = vmul.f32 %v171, %v171
  %v186 = vmul.f32 %v173, %v173
  %v187 = vadd.f32 %v183, %v184
  %v188 = vadd.f32 %v187, %v185
  %v189 = vadd.f32 %v188, %v186
  %190 = vadd.xlane.f32.xlu0 %v189
  %v191 = vpop.xlane.xlu0 %190
  %v192 = vadd.f32 %v191, 0.0
  %v193 = vmul.f32 %v182, 0.001953125
  %v194 = vmul.f32 %v192, 0.001953125
  %v195 = vmul.f32 %v193, %v193
  %v196 = vsub.f32 %v194, %v195
  %v197 = vld [vmem:[%s2] sm:$0xff]
  %v198 = vadd.f32 %v196, 1e-05
  %v199 = vrsqrt.pop %v198
  %v200 = vmul.f32 %v197, %v199
  %v201 = vld [vmem:[%s3] sm:$0xff]
  %v202 = vmul.f32 %v193, %v200
  %v203 = vsub.f32 %v201, %v202
  %205 = vset.pattern.permute.xlu0 0
  %206 = vperm.xlu0 %205, %v200
  %v207 = vpop.permute.xlu0 %206
  %v209 = vmul.f32 %v130, %v207
  %v210 = vmul.f32 %v132, %v207
  %v211 = vmul.f32 %v171, %v207
  %v212 = vmul.f32 %v173, %v207
  %214 = vset.pattern.permute.xlu0 0
  %215 = vperm.xlu0 %214, %v203
  %v216 = vpop.permute.xlu0 %215
  %v218 = vadd.f32 %v209, %v216
  %v219 = vadd.f32 %v210, %v216
  %v220 = vadd.f32 %v211, %v216
  %v221 = vadd.f32 %v212, %v216
  %v222 = vmax.f32 %v218, 0.0
  %v223 = vmax.f32 %v219, 0.0
  %v224 = vmax.f32 %v220, 0.0
  %v225 = vmax.f32 %v221, 0.0
  %v226 = vpack.c.bf16 %v222, %v222
  %v227 = vpack.c.bf16 %v223, %v223
  %v228 = vpack.c.bf16 %v224, %v224
  %v229 = vpack.c.bf16 %v225, %v225
  %v234 = vunpack.c.l.b16 %v226
  %v235 = vunpack.c.l.b16 %v227
  %v236 = vunpack.c.l.b16 %v228
  %v237 = vunpack.c.l.b16 %v229
  %v238 = vpack.c.b16 %v235, %v234
  %v239 = vpack.c.b16 %v237, %v236
  %242 = vst [vmem:[%s4] sm:$0xff] %v238
  %243 = vst [vmem:[%s4 + $0x8] sm:$0xff] %v239
  // Predicated region
  $region18: #{generator_forward.8} parent=0 // pred_check
    _
  $region19: #{generator_forward.8} parent=0 // pred_check_branch
    %245 = sbr.rel (0) target = $region21
  $region20: #{generator_forward.8} parent=0 // pred_region
    _
  $region21: #{generator_forward.8} parent=0 // pred_fallthru
    _
  // Predicated region
  $region22: #{generator_forward.8} parent=0 // pred_check
    _
  $region23: #{generator_forward.8} parent=0 // pred_check_branch
    %247 = sbr.rel (0) target = $region25
  $region24: #{generator_forward.8} parent=0 // pred_region
    _
  $region25: #{generator_forward.8} parent=0 // pred_fallthru
    _

// kernel: generator_forward.9
$region0: #{generator_forward.9}
  #allocation0 [shape = 'u32[]', space=smem, size = 0x4, offset = 0x4, fixed_abs, tag = 'smem constant byte address 0x4 - core index']
  #allocation1 [shape = 'u32[144,128]{1,0:T(1,128)}', space=vmem, size = 0x12000, scoped, tag = 'internal scratch']
  %s0 = inlined_call_operand.vmem [shape: bf16[1,128,128], index: 0, kind: input, shape index: {}]
  %s1 = inlined_call_operand.vmem [shape: bf16[1,16,128], index: 1, kind: input, shape index: {}]
  %s2 = inlined_call_operand.vmem [shape: f32[16,1], index: 2, kind: input, shape index: {}]
  %s3 = inlined_call_operand.vmem [shape: f32[16,1], index: 3, kind: input, shape index: {}]
  %s4 = inlined_call_operand.vmem [shape: bf16[1,16,128], index: 4, kind: output, shape index: {}]
  %s5 = sld [smem:[#allocation0]]
  $region26: #{generator_forward.9} parent=0
    _
  %s7 = ssub.s32 1, %s5
  %s8 = scalar_select 0, %s7, %s5
  // Predicated region
  $region2: #{generator_forward.9} parent=0 // pred_check
    _
  $region3: #{generator_forward.9} parent=0 // pred_check_branch
    %10 = sbr.rel (0) target = $region5
  $region4: #{generator_forward.9} parent=0 // pred_region
    _
  $region5: #{generator_forward.9} parent=0 // pred_fallthru
    _
  // Predicated region
  $region6: #{generator_forward.9} parent=0 // pred_check
    _
  $region7: #{generator_forward.9} parent=0 // pred_check_branch
    %12 = sbr.rel (0) target = $region9
  $region8: #{generator_forward.9} parent=0 // pred_region
    _
  $region9: #{generator_forward.9} parent=0 // pred_fallthru
    _
  // Predicated region
  $region10: #{generator_forward.9} parent=0 // pred_check
    _
  $region11: #{generator_forward.9} parent=0 // pred_check_branch
    %14 = sbr.rel (0) target = $region13
  $region12: #{generator_forward.9} parent=0 // pred_region
    _
  $region13: #{generator_forward.9} parent=0 // pred_fallthru
    _
  // Predicated region
  $region14: #{generator_forward.9} parent=0 // pred_check
    _
  $region15: #{generator_forward.9} parent=0 // pred_check_branch
    %16 = sbr.rel (0) target = $region17
  $region16: #{generator_forward.9} parent=0 // pred_region
    _
  $region17: #{generator_forward.9} parent=0 // pred_fallthru
    _
  %v18 = vld [vmem:[%s1] sm:$0xf]
  %v19 = vld [vmem:[%s1 + $0x4] sm:$0xf]
  %v20 = vld [vmem:[%s0] sm:$0xf]
  %v21 = vld [vmem:[%s0 + $0x4] sm:$0xf]
  %v22 = vld [vmem:[%s0 + $0x8] sm:$0xf]
  %v23 = vld [vmem:[%s0 + $0xc] sm:$0xf]
  %v24 = vld [vmem:[%s0 + $0x10] sm:$0xf]
  %v25 = vld [vmem:[%s0 + $0x14] sm:$0xf]
  %v26 = vld [vmem:[%s0 + $0x18] sm:$0xf]
  %v27 = vld [vmem:[%s0 + $0x1c] sm:$0xf]
  %v28 = vld [vmem:[%s0 + $0x20] sm:$0xf]
  %v29 = vld [vmem:[%s0 + $0x24] sm:$0xf]
  %v30 = vld [vmem:[%s0 + $0x28] sm:$0xf]
  %v31 = vld [vmem:[%s0 + $0x2c] sm:$0xf]
  %v32 = vld [vmem:[%s0 + $0x30] sm:$0xf]
  %v33 = vld [vmem:[%s0 + $0x34] sm:$0xf]
  %v34 = vld [vmem:[%s0 + $0x38] sm:$0xf]
  %v35 = vld [vmem:[%s0 + $0x3c] sm:$0xf]
  %v38 = vunpack.c.l.b16 %v18
  %v39 = vunpack.c.l.b16 %v19
  %v40 = vpack.c.b16 %v39, %v38
  %v58 = vunpack.c.l.b16 %v20
  %v59 = vunpack.c.l.b16 %v21
  %v60 = vunpack.c.l.b16 %v22
  %v61 = vunpack.c.l.b16 %v23
  %v62 = vunpack.c.l.b16 %v24
  %v63 = vunpack.c.l.b16 %v25
  %v64 = vunpack.c.l.b16 %v26
  %v65 = vunpack.c.l.b16 %v27
  %v66 = vunpack.c.l.b16 %v28
  %v67 = vunpack.c.l.b16 %v29
  %v68 = vunpack.c.l.b16 %v30
  %v69 = vunpack.c.l.b16 %v31
  %v70 = vunpack.c.l.b16 %v32
  %v71 = vunpack.c.l.b16 %v33
  %v72 = vunpack.c.l.b16 %v34
  %v73 = vunpack.c.l.b16 %v35
  %v74 = vpack.c.b16 %v59, %v58
  %v75 = vpack.c.b16 %v61, %v60
  %v76 = vpack.c.b16 %v63, %v62
  %v77 = vpack.c.b16 %v65, %v64
  %v78 = vpack.c.b16 %v67, %v66
  %v79 = vpack.c.b16 %v69, %v68
  %v80 = vpack.c.b16 %v71, %v70
  %v81 = vpack.c.b16 %v73, %v72
  %90 = vmatprep.subr.bf16.mxu0 0
  %91 = vmatpush1.bf16.msra.mxu0 %v81
  %92 = vmatprep.subr.bf16.mxu0 0
  %93 = vmatpush1.bf16.msra.mxu0 %v80
  %94 = vmatprep.subr.bf16.mxu0 0
  %95 = vmatpush1.bf16.msra.mxu0 %v79
  %96 = vmatprep.subr.bf16.mxu0 0
  %97 = vmatpush1.bf16.msra.mxu0 %v78
  %98 = vmatprep.subr.bf16.mxu0 0
  %99 = vmatpush1.bf16.msra.mxu0 %v77
  %100 = vmatprep.subr.bf16.mxu0 0
  %101 = vmatpush1.bf16.msra.mxu0 %v76
  %102 = vmatprep.subr.bf16.mxu0 0
  %103 = vmatpush1.bf16.msra.mxu0 %v75
  %104 = vmatprep.subr.bf16.mxu0 0
  %105 = vmatpush1.bf16.msra.mxu0 %v74
  %106 = vmatprep.subr.bf16.mxu0 0
  %107 = vmatpush2.bf16.msra.mxu0 0
  %108 = vmatprep.subr.bf16.mxu0 0
  %109 = vmatpush2.bf16.msra.mxu0 0
  %110 = vmatprep.subr.bf16.mxu0 0
  %111 = vmatpush2.bf16.msra.mxu0 0
  %112 = vmatprep.subr.bf16.mxu0 0
  %113 = vmatpush2.bf16.msra.mxu0 0
  %114 = vmatprep.subr.bf16.mxu0 0
  %115 = vmatpush2.bf16.msra.mxu0 0
  %116 = vmatprep.subr.bf16.mxu0 0
  %117 = vmatpush2.bf16.msra.mxu0 0
  %118 = vmatprep.subr.bf16.mxu0 0
  %119 = vmatpush2.bf16.msra.mxu0 0
  %120 = vmatprep.subr.bf16.mxu0 0
  %121 = vmatpush2.bf16.msra.mxu0 0
  %122 = vmatprep.mubr.bf16.mxu0 0
  %123 = vmatmul.mubr.bf16.gmra.mxu0 %v40
  %v124 = vpop.f32.mrf.mxu0
  %v125 = vadd.f32 0.0, %v124
  %v126 = vpop.f32.mrf.mxu0
  %v127 = vpop.f32.mrf.mxu0
  %v128 = vadd.f32 0.0, %v127
  %v129 = vpop.f32.mrf.mxu0
  %130 = vdwg.mxu0
  %131 = vadd.xlane.f32.xlu0 %v125
  %v132 = vpop.xlane.xlu0 %131
  %133 = vadd.xlane.f32.xlu0 %v128
  %v134 = vpop.xlane.xlu0 %133
  %v135 = vadd.f32 %v132, 0.0
  %v136 = vadd.f32 %v134, 0.0
  %v137 = vmul.f32 %v125, %v125
  %v138 = vmul.f32 %v128, %v128
  %139 = vadd.xlane.f32.xlu0 %v137
  %v140 = vpop.xlane.xlu0 %139
  %141 = vadd.xlane.f32.xlu0 %v138
  %v142 = vpop.xlane.xlu0 %141
  %v143 = vadd.f32 %v140, 0.0
  %v144 = vadd.f32 %v142, 0.0
  %v145 = vmul.f32 %v135, 0.0078125
  %v146 = vmul.f32 %v136, 0.0078125
  %v147 = vmul.f32 %v143, 0.0078125
  %v148 = vmul.f32 %v144, 0.0078125
  %v149 = vmul.f32 %v145, %v145
  %v150 = vmul.f32 %v146, %v146
  %v151 = vsub.f32 %v147, %v149
  %v152 = vsub.f32 %v148, %v150
  %v153 = vld [vmem:[%s2] sm:$0xff]
  %v154 = vld [vmem:[%s2 + $0x8] sm:$0xff]
  %v155 = vadd.f32 %v151, 1e-05
  %v156 = vadd.f32 %v152, 1e-05
  %v157 = vrsqrt.pop %v155
  %v158 = vrsqrt.pop %v156
  %v159 = vmul.f32 %v153, %v157
  %v160 = vmul.f32 %v154, %v158
  %v161 = vld [vmem:[%s3] sm:$0xff]
  %v162 = vld [vmem:[%s3 + $0x8] sm:$0xff]
  %v163 = vmul.f32 %v145, %v159
  %v164 = vmul.f32 %v146, %v160
  %v165 = vsub.f32 %v161, %v163
  %v166 = vsub.f32 %v162, %v164
  %168 = vset.pattern.permute.xlu0 0
  %169 = vperm.xlu0 %168, %v159
  %v170 = vpop.permute.xlu0 %169
  %173 = vset.pattern.permute.xlu0 0
  %174 = vperm.xlu0 %173, %v160
  %v175 = vpop.permute.xlu0 %174
  %v177 = vmul.f32 %v125, %v170
  %v178 = vmul.f32 %v128, %v175
  %180 = vset.pattern.permute.xlu0 0
  %181 = vperm.xlu0 %180, %v165
  %v182 = vpop.permute.xlu0 %181
  %185 = vset.pattern.permute.xlu0 0
  %186 = vperm.xlu0 %185, %v166
  %v187 = vpop.permute.xlu0 %186
  %v189 = vadd.f32 %v177, %v182
  %v190 = vadd.f32 %v178, %v187
  %v191 = vmax.f32 %v189, 0.0
  %v192 = vmax.f32 %v190, 0.0
  %v193 = vpack.c.bf16 %v192, %v191
  %v195 = vunpack.c.l.b16 %v193
  %v196 = vunpack.c.h.b16 %v193
  %v197 = vpack.c.b16 %v195, %v195
  %v198 = vpack.c.b16 %v196, %v196
  %201 = vst [vmem:[%s4] sm:$0xf] %v197
  %202 = vst [vmem:[%s4 + $0x4] sm:$0xf] %v198
  // Predicated region
  $region18: #{generator_forward.9} parent=0 // pred_check
    _
  $region19: #{generator_forward.9} parent=0 // pred_check_branch
    %204 = sbr.rel (0) target = $region21
  $region20: #{generator_forward.9} parent=0 // pred_region
    _
  $region21: #{generator_forward.9} parent=0 // pred_fallthru
    _
  // Predicated region
  $region22: #{generator_forward.9} parent=0 // pred_check
    _
  $region23: #{generator_forward.9} parent=0 // pred_check_branch
    %206 = sbr.rel (0) target = $region25
  $region24: #{generator_forward.9} parent=0 // pred_region
    _
  $region25: #{generator_forward.9} parent=0 // pred_fallthru
    _

// kernel: generator_forward.10
$region0: #{generator_forward.10}
  #allocation0 [shape = 'u32[]', space=smem, size = 0x4, offset = 0x4, fixed_abs, tag = 'smem constant byte address 0x4 - core index']
  #allocation1 [shape = 'u32[144,128]{1,0:T(1,128)}', space=vmem, size = 0x12000, scoped, tag = 'internal scratch']
  %s0 = inlined_call_operand.vmem [shape: bf16[1,256,32], index: 0, kind: input, shape index: {}]
  %s1 = inlined_call_operand.vmem [shape: bf16[1,32,256], index: 1, kind: input, shape index: {}]
  %s2 = inlined_call_operand.vmem [shape: f32[32,1], index: 2, kind: input, shape index: {}]
  %s3 = inlined_call_operand.vmem [shape: f32[32,1], index: 3, kind: input, shape index: {}]
  %s4 = inlined_call_operand.vmem [shape: bf16[1,32,32], index: 4, kind: output, shape index: {}]
  %s5 = sld [smem:[#allocation0]]
  $region26: #{generator_forward.10} parent=0
    _
  %s7 = ssub.s32 1, %s5
  %s8 = scalar_select 0, %s7, %s5
  // Predicated region
  $region2: #{generator_forward.10} parent=0 // pred_check
    _
  $region3: #{generator_forward.10} parent=0 // pred_check_branch
    %10 = sbr.rel (0) target = $region5
  $region4: #{generator_forward.10} parent=0 // pred_region
    _
  $region5: #{generator_forward.10} parent=0 // pred_fallthru
    _
  // Predicated region
  $region6: #{generator_forward.10} parent=0 // pred_check
    _
  $region7: #{generator_forward.10} parent=0 // pred_check_branch
    %12 = sbr.rel (0) target = $region9
  $region8: #{generator_forward.10} parent=0 // pred_region
    _
  $region9: #{generator_forward.10} parent=0 // pred_fallthru
    _
  // Predicated region
  $region10: #{generator_forward.10} parent=0 // pred_check
    _
  $region11: #{generator_forward.10} parent=0 // pred_check_branch
    %14 = sbr.rel (0) target = $region13
  $region12: #{generator_forward.10} parent=0 // pred_region
    _
  $region13: #{generator_forward.10} parent=0 // pred_fallthru
    _
  // Predicated region
  $region14: #{generator_forward.10} parent=0 // pred_check
    _
  $region15: #{generator_forward.10} parent=0 // pred_check_branch
    %16 = sbr.rel (0) target = $region17
  $region16: #{generator_forward.10} parent=0 // pred_region
    _
  $region17: #{generator_forward.10} parent=0 // pred_fallthru
    _
  %v18 = vld [vmem:[%s1] sm:$0xff]
  %v19 = vld [vmem:[%s1 + $0x8] sm:$0xff]
  %v20 = vld [vmem:[%s1 + $0x10] sm:$0xff]
  %v21 = vld [vmem:[%s1 + $0x18] sm:$0xff]
  %v22 = vld [vmem:[%s0] sm:$0xf]
  %v23 = vld [vmem:[%s0 + $0x4] sm:$0xf]
  %v24 = vld [vmem:[%s0 + $0x8] sm:$0xf]
  %v25 = vld [vmem:[%s0 + $0xc] sm:$0xf]
  %v26 = vld [vmem:[%s0 + $0x10] sm:$0xf]
  %v27 = vld [vmem:[%s0 + $0x14] sm:$0xf]
  %v28 = vld [vmem:[%s0 + $0x18] sm:$0xf]
  %v29 = vld [vmem:[%s0 + $0x1c] sm:$0xf]
  %v30 = vld [vmem:[%s0 + $0x20] sm:$0xf]
  %v31 = vld [vmem:[%s0 + $0x24] sm:$0xf]
  %v32 = vld [vmem:[%s0 + $0x28] sm:$0xf]
  %v33 = vld [vmem:[%s0 + $0x2c] sm:$0xf]
  %v34 = vld [vmem:[%s0 + $0x30] sm:$0xf]
  %v35 = vld [vmem:[%s0 + $0x34] sm:$0xf]
  %v36 = vld [vmem:[%s0 + $0x38] sm:$0xf]
  %v37 = vld [vmem:[%s0 + $0x3c] sm:$0xf]
  %v38 = vld [vmem:[%s0 + $0x40] sm:$0xf]
  %v39 = vld [vmem:[%s0 + $0x44] sm:$0xf]
  %v40 = vld [vmem:[%s0 + $0x48] sm:$0xf]
  %v41 = vld [vmem:[%s0 + $0x4c] sm:$0xf]
  %v42 = vld [vmem:[%s0 + $0x50] sm:$0xf]
  %v43 = vld [vmem:[%s0 + $0x54] sm:$0xf]
  %v44 = vld [vmem:[%s0 + $0x58] sm:$0xf]
  %v45 = vld [vmem:[%s0 + $0x5c] sm:$0xf]
  %v46 = vld [vmem:[%s0 + $0x60] sm:$0xf]
  %v47 = vld [vmem:[%s0 + $0x64] sm:$0xf]
  %v48 = vld [vmem:[%s0 + $0x68] sm:$0xf]
  %v49 = vld [vmem:[%s0 + $0x6c] sm:$0xf]
  %v50 = vld [vmem:[%s0 + $0x70] sm:$0xf]
  %v51 = vld [vmem:[%s0 + $0x74] sm:$0xf]
  %v52 = vld [vmem:[%s0 + $0x78] sm:$0xf]
  %v53 = vld [vmem:[%s0 + $0x7c] sm:$0xf]
  %v58 = vunpack.c.l.b16 %v18
  %v59 = vunpack.c.h.b16 %v18
  %v60 = vunpack.c.l.b16 %v19
  %v61 = vunpack.c.h.b16 %v19
  %v62 = vunpack.c.l.b16 %v20
  %v63 = vunpack.c.h.b16 %v20
  %v64 = vunpack.c.l.b16 %v21
  %v65 = vunpack.c.h.b16 %v21
  %v66 = vpack.c.b16 %v60, %v58
  %v67 = vpack.c.b16 %v61, %v59
  %v68 = vpack.c.b16 %v64, %v62
  %v69 = vpack.c.b16 %v65, %v63
  %v106 = vunpack.c.l.b16 %v22
  %v107 = vunpack.c.l.b16 %v23
  %v108 = vunpack.c.l.b16 %v24
  %v109 = vunpack.c.l.b16 %v25
  %v110 = vunpack.c.l.b16 %v26
  %v111 = vunpack.c.l.b16 %v27
  %v112 = vunpack.c.l.b16 %v28
  %v113 = vunpack.c.l.b16 %v29
  %v114 = vunpack.c.l.b16 %v30
  %v115 = vunpack.c.l.b16 %v31
  %v116 = vunpack.c.l.b16 %v32
  %v117 = vunpack.c.l.b16 %v33
  %v118 = vunpack.c.l.b16 %v34
  %v119 = vunpack.c.l.b16 %v35
  %v120 = vunpack.c.l.b16 %v36
  %v121 = vunpack.c.l.b16 %v37
  %v122 = vunpack.c.l.b16 %v38
  %v123 = vunpack.c.l.b16 %v39
  %v124 = vunpack.c.l.b16 %v40
  %v125 = vunpack.c.l.b16 %v41
  %v126 = vunpack.c.l.b16 %v42
  %v127 = vunpack.c.l.b16 %v43
  %v128 = vunpack.c.l.b16 %v44
  %v129 = vunpack.c.l.b16 %v45
  %v130 = vunpack.c.l.b16 %v46
  %v131 = vunpack.c.l.b16 %v47
  %v132 = vunpack.c.l.b16 %v48
  %v133 = vunpack.c.l.b16 %v49
  %v134 = vunpack.c.l.b16 %v50
  %v135 = vunpack.c.l.b16 %v51
  %v136 = vunpack.c.l.b16 %v52
  %v137 = vunpack.c.l.b16 %v53
  %v138 = vpack.c.b16 %v107, %v106
  %v139 = vpack.c.b16 %v109, %v108
  %v140 = vpack.c.b16 %v111, %v110
  %v141 = vpack.c.b16 %v113, %v112
  %v142 = vpack.c.b16 %v115, %v114
  %v143 = vpack.c.b16 %v117, %v116
  %v144 = vpack.c.b16 %v119, %v118
  %v145 = vpack.c.b16 %v121, %v120
  %v146 = vpack.c.b16 %v123, %v122
  %v147 = vpack.c.b16 %v125, %v124
  %v148 = vpack.c.b16 %v127, %v126
  %v149 = vpack.c.b16 %v129, %v128
  %v150 = vpack.c.b16 %v131, %v130
  %v151 = vpack.c.b16 %v133, %v132
  %v152 = vpack.c.b16 %v135, %v134
  %v153 = vpack.c.b16 %v137, %v136
  %170 = vmatprep.subr.bf16.mxu0 0
  %171 = vmatpush1.bf16.msra.mxu0 %v145
  %172 = vmatprep.subr.bf16.mxu0 0
  %173 = vmatpush1.bf16.msra.mxu0 %v144
  %174 = vmatprep.subr.bf16.mxu0 0
  %175 = vmatpush1.bf16.msra.mxu0 %v143
  %176 = vmatprep.subr.bf16.mxu0 0
  %177 = vmatpush1.bf16.msra.mxu0 %v142
  %178 = vmatprep.subr.bf16.mxu0 0
  %179 = vmatpush1.bf16.msra.mxu0 %v141
  %180 = vmatprep.subr.bf16.mxu0 0
  %181 = vmatpush1.bf16.msra.mxu0 %v140
  %182 = vmatprep.subr.bf16.mxu0 0
  %183 = vmatpush1.bf16.msra.mxu0 %v139
  %184 = vmatprep.subr.bf16.mxu0 0
  %185 = vmatpush1.bf16.msra.mxu0 %v138
  %186 = vmatprep.subr.bf16.mxu0 0
  %187 = vmatpush2.bf16.msra.mxu0 %v153
  %188 = vmatprep.subr.bf16.mxu0 0
  %189 = vmatpush2.bf16.msra.mxu0 %v152
  %190 = vmatprep.subr.bf16.mxu0 0
  %191 = vmatpush2.bf16.msra.mxu0 %v151
  %192 = vmatprep.subr.bf16.mxu0 0
  %193 = vmatpush2.bf16.msra.mxu0 %v150
  %194 = vmatprep.subr.bf16.mxu0 0
  %195 = vmatpush2.bf16.msra.mxu0 %v149
  %196 = vmatprep.subr.bf16.mxu0 0
  %197 = vmatpush2.bf16.msra.mxu0 %v148
  %198 = vmatprep.subr.bf16.mxu0 0
  %199 = vmatpush2.bf16.msra.mxu0 %v147
  %200 = vmatprep.subr.bf16.mxu0 0
  %201 = vmatpush2.bf16.msra.mxu0 %v146
  %202 = vmatprep.mubr.bf16.mxu0 %v67
  %203 = vmatmul.mubr.bf16.gmra.mxu0 %v66
  %v204 = vpop.f32.mrf.mxu0
  %v205 = vadd.f32 0.0, %v204
  %v206 = vpop.f32.mrf.mxu0
  %v207 = vpop.f32.mrf.mxu0
  %v208 = vadd.f32 0.0, %v207
  %v209 = vpop.f32.mrf.mxu0
  %210 = vmatprep.mubr.bf16.mxu0 %v69
  %211 = vmatmul.mubr.bf16.gmra.mxu0 %v68
  %v212 = vpop.f32.mrf.mxu0
  %v213 = vadd.f32 0.0, %v212
  %v214 = vpop.f32.mrf.mxu0
  %v215 = vpop.f32.mrf.mxu0
  %v216 = vadd.f32 0.0, %v215
  %v217 = vpop.f32.mrf.mxu0
  %218 = vdwg.mxu0
  %vm219 = vcmask 261120
  %v220 = vsel %vm219, %v205, 0.0
  %221 = vadd.xlane.f32.xlu0 %v220
  %v222 = vpop.xlane.xlu0 %221
  %v223 = vsel %vm219, %v208, 0.0
  %224 = vadd.xlane.f32.xlu0 %v223
  %v225 = vpop.xlane.xlu0 %224
  %v226 = vsel %vm219, %v213, 0.0
  %227 = vadd.xlane.f32.xlu0 %v226
  %v228 = vpop.xlane.xlu0 %227
  %v229 = vsel %vm219, %v216, 0.0
  %230 = vadd.xlane.f32.xlu0 %v229
  %v231 = vpop.xlane.xlu0 %230
  %v232 = vadd.f32 %v222, 0.0
  %v233 = vadd.f32 %v225, 0.0
  %v234 = vadd.f32 %v228, 0.0
  %v235 = vadd.f32 %v231, 0.0
  %v236 = vmul.f32 %v205, %v205
  %v237 = vmul.f32 %v208, %v208
  %v238 = vmul.f32 %v213, %v213
  %v239 = vmul.f32 %v216, %v216
  %v240 = vsel %vm219, %v236, 0.0
  %241 = vadd.xlane.f32.xlu0 %v240
  %v242 = vpop.xlane.xlu0 %241
  %v243 = vsel %vm219, %v237, 0.0
  %244 = vadd.xlane.f32.xlu0 %v243
  %v245 = vpop.xlane.xlu0 %244
  %v246 = vsel %vm219, %v238, 0.0
  %247 = vadd.xlane.f32.xlu0 %v246
  %v248 = vpop.xlane.xlu0 %247
  %v249 = vsel %vm219, %v239, 0.0
  %250 = vadd.xlane.f32.xlu0 %v249
  %v251 = vpop.xlane.xlu0 %250
  %v252 = vadd.f32 %v242, 0.0
  %v253 = vadd.f32 %v245, 0.0
  %v254 = vadd.f32 %v248, 0.0
  %v255 = vadd.f32 %v251, 0.0
  %v256 = vmul.f32 %v232, 0.03125
  %v257 = vmul.f32 %v233, 0.03125
  %v258 = vmul.f32 %v234, 0.03125
  %v259 = vmul.f32 %v235, 0.03125
  %v260 = vmul.f32 %v252, 0.03125
  %v261 = vmul.f32 %v253, 0.03125
  %v262 = vmul.f32 %v254, 0.03125
  %v263 = vmul.f32 %v255, 0.03125
  %v264 = vmul.f32 %v256, %v256
  %v265 = vmul.f32 %v257, %v257
  %v266 = vmul.f32 %v258, %v258
  %v267 = vmul.f32 %v259, %v259
  %v268 = vsub.f32 %v260, %v264
  %v269 = vsub.f32 %v261, %v265
  %v270 = vsub.f32 %v262, %v266
  %v271 = vsub.f32 %v263, %v267
  %v272 = vld [vmem:[%s2] sm:$0xff]
  %v273 = vld [vmem:[%s2 + $0x8] sm:$0xff]
  %v274 = vld [vmem:[%s2 + $0x10] sm:$0xff]
  %v275 = vld [vmem:[%s2 + $0x18] sm:$0xff]
  %v276 = vadd.f32 %v268, 1e-05
  %v277 = vadd.f32 %v269, 1e-05
  %v278 = vadd.f32 %v270, 1e-05
  %v279 = vadd.f32 %v271, 1e-05
  %v280 = vrsqrt.pop %v276
  %v281 = vrsqrt.pop %v277
  %v282 = vrsqrt.pop %v278
  %v283 = vrsqrt.pop %v279
  %v284 = vmul.f32 %v272, %v280
  %v285 = vmul.f32 %v273, %v281
  %v286 = vmul.f32 %v274, %v282
  %v287 = vmul.f32 %v275, %v283
  %v288 = vld [vmem:[%s3] sm:$0xff]
  %v289 = vld [vmem:[%s3 + $0x8] sm:$0xff]
  %v290 = vld [vmem:[%s3 + $0x10] sm:$0xff]
  %v291 = vld [vmem:[%s3 + $0x18] sm:$0xff]
  %v292 = vmul.f32 %v256, %v284
  %v293 = vmul.f32 %v257, %v285
  %v294 = vmul.f32 %v258, %v286
  %v295 = vmul.f32 %v259, %v287
  %v296 = vsub.f32 %v288, %v292
  %v297 = vsub.f32 %v289, %v293
  %v298 = vsub.f32 %v290, %v294
  %v299 = vsub.f32 %v291, %v295
  %301 = vset.pattern.permute.xlu0 0
  %302 = vperm.xlu0 %301, %v284
  %v303 = vpop.permute.xlu0 %302
  %306 = vset.pattern.permute.xlu0 0
  %307 = vperm.xlu0 %306, %v285
  %v308 = vpop.permute.xlu0 %307
  %311 = vset.pattern.permute.xlu0 0
  %312 = vperm.xlu0 %311, %v286
  %v313 = vpop.permute.xlu0 %312
  %316 = vset.pattern.permute.xlu0 0
  %317 = vperm.xlu0 %316, %v287
  %v318 = vpop.permute.xlu0 %317
  %v320 = vmul.f32 %v205, %v303
  %v321 = vmul.f32 %v208, %v308
  %v322 = vmul.f32 %v213, %v313
  %v323 = vmul.f32 %v216, %v318
  %325 = vset.pattern.permute.xlu0 0
  %326 = vperm.xlu0 %325, %v296
  %v327 = vpop.permute.xlu0 %326
  %330 = vset.pattern.permute.xlu0 0
  %331 = vperm.xlu0 %330, %v297
  %v332 = vpop.permute.xlu0 %331
  %335 = vset.pattern.permute.xlu0 0
  %336 = vperm.xlu0 %335, %v298
  %v337 = vpop.permute.xlu0 %336
  %340 = vset.pattern.permute.xlu0 0
  %341 = vperm.xlu0 %340, %v299
  %v342 = vpop.permute.xlu0 %341
  %v344 = vadd.f32 %v320, %v327
  %v345 = vadd.f32 %v321, %v332
  %v346 = vadd.f32 %v322, %v337
  %v347 = vadd.f32 %v323, %v342
  %v348 = vmax.f32 %v344, 0.0
  %v349 = vmax.f32 %v345, 0.0
  %v350 = vmax.f32 %v346, 0.0
  %v351 = vmax.f32 %v347, 0.0
  %v352 = vpack.c.bf16 %v349, %v348
  %v353 = vpack.c.bf16 %v351, %v350
  %v356 = vunpack.c.l.b16 %v352
  %v357 = vunpack.c.h.b16 %v352
  %v358 = vunpack.c.l.b16 %v353
  %v359 = vunpack.c.h.b16 %v353
  %v360 = vpack.c.b16 %v356, %v356
  %v361 = vpack.c.b16 %v357, %v357
  %v362 = vpack.c.b16 %v358, %v358
  %v363 = vpack.c.b16 %v359, %v359
  %vm368 = vcmask 257024
  %369 = vst.msk [vmem:[%s4] sm:$0xf] %vm368, %v360
  %370 = vst.msk [vmem:[%s4 + $0x4] sm:$0xf] %vm368, %v361
  %371 = vst.msk [vmem:[%s4 + $0x8] sm:$0xf] %vm368, %v362
  %372 = vst.msk [vmem:[%s4 + $0xc] sm:$0xf] %vm368, %v363
  // Predicated region
  $region18: #{generator_forward.10} parent=0 // pred_check
    _
  $region19: #{generator_forward.10} parent=0 // pred_check_branch
    %374 = sbr.rel (0) target = $region21
  $region20: #{generator_forward.10} parent=0 // pred_region
    _
  $region21: #{generator_forward.10} parent=0 // pred_fallthru
    _
  // Predicated region
  $region22: #{generator_forward.10} parent=0 // pred_check
    _
  $region23: #{generator_forward.10} parent=0 // pred_check_branch
    %376 = sbr.rel (0) target = $region25
  $region24: #{generator_forward.10} parent=0 // pred_region
    _
  $region25: #{generator_forward.10} parent=0 // pred_fallthru
    _

// kernel: generator_forward.11
$region0: #{generator_forward.11}
  #allocation0 [shape = 'u32[]', space=smem, size = 0x4, offset = 0x4, fixed_abs, tag = 'smem constant byte address 0x4 - core index']
  #allocation1 [shape = 'u32[144,128]{1,0:T(1,128)}', space=vmem, size = 0x12000, scoped, tag = 'internal scratch']
  %s0 = inlined_call_operand.vmem [shape: bf16[1,512,8], index: 0, kind: input, shape index: {}]
  %s1 = inlined_call_operand.vmem [shape: bf16[1,64,512], index: 1, kind: input, shape index: {}]
  %s2 = inlined_call_operand.vmem [shape: f32[64,1], index: 2, kind: input, shape index: {}]
  %s3 = inlined_call_operand.vmem [shape: f32[64,1], index: 3, kind: input, shape index: {}]
  %s4 = inlined_call_operand.vmem [shape: bf16[1,64,8], index: 4, kind: output, shape index: {}]
  %s5 = sld [smem:[#allocation0]]
  $region26: #{generator_forward.11} parent=0
    _
  %s7 = ssub.s32 1, %s5
  %s8 = scalar_select 0, %s7, %s5
  // Predicated region
  $region2: #{generator_forward.11} parent=0 // pred_check
    _
  $region3: #{generator_forward.11} parent=0 // pred_check_branch
    %10 = sbr.rel (0) target = $region5
  $region4: #{generator_forward.11} parent=0 // pred_region
    _
  $region5: #{generator_forward.11} parent=0 // pred_fallthru
    _
  // Predicated region
  $region6: #{generator_forward.11} parent=0 // pred_check
    _
  $region7: #{generator_forward.11} parent=0 // pred_check_branch
    %12 = sbr.rel (0) target = $region9
  $region8: #{generator_forward.11} parent=0 // pred_region
    _
  $region9: #{generator_forward.11} parent=0 // pred_fallthru
    _
  // Predicated region
  $region10: #{generator_forward.11} parent=0 // pred_check
    _
  $region11: #{generator_forward.11} parent=0 // pred_check_branch
    %14 = sbr.rel (0) target = $region13
  $region12: #{generator_forward.11} parent=0 // pred_region
    _
  $region13: #{generator_forward.11} parent=0 // pred_fallthru
    _
  // Predicated region
  $region14: #{generator_forward.11} parent=0 // pred_check
    _
  $region15: #{generator_forward.11} parent=0 // pred_check_branch
    %16 = sbr.rel (0) target = $region17
  $region16: #{generator_forward.11} parent=0 // pred_region
    _
  $region17: #{generator_forward.11} parent=0 // pred_fallthru
    _
  %v18 = vld [vmem:[%s1] sm:$0xff]
  %v19 = vld [vmem:[%s1 + $0x8] sm:$0xff]
  %v20 = vld [vmem:[%s1 + $0x10] sm:$0xff]
  %v21 = vld [vmem:[%s1 + $0x18] sm:$0xff]
  %v22 = vld [vmem:[%s1 + $0x20] sm:$0xff]
  %v23 = vld [vmem:[%s1 + $0x28] sm:$0xff]
  %v24 = vld [vmem:[%s1 + $0x30] sm:$0xff]
  %v25 = vld [vmem:[%s1 + $0x38] sm:$0xff]
  %v26 = vld [vmem:[%s1 + $0x40] sm:$0xff]
  %v27 = vld [vmem:[%s1 + $0x48] sm:$0xff]
  %v28 = vld [vmem:[%s1 + $0x50] sm:$0xff]
  %v29 = vld [vmem:[%s1 + $0x58] sm:$0xff]
  %v30 = vld [vmem:[%s1 + $0x60] sm:$0xff]
  %v31 = vld [vmem:[%s1 + $0x68] sm:$0xff]
  %v32 = vld [vmem:[%s1 + $0x70] sm:$0xff]
  %v33 = vld [vmem:[%s1 + $0x78] sm:$0xff]
  %v34 = vld [vmem:[%s0] sm:$0xf]
  %v35 = vld [vmem:[%s0 + $0x4] sm:$0xf]
  %v36 = vld [vmem:[%s0 + $0x8] sm:$0xf]
  %v37 = vld [vmem:[%s0 + $0xc] sm:$0xf]
  %v38 = vld [vmem:[%s0 + $0x10] sm:$0xf]
  %v39 = vld [vmem:[%s0 + $0x14] sm:$0xf]
  %v40 = vld [vmem:[%s0 + $0x18] sm:$0xf]
  %v41 = vld [vmem:[%s0 + $0x1c] sm:$0xf]
  %v42 = vld [vmem:[%s0 + $0x20] sm:$0xf]
  %v43 = vld [vmem:[%s0 + $0x24] sm:$0xf]
  %v44 = vld [vmem:[%s0 + $0x28] sm:$0xf]
  %v45 = vld [vmem:[%s0 + $0x2c] sm:$0xf]
  %v46 = vld [vmem:[%s0 + $0x30] sm:$0xf]
  %v47 = vld [vmem:[%s0 + $0x34] sm:$0xf]
  %v48 = vld [vmem:[%s0 + $0x38] sm:$0xf]
  %v49 = vld [vmem:[%s0 + $0x3c] sm:$0xf]
  %v50 = vld [vmem:[%s0 + $0x40] sm:$0xf]
  %v51 = vld [vmem:[%s0 + $0x44] sm:$0xf]
  %v52 = vld [vmem:[%s0 + $0x48] sm:$0xf]
  %v53 = vld [vmem:[%s0 + $0x4c] sm:$0xf]
  %v54 = vld [vmem:[%s0 + $0x50] sm:$0xf]
  %v55 = vld [vmem:[%s0 + $0x54] sm:$0xf]
  %v56 = vld [vmem:[%s0 + $0x58] sm:$0xf]
  %v57 = vld [vmem:[%s0 + $0x5c] sm:$0xf]
  %v58 = vld [vmem:[%s0 + $0x60] sm:$0xf]
  %v59 = vld [vmem:[%s0 + $0x64] sm:$0xf]
  %v60 = vld [vmem:[%s0 + $0x68] sm:$0xf]
  %v61 = vld [vmem:[%s0 + $0x6c] sm:$0xf]
  %v62 = vld [vmem:[%s0 + $0x70] sm:$0xf]
  %v63 = vld [vmem:[%s0 + $0x74] sm:$0xf]
  %v64 = vld [vmem:[%s0 + $0x78] sm:$0xf]
  %v65 = vld [vmem:[%s0 + $0x7c] sm:$0xf]
  %v66 = vld [vmem:[%s0 + $0x80] sm:$0xf]
  %v67 = vld [vmem:[%s0 + $0x84] sm:$0xf]
  %v68 = vld [vmem:[%s0 + $0x88] sm:$0xf]
  %v69 = vld [vmem:[%s0 + $0x8c] sm:$0xf]
  %v70 = vld [vmem:[%s0 + $0x90] sm:$0xf]
  %v71 = vld [vmem:[%s0 + $0x94] sm:$0xf]
  %v72 = vld [vmem:[%s0 + $0x98] sm:$0xf]
  %v73 = vld [vmem:[%s0 + $0x9c] sm:$0xf]
  %v74 = vld [vmem:[%s0 + $0xa0] sm:$0xf]
  %v75 = vld [vmem:[%s0 + $0xa4] sm:$0xf]
  %v76 = vld [vmem:[%s0 + $0xa8] sm:$0xf]
  %v77 = vld [vmem:[%s0 + $0xac] sm:$0xf]
  %v78 = vld [vmem:[%s0 + $0xb0] sm:$0xf]
  %v79 = vld [vmem:[%s0 + $0xb4] sm:$0xf]
  %v80 = vld [vmem:[%s0 + $0xb8] sm:$0xf]
  %v81 = vld [vmem:[%s0 + $0xbc] sm:$0xf]
  %v82 = vld [vmem:[%s0 + $0xc0] sm:$0xf]
  %v83 = vld [vmem:[%s0 + $0xc4] sm:$0xf]
  %v84 = vld [vmem:[%s0 + $0xc8] sm:$0xf]
  %v85 = vld [vmem:[%s0 + $0xcc] sm:$0xf]
  %v86 = vld [vmem:[%s0 + $0xd0] sm:$0xf]
  %v87 = vld [vmem:[%s0 + $0xd4] sm:$0xf]
  %v88 = vld [vmem:[%s0 + $0xd8] sm:$0xf]
  %v89 = vld [vmem:[%s0 + $0xdc] sm:$0xf]
  %v90 = vld [vmem:[%s0 + $0xe0] sm:$0xf]
  %v91 = vld [vmem:[%s0 + $0xe4] sm:$0xf]
  %v92 = vld [vmem:[%s0 + $0xe8] sm:$0xf]
  %v93 = vld [vmem:[%s0 + $0xec] sm:$0xf]
  %v94 = vld [vmem:[%s0 + $0xf0] sm:$0xf]
  %v95 = vld [vmem:[%s0 + $0xf4] sm:$0xf]
  %v96 = vld [vmem:[%s0 + $0xf8] sm:$0xf]
  %v97 = vld [vmem:[%s0 + $0xfc] sm:$0xf]
  %v114 = vunpack.c.l.b16 %v18
  %v115 = vunpack.c.h.b16 %v18
  %v116 = vunpack.c.l.b16 %v19
  %v117 = vunpack.c.h.b16 %v19
  %v118 = vunpack.c.l.b16 %v20
  %v119 = vunpack.c.h.b16 %v20
  %v120 = vunpack.c.l.b16 %v21
  %v121 = vunpack.c.h.b16 %v21
  %v122 = vunpack.c.l.b16 %v22
  %v123 = vunpack.c.h.b16 %v22
  %v124 = vunpack.c.l.b16 %v23
  %v125 = vunpack.c.h.b16 %v23
  %v126 = vunpack.c.l.b16 %v24
  %v127 = vunpack.c.h.b16 %v24
  %v128 = vunpack.c.l.b16 %v25
  %v129 = vunpack.c.h.b16 %v25
  %v130 = vunpack.c.l.b16 %v26
  %v131 = vunpack.c.h.b16 %v26
  %v132 = vunpack.c.l.b16 %v27
  %v133 = vunpack.c.h.b16 %v27
  %v134 = vunpack.c.l.b16 %v28
  %v135 = vunpack.c.h.b16 %v28
  %v136 = vunpack.c.l.b16 %v29
  %v137 = vunpack.c.h.b16 %v29
  %v138 = vunpack.c.l.b16 %v30
  %v139 = vunpack.c.h.b16 %v30
  %v140 = vunpack.c.l.b16 %v31
  %v141 = vunpack.c.h.b16 %v31
  %v142 = vunpack.c.l.b16 %v32
  %v143 = vunpack.c.h.b16 %v32
  %v144 = vunpack.c.l.b16 %v33
  %v145 = vunpack.c.h.b16 %v33
  %v146 = vpack.c.b16 %v118, %v114
  %v147 = vpack.c.b16 %v119, %v115
  %v148 = vpack.c.b16 %v120, %v116
  %v149 = vpack.c.b16 %v121, %v117
  %v150 = vpack.c.b16 %v126, %v122
  %v151 = vpack.c.b16 %v127, %v123
  %v152 = vpack.c.b16 %v128, %v124
  %v153 = vpack.c.b16 %v129, %v125
  %v154 = vpack.c.b16 %v134, %v130
  %v155 = vpack.c.b16 %v135, %v131
  %v156 = vpack.c.b16 %v136, %v132
  %v157 = vpack.c.b16 %v137, %v133
  %v158 = vpack.c.b16 %v142, %v138
  %v159 = vpack.c.b16 %v143, %v139
  %v160 = vpack.c.b16 %v144, %v140
  %v161 = vpack.c.b16 %v145, %v141
  %v242 = vunpack.c.l.b16 %v34
  %v243 = vunpack.c.l.b16 %v35
  %v244 = vunpack.c.l.b16 %v36
  %v245 = vunpack.c.l.b16 %v37
  %v246 = vunpack.c.l.b16 %v38
  %v247 = vunpack.c.l.b16 %v39
  %v248 = vunpack.c.l.b16 %v40
  %v249 = vunpack.c.l.b16 %v41
  %v250 = vunpack.c.l.b16 %v42
  %v251 = vunpack.c.l.b16 %v43
  %v252 = vunpack.c.l.b16 %v44
  %v253 = vunpack.c.l.b16 %v45
  %v254 = vunpack.c.l.b16 %v46
  %v255 = vunpack.c.l.b16 %v47
  %v256 = vunpack.c.l.b16 %v48
  %v257 = vunpack.c.l.b16 %v49
  %v258 = vunpack.c.l.b16 %v50
  %v259 = vunpack.c.l.b16 %v51
  %v260 = vunpack.c.l.b16 %v52
  %v261 = vunpack.c.l.b16 %v53
  %v262 = vunpack.c.l.b16 %v54
  %v263 = vunpack.c.l.b16 %v55
  %v264 = vunpack.c.l.b16 %v56
  %v265 = vunpack.c.l.b16 %v57
  %v266 = vunpack.c.l.b16 %v58
  %v267 = vunpack.c.l.b16 %v59
  %v268 = vunpack.c.l.b16 %v60
  %v269 = vunpack.c.l.b16 %v61
  %v270 = vunpack.c.l.b16 %v62
  %v271 = vunpack.c.l.b16 %v63
  %v272 = vunpack.c.l.b16 %v64
  %v273 = vunpack.c.l.b16 %v65
  %v274 = vunpack.c.l.b16 %v66
  %v275 = vunpack.c.l.b16 %v67
  %v276 = vunpack.c.l.b16 %v68
  %v277 = vunpack.c.l.b16 %v69
  %v278 = vunpack.c.l.b16 %v70
  %v279 = vunpack.c.l.b16 %v71
  %v280 = vunpack.c.l.b16 %v72
  %v281 = vunpack.c.l.b16 %v73
  %v282 = vunpack.c.l.b16 %v74
  %v283 = vunpack.c.l.b16 %v75
  %v284 = vunpack.c.l.b16 %v76
  %v285 = vunpack.c.l.b16 %v77
  %v286 = vunpack.c.l.b16 %v78
  %v287 = vunpack.c.l.b16 %v79
  %v288 = vunpack.c.l.b16 %v80
  %v289 = vunpack.c.l.b16 %v81
  %v290 = vunpack.c.l.b16 %v82
  %v291 = vunpack.c.l.b16 %v83
  %v292 = vunpack.c.l.b16 %v84
  %v293 = vunpack.c.l.b16 %v85
  %v294 = vunpack.c.l.b16 %v86
  %v295 = vunpack.c.l.b16 %v87
  %v296 = vunpack.c.l.b16 %v88
  %v297 = vunpack.c.l.b16 %v89
  %v298 = vunpack.c.l.b16 %v90
  %v299 = vunpack.c.l.b16 %v91
  %v300 = vunpack.c.l.b16 %v92
  %v301 = vunpack.c.l.b16 %v93
  %v302 = vunpack.c.l.b16 %v94
  %v303 = vunpack.c.l.b16 %v95
  %v304 = vunpack.c.l.b16 %v96
  %v305 = vunpack.c.l.b16 %v97
  %v306 = vpack.c.b16 %v243, %v242
  %v307 = vpack.c.b16 %v245, %v244
  %v308 = vpack.c.b16 %v247, %v246
  %v309 = vpack.c.b16 %v249, %v248
  %v310 = vpack.c.b16 %v251, %v250
  %v311 = vpack.c.b16 %v253, %v252
  %v312 = vpack.c.b16 %v255, %v254
  %v313 = vpack.c.b16 %v257, %v256
  %v314 = vpack.c.b16 %v259, %v258
  %v315 = vpack.c.b16 %v261, %v260
  %v316 = vpack.c.b16 %v263, %v262
  %v317 = vpack.c.b16 %v265, %v264
  %v318 = vpack.c.b16 %v267, %v266
  %v319 = vpack.c.b16 %v269, %v268
  %v320 = vpack.c.b16 %v271, %v270
  %v321 = vpack.c.b16 %v273, %v272
  %v322 = vpack.c.b16 %v275, %v274
  %v323 = vpack.c.b16 %v277, %v276
  %v324 = vpack.c.b16 %v279, %v278
  %v325 = vpack.c.b16 %v281, %v280
  %v326 = vpack.c.b16 %v283, %v282
  %v327 = vpack.c.b16 %v285, %v284
  %v328 = vpack.c.b16 %v287, %v286
  %v329 = vpack.c.b16 %v289, %v288
  %v330 = vpack.c.b16 %v291, %v290
  %v331 = vpack.c.b16 %v293, %v292
  %v332 = vpack.c.b16 %v295, %v294
  %v333 = vpack.c.b16 %v297, %v296
  %v334 = vpack.c.b16 %v299, %v298
  %v335 = vpack.c.b16 %v301, %v300
  %v336 = vpack.c.b16 %v303, %v302
  %v337 = vpack.c.b16 %v305, %v304
  %370 = vmatprep.subr.bf16.mxu0 0
  %371 = vmatpush1.bf16.msra.mxu0 %v313
  %372 = vmatprep.subr.bf16.mxu0 0
  %373 = vmatpush1.bf16.msra.mxu0 %v312
  %374 = vmatprep.subr.bf16.mxu0 0
  %375 = vmatpush1.bf16.msra.mxu0 %v311
  %376 = vmatprep.subr.bf16.mxu0 0
  %377 = vmatpush1.bf16.msra.mxu0 %v310
  %378 = vmatprep.subr.bf16.mxu0 0
  %379 = vmatpush1.bf16.msra.mxu0 %v309
  %380 = vmatprep.subr.bf16.mxu0 0
  %381 = vmatpush1.bf16.msra.mxu0 %v308
  %382 = vmatprep.subr.bf16.mxu0 0
  %383 = vmatpush1.bf16.msra.mxu0 %v307
  %384 = vmatprep.subr.bf16.mxu0 0
  %385 = vmatpush1.bf16.msra.mxu0 %v306
  %386 = vmatprep.subr.bf16.mxu0 0
  %387 = vmatpush2.bf16.msra.mxu0 %v321
  %388 = vmatprep.subr.bf16.mxu0 0
  %389 = vmatpush2.bf16.msra.mxu0 %v320
  %390 = vmatprep.subr.bf16.mxu0 0
  %391 = vmatpush2.bf16.msra.mxu0 %v319
  %392 = vmatprep.subr.bf16.mxu0 0
  %393 = vmatpush2.bf16.msra.mxu0 %v318
  %394 = vmatprep.subr.bf16.mxu0 0
  %395 = vmatpush2.bf16.msra.mxu0 %v317
  %396 = vmatprep.subr.bf16.mxu0 0
  %397 = vmatpush2.bf16.msra.mxu0 %v316
  %398 = vmatprep.subr.bf16.mxu0 0
  %399 = vmatpush2.bf16.msra.mxu0 %v315
  %400 = vmatprep.subr.bf16.mxu0 0
  %401 = vmatpush2.bf16.msra.mxu0 %v314
  %402 = vmatprep.mubr.bf16.mxu0 %v147
  %403 = vmatmul.mubr.bf16.gmra.mxu0 %v146
  %v404 = vpop.f32.mrf.mxu0
  %v405 = vadd.f32 0.0, %v404
  %v406 = vpop.f32.mrf.mxu0
  %v407 = vpop.f32.mrf.mxu0
  %v408 = vadd.f32 0.0, %v407
  %v409 = vpop.f32.mrf.mxu0
  %410 = vmatprep.mubr.bf16.mxu0 %v151
  %411 = vmatmul.mubr.bf16.gmra.mxu0 %v150
  %v412 = vpop.f32.mrf.mxu0
  %v413 = vadd.f32 0.0, %v412
  %v414 = vpop.f32.mrf.mxu0
  %v415 = vpop.f32.mrf.mxu0
  %v416 = vadd.f32 0.0, %v415
  %v417 = vpop.f32.mrf.mxu0
  %418 = vmatprep.mubr.bf16.mxu0 %v155
  %419 = vmatmul.mubr.bf16.gmra.mxu0 %v154
  %v420 = vpop.f32.mrf.mxu0
  %v421 = vadd.f32 0.0, %v420
  %v422 = vpop.f32.mrf.mxu0
  %v423 = vpop.f32.mrf.mxu0
  %v424 = vadd.f32 0.0, %v423
  %v425 = vpop.f32.mrf.mxu0
  %426 = vmatprep.mubr.bf16.mxu0 %v159
  %427 = vmatmul.mubr.bf16.gmra.mxu0 %v158
  %v428 = vpop.f32.mrf.mxu0
  %v429 = vadd.f32 0.0, %v428
  %v430 = vpop.f32.mrf.mxu0
  %v431 = vpop.f32.mrf.mxu0
  %v432 = vadd.f32 0.0, %v431
  %v433 = vpop.f32.mrf.mxu0
  %434 = vdwg.mxu0
  %435 = vmatprep.subr.bf16.mxu0 0
  %436 = vmatpush1.bf16.msra.mxu0 %v329
  %437 = vmatprep.subr.bf16.mxu0 0
  %438 = vmatpush1.bf16.msra.mxu0 %v328
  %439 = vmatprep.subr.bf16.mxu0 0
  %440 = vmatpush1.bf16.msra.mxu0 %v327
  %441 = vmatprep.subr.bf16.mxu0 0
  %442 = vmatpush1.bf16.msra.mxu0 %v326
  %443 = vmatprep.subr.bf16.mxu0 0
  %444 = vmatpush1.bf16.msra.mxu0 %v325
  %445 = vmatprep.subr.bf16.mxu0 0
  %446 = vmatpush1.bf16.msra.mxu0 %v324
  %447 = vmatprep.subr.bf16.mxu0 0
  %448 = vmatpush1.bf16.msra.mxu0 %v323
  %449 = vmatprep.subr.bf16.mxu0 0
  %450 = vmatpush1.bf16.msra.mxu0 %v322
  %451 = vmatprep.subr.bf16.mxu0 0
  %452 = vmatpush2.bf16.msra.mxu0 %v337
  %453 = vmatprep.subr.bf16.mxu0 0
  %454 = vmatpush2.bf16.msra.mxu0 %v336
  %455 = vmatprep.subr.bf16.mxu0 0
  %456 = vmatpush2.bf16.msra.mxu0 %v335
  %457 = vmatprep.subr.bf16.mxu0 0
  %458 = vmatpush2.bf16.msra.mxu0 %v334
  %459 = vmatprep.subr.bf16.mxu0 0
  %460 = vmatpush2.bf16.msra.mxu0 %v333
  %461 = vmatprep.subr.bf16.mxu0 0
  %462 = vmatpush2.bf16.msra.mxu0 %v332
  %463 = vmatprep.subr.bf16.mxu0 0
  %464 = vmatpush2.bf16.msra.mxu0 %v331
  %465 = vmatprep.subr.bf16.mxu0 0
  %466 = vmatpush2.bf16.msra.mxu0 %v330
  %467 = vmatprep.mubr.bf16.mxu0 %v149
  %468 = vmatmul.mubr.bf16.gmra.mxu0 %v148
  %v469 = vpop.f32.mrf.mxu0
  %v470 = vadd.f32 %v405, %v469
  %v471 = vpop.f32.mrf.mxu0
  %v472 = vpop.f32.mrf.mxu0
  %v473 = vadd.f32 %v408, %v472
  %v474 = vpop.f32.mrf.mxu0
  %475 = vmatprep.mubr.bf16.mxu0 %v153
  %476 = vmatmul.mubr.bf16.gmra.mxu0 %v152
  %v477 = vpop.f32.mrf.mxu0
  %v478 = vadd.f32 %v413, %v477
  %v479 = vpop.f32.mrf.mxu0
  %v480 = vpop.f32.mrf.mxu0
  %v481 = vadd.f32 %v416, %v480
  %v482 = vpop.f32.mrf.mxu0
  %483 = vmatprep.mubr.bf16.mxu0 %v157
  %484 = vmatmul.mubr.bf16.gmra.mxu0 %v156
  %v485 = vpop.f32.mrf.mxu0
  %v486 = vadd.f32 %v421, %v485
  %v487 = vpop.f32.mrf.mxu0
  %v488 = vpop.f32.mrf.mxu0
  %v489 = vadd.f32 %v424, %v488
  %v490 = vpop.f32.mrf.mxu0
  %491 = vmatprep.mubr.bf16.mxu0 %v161
  %492 = vmatmul.mubr.bf16.gmra.mxu0 %v160
  %v493 = vpop.f32.mrf.mxu0
  %v494 = vadd.f32 %v429, %v493
  %v495 = vpop.f32.mrf.mxu0
  %v496 = vpop.f32.mrf.mxu0
  %v497 = vadd.f32 %v432, %v496
  %v498 = vpop.f32.mrf.mxu0
  %499 = vdwg.mxu0
  %vm500 = vcmask 64512
  %v501 = vsel %vm500, %v470, 0.0
  %502 = vadd.xlane.f32.xlu0 %v501
  %v503 = vpop.xlane.xlu0 %502
  %v504 = vsel %vm500, %v473, 0.0
  %505 = vadd.xlane.f32.xlu0 %v504
  %v506 = vpop.xlane.xlu0 %505
  %v507 = vsel %vm500, %v478, 0.0
  %508 = vadd.xlane.f32.xlu0 %v507
  %v509 = vpop.xlane.xlu0 %508
  %v510 = vsel %vm500, %v481, 0.0
  %511 = vadd.xlane.f32.xlu0 %v510
  %v512 = vpop.xlane.xlu0 %511
  %v513 = vsel %vm500, %v486, 0.0
  %514 = vadd.xlane.f32.xlu0 %v513
  %v515 = vpop.xlane.xlu0 %514
  %v516 = vsel %vm500, %v489, 0.0
  %517 = vadd.xlane.f32.xlu0 %v516
  %v518 = vpop.xlane.xlu0 %517
  %v519 = vsel %vm500, %v494, 0.0
  %520 = vadd.xlane.f32.xlu0 %v519
  %v521 = vpop.xlane.xlu0 %520
  %v522 = vsel %vm500, %v497, 0.0
  %523 = vadd.xlane.f32.xlu0 %v522
  %v524 = vpop.xlane.xlu0 %523
  %v525 = vadd.f32 %v503, 0.0
  %v526 = vadd.f32 %v506, 0.0
  %v527 = vadd.f32 %v509, 0.0
  %v528 = vadd.f32 %v512, 0.0
  %v529 = vadd.f32 %v515, 0.0
  %v530 = vadd.f32 %v518, 0.0
  %v531 = vadd.f32 %v521, 0.0
  %v532 = vadd.f32 %v524, 0.0
  %v533 = vmul.f32 %v470, %v470
  %v534 = vmul.f32 %v473, %v473
  %v535 = vmul.f32 %v478, %v478
  %v536 = vmul.f32 %v481, %v481
  %v537 = vmul.f32 %v486, %v486
  %v538 = vmul.f32 %v489, %v489
  %v539 = vmul.f32 %v494, %v494
  %v540 = vmul.f32 %v497, %v497
  %v541 = vsel %vm500, %v533, 0.0
  %542 = vadd.xlane.f32.xlu0 %v541
  %v543 = vpop.xlane.xlu0 %542
  %v544 = vsel %vm500, %v534, 0.0
  %545 = vadd.xlane.f32.xlu0 %v544
  %v546 = vpop.xlane.xlu0 %545
  %v547 = vsel %vm500, %v535, 0.0
  %548 = vadd.xlane.f32.xlu0 %v547
  %v549 = vpop.xlane.xlu0 %548
  %v550 = vsel %vm500, %v536, 0.0
  %551 = vadd.xlane.f32.xlu0 %v550
  %v552 = vpop.xlane.xlu0 %551
  %v553 = vsel %vm500, %v537, 0.0
  %554 = vadd.xlane.f32.xlu0 %v553
  %v555 = vpop.xlane.xlu0 %554
  %v556 = vsel %vm500, %v538, 0.0
  %557 = vadd.xlane.f32.xlu0 %v556
  %v558 = vpop.xlane.xlu0 %557
  %v559 = vsel %vm500, %v539, 0.0
  %560 = vadd.xlane.f32.xlu0 %v559
  %v561 = vpop.xlane.xlu0 %560
  %v562 = vsel %vm500, %v540, 0.0
  %563 = vadd.xlane.f32.xlu0 %v562
  %v564 = vpop.xlane.xlu0 %563
  %v565 = vadd.f32 %v543, 0.0
  %v566 = vadd.f32 %v546, 0.0
  %v567 = vadd.f32 %v549, 0.0
  %v568 = vadd.f32 %v552, 0.0
  %v569 = vadd.f32 %v555, 0.0
  %v570 = vadd.f32 %v558, 0.0
  %v571 = vadd.f32 %v561, 0.0
  %v572 = vadd.f32 %v564, 0.0
  %v573 = vmul.f32 %v525, 0.125
  %v574 = vmul.f32 %v526, 0.125
  %v575 = vmul.f32 %v527, 0.125
  %v576 = vmul.f32 %v528, 0.125
  %v577 = vmul.f32 %v529, 0.125
  %v578 = vmul.f32 %v530, 0.125
  %v579 = vmul.f32 %v531, 0.125
  %v580 = vmul.f32 %v532, 0.125
  %v581 = vmul.f32 %v565, 0.125
  %v582 = vmul.f32 %v566, 0.125
  %v583 = vmul.f32 %v567, 0.125
  %v584 = vmul.f32 %v568, 0.125
  %v585 = vmul.f32 %v569, 0.125
  %v586 = vmul.f32 %v570, 0.125
  %v587 = vmul.f32 %v571, 0.125
  %v588 = vmul.f32 %v572, 0.125
  %v589 = vmul.f32 %v573, %v573
  %v590 = vmul.f32 %v574, %v574
  %v591 = vmul.f32 %v575, %v575
  %v592 = vmul.f32 %v576, %v576
  %v593 = vmul.f32 %v577, %v577
  %v594 = vmul.f32 %v578, %v578
  %v595 = vmul.f32 %v579, %v579
  %v596 = vmul.f32 %v580, %v580
  %v597 = vsub.f32 %v581, %v589
  %v598 = vsub.f32 %v582, %v590
  %v599 = vsub.f32 %v583, %v591
  %v600 = vsub.f32 %v584, %v592
  %v601 = vsub.f32 %v585, %v593
  %v602 = vsub.f32 %v586, %v594
  %v603 = vsub.f32 %v587, %v595
  %v604 = vsub.f32 %v588, %v596
  %v605 = vld [vmem:[%s2] sm:$0xff]
  %v606 = vld [vmem:[%s2 + $0x8] sm:$0xff]
  %v607 = vld [vmem:[%s2 + $0x10] sm:$0xff]
  %v608 = vld [vmem:[%s2 + $0x18] sm:$0xff]
  %v609 = vld [vmem:[%s2 + $0x20] sm:$0xff]
  %v610 = vld [vmem:[%s2 + $0x28] sm:$0xff]
  %v611 = vld [vmem:[%s2 + $0x30] sm:$0xff]
  %v612 = vld [vmem:[%s2 + $0x38] sm:$0xff]
  %v613 = vadd.f32 %v597, 1e-05
  %v614 = vadd.f32 %v598, 1e-05
  %v615 = vadd.f32 %v599, 1e-05
  %v616 = vadd.f32 %v600, 1e-05
  %v617 = vadd.f32 %v601, 1e-05
  %v618 = vadd.f32 %v602, 1e-05
  %v619 = vadd.f32 %v603, 1e-05
  %v620 = vadd.f32 %v604, 1e-05
  %v621 = vrsqrt.pop %v613
  %v622 = vrsqrt.pop %v614
  %v623 = vrsqrt.pop %v615
  %v624 = vrsqrt.pop %v616
  %v625 = vrsqrt.pop %v617
  %v626 = vrsqrt.pop %v618
  %v627 = vrsqrt.pop %v619
  %v628 = vrsqrt.pop %v620
  %v629 = vmul.f32 %v605, %v621
  %v630 = vmul.f32 %v606, %v622
  %v631 = vmul.f32 %v607, %v623
  %v632 = vmul.f32 %v608, %v624
  %v633 = vmul.f32 %v609, %v625
  %v634 = vmul.f32 %v610, %v626
  %v635 = vmul.f32 %v611, %v627
  %v636 = vmul.f32 %v612, %v628
  %v637 = vld [vmem:[%s3] sm:$0xff]
  %v638 = vld [vmem:[%s3 + $0x8] sm:$0xff]
  %v639 = vld [vmem:[%s3 + $0x10] sm:$0xff]
  %v640 = vld [vmem:[%s3 + $0x18] sm:$0xff]
  %v641 = vld [vmem:[%s3 + $0x20] sm:$0xff]
  %v642 = vld [vmem:[%s3 + $0x28] sm:$0xff]
  %v643 = vld [vmem:[%s3 + $0x30] sm:$0xff]
  %v644 = vld [vmem:[%s3 + $0x38] sm:$0xff]
  %v645 = vmul.f32 %v573, %v629
  %v646 = vmul.f32 %v574, %v630
  %v647 = vmul.f32 %v575, %v631
  %v648 = vmul.f32 %v576, %v632
  %v649 = vmul.f32 %v577, %v633
  %v650 = vmul.f32 %v578, %v634
  %v651 = vmul.f32 %v579, %v635
  %v652 = vmul.f32 %v580, %v636
  %v653 = vsub.f32 %v637, %v645
  %v654 = vsub.f32 %v638, %v646
  %v655 = vsub.f32 %v639, %v647
  %v656 = vsub.f32 %v640, %v648
  %v657 = vsub.f32 %v641, %v649
  %v658 = vsub.f32 %v642, %v650
  %v659 = vsub.f32 %v643, %v651
  %v660 = vsub.f32 %v644, %v652
  %662 = vset.pattern.permute.xlu0 0
  %663 = vperm.xlu0 %662, %v629
  %v664 = vpop.permute.xlu0 %663
  %667 = vset.pattern.permute.xlu0 0
  %668 = vperm.xlu0 %667, %v630
  %v669 = vpop.permute.xlu0 %668
  %672 = vset.pattern.permute.xlu0 0
  %673 = vperm.xlu0 %672, %v631
  %v674 = vpop.permute.xlu0 %673
  %677 = vset.pattern.permute.xlu0 0
  %678 = vperm.xlu0 %677, %v632
  %v679 = vpop.permute.xlu0 %678
  %682 = vset.pattern.permute.xlu0 0
  %683 = vperm.xlu0 %682, %v633
  %v684 = vpop.permute.xlu0 %683
  %687 = vset.pattern.permute.xlu0 0
  %688 = vperm.xlu0 %687, %v634
  %v689 = vpop.permute.xlu0 %688
  %692 = vset.pattern.permute.xlu0 0
  %693 = vperm.xlu0 %692, %v635
  %v694 = vpop.permute.xlu0 %693
  %697 = vset.pattern.permute.xlu0 0
  %698 = vperm.xlu0 %697, %v636
  %v699 = vpop.permute.xlu0 %698
  %v701 = vmul.f32 %v470, %v664
  %v702 = vmul.f32 %v473, %v669
  %v703 = vmul.f32 %v478, %v674
  %v704 = vmul.f32 %v481, %v679
  %v705 = vmul.f32 %v486, %v684
  %v706 = vmul.f32 %v489, %v689
  %v707 = vmul.f32 %v494, %v694
  %v708 = vmul.f32 %v497, %v699
  %710 = vset.pattern.permute.xlu0 0
  %711 = vperm.xlu0 %710, %v653
  %v712 = vpop.permute.xlu0 %711
  %715 = vset.pattern.permute.xlu0 0
  %716 = vperm.xlu0 %715, %v654
  %v717 = vpop.permute.xlu0 %716
  %720 = vset.pattern.permute.xlu0 0
  %721 = vperm.xlu0 %720, %v655
  %v722 = vpop.permute.xlu0 %721
  %725 = vset.pattern.permute.xlu0 0
  %726 = vperm.xlu0 %725, %v656
  %v727 = vpop.permute.xlu0 %726
  %730 = vset.pattern.permute.xlu0 0
  %731 = vperm.xlu0 %730, %v657
  %v732 = vpop.permute.xlu0 %731
  %735 = vset.pattern.permute.xlu0 0
  %736 = vperm.xlu0 %735, %v658
  %v737 = vpop.permute.xlu0 %736
  %740 = vset.pattern.permute.xlu0 0
  %741 = vperm.xlu0 %740, %v659
  %v742 = vpop.permute.xlu0 %741
  %745 = vset.pattern.permute.xlu0 0
  %746 = vperm.xlu0 %745, %v660
  %v747 = vpop.permute.xlu0 %746
  %v749 = vadd.f32 %v701, %v712
  %v750 = vadd.f32 %v702, %v717
  %v751 = vadd.f32 %v703, %v722
  %v752 = vadd.f32 %v704, %v727
  %v753 = vadd.f32 %v705, %v732
  %v754 = vadd.f32 %v706, %v737
  %v755 = vadd.f32 %v707, %v742
  %v756 = vadd.f32 %v708, %v747
  %v757 = vmax.f32 %v749, 0.0
  %v758 = vmax.f32 %v750, 0.0
  %v759 = vmax.f32 %v751, 0.0
  %v760 = vmax.f32 %v752, 0.0
  %v761 = vmax.f32 %v753, 0.0
  %v762 = vmax.f32 %v754, 0.0
  %v763 = vmax.f32 %v755, 0.0
  %v764 = vmax.f32 %v756, 0.0
  %v765 = vpack.c.bf16 %v758, %v757
  %v766 = vpack.c.bf16 %v760, %v759
  %v767 = vpack.c.bf16 %v762, %v761
  %v768 = vpack.c.bf16 %v764, %v763
  %v773 = vunpack.c.l.b16 %v765
  %v774 = vunpack.c.h.b16 %v765
  %v775 = vunpack.c.l.b16 %v766
  %v776 = vunpack.c.h.b16 %v766
  %v777 = vunpack.c.l.b16 %v767
  %v778 = vunpack.c.h.b16 %v767
  %v779 = vunpack.c.l.b16 %v768
  %v780 = vunpack.c.h.b16 %v768
  %v781 = vpack.c.b16 %v773, %v773
  %v782 = vpack.c.b16 %v774, %v774
  %v783 = vpack.c.b16 %v775, %v775
  %v784 = vpack.c.b16 %v776, %v776
  %v785 = vpack.c.b16 %v777, %v777
  %v786 = vpack.c.b16 %v778, %v778
  %v787 = vpack.c.b16 %v779, %v779
  %v788 = vpack.c.b16 %v780, %v780
  %vm797 = vcmask 60416
  %798 = vst.msk [vmem:[%s4] sm:$0xf] %vm797, %v781
  %799 = vst.msk [vmem:[%s4 + $0x4] sm:$0xf] %vm797, %v782
  %800 = vst.msk [vmem:[%s4 + $0x8] sm:$0xf] %vm797, %v783
  %801 = vst.msk [vmem:[%s4 + $0xc] sm:$0xf] %vm797, %v784
  %802 = vst.msk [vmem:[%s4 + $0x10] sm:$0xf] %vm797, %v785
  %803 = vst.msk [vmem:[%s4 + $0x14] sm:$0xf] %vm797, %v786
  %804 = vst.msk [vmem:[%s4 + $0x18] sm:$0xf] %vm797, %v787
  %805 = vst.msk [vmem:[%s4 + $0x1c] sm:$0xf] %vm797, %v788
  // Predicated region
  $region18: #{generator_forward.11} parent=0 // pred_check
    _
  $region19: #{generator_forward.11} parent=0 // pred_check_branch
    %807 = sbr.rel (0) target = $region21
  $region20: #{generator_forward.11} parent=0 // pred_region
    _
  $region21: #{generator_forward.11} parent=0 // pred_fallthru
    _
  // Predicated region
  $region22: #{generator_forward.11} parent=0 // pred_check
    _
  $region23: #{generator_forward.11} parent=0 // pred_check_branch
    %809 = sbr.rel (0) target = $region25
  $region24: #{generator_forward.11} parent=0 // pred_region
    _
  $region25: #{generator_forward.11} parent=0 // pred_fallthru
    _

// kernel: generator_forward.12
$region0: #{generator_forward.12}
  #allocation0 [shape = 'u32[]', space=smem, size = 0x4, offset = 0x4, fixed_abs, tag = 'smem constant byte address 0x4 - core index']
  #allocation1 [shape = 'u32[144,128]{1,0:T(1,128)}', space=vmem, size = 0x12000, scoped, tag = 'internal scratch']
  %s0 = inlined_call_operand.vmem [shape: bf16[4,256,8], index: 0, kind: input, shape index: {}]
  %s1 = inlined_call_operand.vmem [shape: bf16[4,32,256], index: 1, kind: input, shape index: {}]
  %s2 = inlined_call_operand.vmem [shape: f32[32,1], index: 2, kind: input, shape index: {}]
  %s3 = inlined_call_operand.vmem [shape: f32[32,1], index: 3, kind: input, shape index: {}]
  %s4 = inlined_call_operand.vmem [shape: bf16[4,32,8], index: 4, kind: output, shape index: {}]
  %s5 = sld [smem:[#allocation0]]
  $region26: #{generator_forward.12} parent=0
    _
  %s7 = ssub.s32 1, %s5
  %s8 = scalar_select 0, %s7, %s5
  // Predicated region
  $region2: #{generator_forward.12} parent=0 // pred_check
    _
  $region3: #{generator_forward.12} parent=0 // pred_check_branch
    %10 = sbr.rel (0) target = $region5
  $region4: #{generator_forward.12} parent=0 // pred_region
    _
  $region5: #{generator_forward.12} parent=0 // pred_fallthru
    _
  // Predicated region
  $region6: #{generator_forward.12} parent=0 // pred_check
    _
  $region7: #{generator_forward.12} parent=0 // pred_check_branch
    %12 = sbr.rel (0) target = $region9
  $region8: #{generator_forward.12} parent=0 // pred_region
    _
  $region9: #{generator_forward.12} parent=0 // pred_fallthru
    _
  // Predicated region
  $region10: #{generator_forward.12} parent=0 // pred_check
    _
  $region11: #{generator_forward.12} parent=0 // pred_check_branch
    %14 = sbr.rel (0) target = $region13
  $region12: #{generator_forward.12} parent=0 // pred_region
    _
  $region13: #{generator_forward.12} parent=0 // pred_fallthru
    _
  // Predicated region
  $region14: #{generator_forward.12} parent=0 // pred_check
    _
  $region15: #{generator_forward.12} parent=0 // pred_check_branch
    %16 = sbr.rel (0) target = $region17
  $region16: #{generator_forward.12} parent=0 // pred_region
    _
  $region17: #{generator_forward.12} parent=0 // pred_fallthru
    _
  %v18 = vld [vmem:[%s1] sm:$0xff]
  %v19 = vld [vmem:[%s1 + $0x8] sm:$0xff]
  %v20 = vld [vmem:[%s1 + $0x10] sm:$0xff]
  %v21 = vld [vmem:[%s1 + $0x18] sm:$0xff]
  %v22 = vld [vmem:[%s0] sm:$0xf]
  %v23 = vld [vmem:[%s0 + $0x4] sm:$0xf]
  %v24 = vld [vmem:[%s0 + $0x8] sm:$0xf]
  %v25 = vld [vmem:[%s0 + $0xc] sm:$0xf]
  %v26 = vld [vmem:[%s0 + $0x10] sm:$0xf]
  %v27 = vld [vmem:[%s0 + $0x14] sm:$0xf]
  %v28 = vld [vmem:[%s0 + $0x18] sm:$0xf]
  %v29 = vld [vmem:[%s0 + $0x1c] sm:$0xf]
  %v30 = vld [vmem:[%s0 + $0x20] sm:$0xf]
  %v31 = vld [vmem:[%s0 + $0x24] sm:$0xf]
  %v32 = vld [vmem:[%s0 + $0x28] sm:$0xf]
  %v33 = vld [vmem:[%s0 + $0x2c] sm:$0xf]
  %v34 = vld [vmem:[%s0 + $0x30] sm:$0xf]
  %v35 = vld [vmem:[%s0 + $0x34] sm:$0xf]
  %v36 = vld [vmem:[%s0 + $0x38] sm:$0xf]
  %v37 = vld [vmem:[%s0 + $0x3c] sm:$0xf]
  %v38 = vld [vmem:[%s0 + $0x40] sm:$0xf]
  %v39 = vld [vmem:[%s0 + $0x44] sm:$0xf]
  %v40 = vld [vmem:[%s0 + $0x48] sm:$0xf]
  %v41 = vld [vmem:[%s0 + $0x4c] sm:$0xf]
  %v42 = vld [vmem:[%s0 + $0x50] sm:$0xf]
  %v43 = vld [vmem:[%s0 + $0x54] sm:$0xf]
  %v44 = vld [vmem:[%s0 + $0x58] sm:$0xf]
  %v45 = vld [vmem:[%s0 + $0x5c] sm:$0xf]
  %v46 = vld [vmem:[%s0 + $0x60] sm:$0xf]
  %v47 = vld [vmem:[%s0 + $0x64] sm:$0xf]
  %v48 = vld [vmem:[%s0 + $0x68] sm:$0xf]
  %v49 = vld [vmem:[%s0 + $0x6c] sm:$0xf]
  %v50 = vld [vmem:[%s0 + $0x70] sm:$0xf]
  %v51 = vld [vmem:[%s0 + $0x74] sm:$0xf]
  %v52 = vld [vmem:[%s0 + $0x78] sm:$0xf]
  %v53 = vld [vmem:[%s0 + $0x7c] sm:$0xf]
  %v58 = vunpack.c.l.b16 %v18
  %v59 = vunpack.c.h.b16 %v18
  %v60 = vunpack.c.l.b16 %v19
  %v61 = vunpack.c.h.b16 %v19
  %v62 = vunpack.c.l.b16 %v20
  %v63 = vunpack.c.h.b16 %v20
  %v64 = vunpack.c.l.b16 %v21
  %v65 = vunpack.c.h.b16 %v21
  %v66 = vpack.c.b16 %v60, %v58
  %v67 = vpack.c.b16 %v61, %v59
  %v68 = vpack.c.b16 %v64, %v62
  %v69 = vpack.c.b16 %v65, %v63
  %v106 = vunpack.c.l.b16 %v22
  %v107 = vunpack.c.l.b16 %v23
  %v108 = vunpack.c.l.b16 %v24
  %v109 = vunpack.c.l.b16 %v25
  %v110 = vunpack.c.l.b16 %v26
  %v111 = vunpack.c.l.b16 %v27
  %v112 = vunpack.c.l.b16 %v28
  %v113 = vunpack.c.l.b16 %v29
  %v114 = vunpack.c.l.b16 %v30
  %v115 = vunpack.c.l.b16 %v31
  %v116 = vunpack.c.l.b16 %v32
  %v117 = vunpack.c.l.b16 %v33
  %v118 = vunpack.c.l.b16 %v34
  %v119 = vunpack.c.l.b16 %v35
  %v120 = vunpack.c.l.b16 %v36
  %v121 = vunpack.c.l.b16 %v37
  %v122 = vunpack.c.l.b16 %v38
  %v123 = vunpack.c.l.b16 %v39
  %v124 = vunpack.c.l.b16 %v40
  %v125 = vunpack.c.l.b16 %v41
  %v126 = vunpack.c.l.b16 %v42
  %v127 = vunpack.c.l.b16 %v43
  %v128 = vunpack.c.l.b16 %v44
  %v129 = vunpack.c.l.b16 %v45
  %v130 = vunpack.c.l.b16 %v46
  %v131 = vunpack.c.l.b16 %v47
  %v132 = vunpack.c.l.b16 %v48
  %v133 = vunpack.c.l.b16 %v49
  %v134 = vunpack.c.l.b16 %v50
  %v135 = vunpack.c.l.b16 %v51
  %v136 = vunpack.c.l.b16 %v52
  %v137 = vunpack.c.l.b16 %v53
  %v138 = vpack.c.b16 %v107, %v106
  %v139 = vpack.c.b16 %v109, %v108
  %v140 = vpack.c.b16 %v111, %v110
  %v141 = vpack.c.b16 %v113, %v112
  %v142 = vpack.c.b16 %v115, %v114
  %v143 = vpack.c.b16 %v117, %v116
  %v144 = vpack.c.b16 %v119, %v118
  %v145 = vpack.c.b16 %v121, %v120
  %v146 = vpack.c.b16 %v123, %v122
  %v147 = vpack.c.b16 %v125, %v124
  %v148 = vpack.c.b16 %v127, %v126
  %v149 = vpack.c.b16 %v129, %v128
  %v150 = vpack.c.b16 %v131, %v130
  %v151 = vpack.c.b16 %v133, %v132
  %v152 = vpack.c.b16 %v135, %v134
  %v153 = vpack.c.b16 %v137, %v136
  %170 = vmatprep.subr.bf16.mxu0 0
  %171 = vmatpush1.bf16.msra.mxu0 %v145
  %172 = vmatprep.subr.bf16.mxu0 0
  %173 = vmatpush1.bf16.msra.mxu0 %v144
  %174 = vmatprep.subr.bf16.mxu0 0
  %175 = vmatpush1.bf16.msra.mxu0 %v143
  %176 = vmatprep.subr.bf16.mxu0 0
  %177 = vmatpush1.bf16.msra.mxu0 %v142
  %178 = vmatprep.subr.bf16.mxu0 0
  %179 = vmatpush1.bf16.msra.mxu0 %v141
  %180 = vmatprep.subr.bf16.mxu0 0
  %181 = vmatpush1.bf16.msra.mxu0 %v140
  %182 = vmatprep.subr.bf16.mxu0 0
  %183 = vmatpush1.bf16.msra.mxu0 %v139
  %184 = vmatprep.subr.bf16.mxu0 0
  %185 = vmatpush1.bf16.msra.mxu0 %v138
  %186 = vmatprep.subr.bf16.mxu0 0
  %187 = vmatpush2.bf16.msra.mxu0 %v153
  %188 = vmatprep.subr.bf16.mxu0 0
  %189 = vmatpush2.bf16.msra.mxu0 %v152
  %190 = vmatprep.subr.bf16.mxu0 0
  %191 = vmatpush2.bf16.msra.mxu0 %v151
  %192 = vmatprep.subr.bf16.mxu0 0
  %193 = vmatpush2.bf16.msra.mxu0 %v150
  %194 = vmatprep.subr.bf16.mxu0 0
  %195 = vmatpush2.bf16.msra.mxu0 %v149
  %196 = vmatprep.subr.bf16.mxu0 0
  %197 = vmatpush2.bf16.msra.mxu0 %v148
  %198 = vmatprep.subr.bf16.mxu0 0
  %199 = vmatpush2.bf16.msra.mxu0 %v147
  %200 = vmatprep.subr.bf16.mxu0 0
  %201 = vmatpush2.bf16.msra.mxu0 %v146
  %202 = vmatprep.mubr.bf16.mxu0 %v67
  %203 = vmatmul.mubr.bf16.gmra.mxu0 %v66
  %v204 = vpop.f32.mrf.mxu0
  %v205 = vadd.f32 0.0, %v204
  %v206 = vpop.f32.mrf.mxu0
  %v207 = vpop.f32.mrf.mxu0
  %v208 = vadd.f32 0.0, %v207
  %v209 = vpop.f32.mrf.mxu0
  %210 = vmatprep.mubr.bf16.mxu0 %v69
  %211 = vmatmul.mubr.bf16.gmra.mxu0 %v68
  %v212 = vpop.f32.mrf.mxu0
  %v213 = vadd.f32 0.0, %v212
  %v214 = vpop.f32.mrf.mxu0
  %v215 = vpop.f32.mrf.mxu0
  %v216 = vadd.f32 0.0, %v215
  %v217 = vpop.f32.mrf.mxu0
  %218 = vdwg.mxu0
  %s219 = scalar_lea.vmem %s1, 32
  %v220 = vld [vmem:[%s219] sm:$0xff]
  %v221 = vld [vmem:[%s219 + $0x8] sm:$0xff]
  %v222 = vld [vmem:[%s219 + $0x10] sm:$0xff]
  %v223 = vld [vmem:[%s219 + $0x18] sm:$0xff]
  %s224 = scalar_lea.vmem %s0, 128
  %v225 = vld [vmem:[%s224] sm:$0xf]
  %v226 = vld [vmem:[%s224 + $0x4] sm:$0xf]
  %v227 = vld [vmem:[%s224 + $0x8] sm:$0xf]
  %v228 = vld [vmem:[%s224 + $0xc] sm:$0xf]
  %v229 = vld [vmem:[%s224 + $0x10] sm:$0xf]
  %v230 = vld [vmem:[%s224 + $0x14] sm:$0xf]
  %v231 = vld [vmem:[%s224 + $0x18] sm:$0xf]
  %v232 = vld [vmem:[%s224 + $0x1c] sm:$0xf]
  %v233 = vld [vmem:[%s224 + $0x20] sm:$0xf]
  %v234 = vld [vmem:[%s224 + $0x24] sm:$0xf]
  %v235 = vld [vmem:[%s224 + $0x28] sm:$0xf]
  %v236 = vld [vmem:[%s224 + $0x2c] sm:$0xf]
  %v237 = vld [vmem:[%s224 + $0x30] sm:$0xf]
  %v238 = vld [vmem:[%s224 + $0x34] sm:$0xf]
  %v239 = vld [vmem:[%s224 + $0x38] sm:$0xf]
  %v240 = vld [vmem:[%s224 + $0x3c] sm:$0xf]
  %v241 = vld [vmem:[%s224 + $0x40] sm:$0xf]
  %v242 = vld [vmem:[%s224 + $0x44] sm:$0xf]
  %v243 = vld [vmem:[%s224 + $0x48] sm:$0xf]
  %v244 = vld [vmem:[%s224 + $0x4c] sm:$0xf]
  %v245 = vld [vmem:[%s224 + $0x50] sm:$0xf]
  %v246 = vld [vmem:[%s224 + $0x54] sm:$0xf]
  %v247 = vld [vmem:[%s224 + $0x58] sm:$0xf]
  %v248 = vld [vmem:[%s224 + $0x5c] sm:$0xf]
  %v249 = vld [vmem:[%s224 + $0x60] sm:$0xf]
  %v250 = vld [vmem:[%s224 + $0x64] sm:$0xf]
  %v251 = vld [vmem:[%s224 + $0x68] sm:$0xf]
  %v252 = vld [vmem:[%s224 + $0x6c] sm:$0xf]
  %v253 = vld [vmem:[%s224 + $0x70] sm:$0xf]
  %v254 = vld [vmem:[%s224 + $0x74] sm:$0xf]
  %v255 = vld [vmem:[%s224 + $0x78] sm:$0xf]
  %v256 = vld [vmem:[%s224 + $0x7c] sm:$0xf]
  %v261 = vunpack.c.l.b16 %v220
  %v262 = vunpack.c.h.b16 %v220
  %v263 = vunpack.c.l.b16 %v221
  %v264 = vunpack.c.h.b16 %v221
  %v265 = vunpack.c.l.b16 %v222
  %v266 = vunpack.c.h.b16 %v222
  %v267 = vunpack.c.l.b16 %v223
  %v268 = vunpack.c.h.b16 %v223
  %v269 = vpack.c.b16 %v263, %v261
  %v270 = vpack.c.b16 %v264, %v262
  %v271 = vpack.c.b16 %v267, %v265
  %v272 = vpack.c.b16 %v268, %v266
  %v309 = vunpack.c.l.b16 %v225
  %v310 = vunpack.c.l.b16 %v226
  %v311 = vunpack.c.l.b16 %v227
  %v312 = vunpack.c.l.b16 %v228
  %v313 = vunpack.c.l.b16 %v229
  %v314 = vunpack.c.l.b16 %v230
  %v315 = vunpack.c.l.b16 %v231
  %v316 = vunpack.c.l.b16 %v232
  %v317 = vunpack.c.l.b16 %v233
  %v318 = vunpack.c.l.b16 %v234
  %v319 = vunpack.c.l.b16 %v235
  %v320 = vunpack.c.l.b16 %v236
  %v321 = vunpack.c.l.b16 %v237
  %v322 = vunpack.c.l.b16 %v238
  %v323 = vunpack.c.l.b16 %v239
  %v324 = vunpack.c.l.b16 %v240
  %v325 = vunpack.c.l.b16 %v241
  %v326 = vunpack.c.l.b16 %v242
  %v327 = vunpack.c.l.b16 %v243
  %v328 = vunpack.c.l.b16 %v244
  %v329 = vunpack.c.l.b16 %v245
  %v330 = vunpack.c.l.b16 %v246
  %v331 = vunpack.c.l.b16 %v247
  %v332 = vunpack.c.l.b16 %v248
  %v333 = vunpack.c.l.b16 %v249
  %v334 = vunpack.c.l.b16 %v250
  %v335 = vunpack.c.l.b16 %v251
  %v336 = vunpack.c.l.b16 %v252
  %v337 = vunpack.c.l.b16 %v253
  %v338 = vunpack.c.l.b16 %v254
  %v339 = vunpack.c.l.b16 %v255
  %v340 = vunpack.c.l.b16 %v256
  %v341 = vpack.c.b16 %v310, %v309
  %v342 = vpack.c.b16 %v312, %v311
  %v343 = vpack.c.b16 %v314, %v313
  %v344 = vpack.c.b16 %v316, %v315
  %v345 = vpack.c.b16 %v318, %v317
  %v346 = vpack.c.b16 %v320, %v319
  %v347 = vpack.c.b16 %v322, %v321
  %v348 = vpack.c.b16 %v324, %v323
  %v349 = vpack.c.b16 %v326, %v325
  %v350 = vpack.c.b16 %v328, %v327
  %v351 = vpack.c.b16 %v330, %v329
  %v352 = vpack.c.b16 %v332, %v331
  %v353 = vpack.c.b16 %v334, %v333
  %v354 = vpack.c.b16 %v336, %v335
  %v355 = vpack.c.b16 %v338, %v337
  %v356 = vpack.c.b16 %v340, %v339
  %373 = vmatprep.subr.bf16.mxu0 0
  %374 = vmatpush1.bf16.msra.mxu0 %v348
  %375 = vmatprep.subr.bf16.mxu0 0
  %376 = vmatpush1.bf16.msra.mxu0 %v347
  %377 = vmatprep.subr.bf16.mxu0 0
  %378 = vmatpush1.bf16.msra.mxu0 %v346
  %379 = vmatprep.subr.bf16.mxu0 0
  %380 = vmatpush1.bf16.msra.mxu0 %v345
  %381 = vmatprep.subr.bf16.mxu0 0
  %382 = vmatpush1.bf16.msra.mxu0 %v344
  %383 = vmatprep.subr.bf16.mxu0 0
  %384 = vmatpush1.bf16.msra.mxu0 %v343
  %385 = vmatprep.subr.bf16.mxu0 0
  %386 = vmatpush1.bf16.msra.mxu0 %v342
  %387 = vmatprep.subr.bf16.mxu0 0
  %388 = vmatpush1.bf16.msra.mxu0 %v341
  %389 = vmatprep.subr.bf16.mxu0 0
  %390 = vmatpush2.bf16.msra.mxu0 %v356
  %391 = vmatprep.subr.bf16.mxu0 0
  %392 = vmatpush2.bf16.msra.mxu0 %v355
  %393 = vmatprep.subr.bf16.mxu0 0
  %394 = vmatpush2.bf16.msra.mxu0 %v354
  %395 = vmatprep.subr.bf16.mxu0 0
  %396 = vmatpush2.bf16.msra.mxu0 %v353
  %397 = vmatprep.subr.bf16.mxu0 0
  %398 = vmatpush2.bf16.msra.mxu0 %v352
  %399 = vmatprep.subr.bf16.mxu0 0
  %400 = vmatpush2.bf16.msra.mxu0 %v351
  %401 = vmatprep.subr.bf16.mxu0 0
  %402 = vmatpush2.bf16.msra.mxu0 %v350
  %403 = vmatprep.subr.bf16.mxu0 0
  %404 = vmatpush2.bf16.msra.mxu0 %v349
  %405 = vmatprep.mubr.bf16.mxu0 %v270
  %406 = vmatmul.mubr.bf16.gmra.mxu0 %v269
  %v407 = vpop.f32.mrf.mxu0
  %v408 = vadd.f32 0.0, %v407
  %v409 = vpop.f32.mrf.mxu0
  %v410 = vpop.f32.mrf.mxu0
  %v411 = vadd.f32 0.0, %v410
  %v412 = vpop.f32.mrf.mxu0
  %413 = vmatprep.mubr.bf16.mxu0 %v272
  %414 = vmatmul.mubr.bf16.gmra.mxu0 %v271
  %v415 = vpop.f32.mrf.mxu0
  %v416 = vadd.f32 0.0, %v415
  %v417 = vpop.f32.mrf.mxu0
  %v418 = vpop.f32.mrf.mxu0
  %v419 = vadd.f32 0.0, %v418
  %v420 = vpop.f32.mrf.mxu0
  %421 = vdwg.mxu0
  %s422 = scalar_lea.vmem %s1, 64
  %v423 = vld [vmem:[%s422] sm:$0xff]
  %v424 = vld [vmem:[%s422 + $0x8] sm:$0xff]
  %v425 = vld [vmem:[%s422 + $0x10] sm:$0xff]
  %v426 = vld [vmem:[%s422 + $0x18] sm:$0xff]
  %s427 = scalar_lea.vmem %s0, 256
  %v428 = vld [vmem:[%s427] sm:$0xf]
  %v429 = vld [vmem:[%s427 + $0x4] sm:$0xf]
  %v430 = vld [vmem:[%s427 + $0x8] sm:$0xf]
  %v431 = vld [vmem:[%s427 + $0xc] sm:$0xf]
  %v432 = vld [vmem:[%s427 + $0x10] sm:$0xf]
  %v433 = vld [vmem:[%s427 + $0x14] sm:$0xf]
  %v434 = vld [vmem:[%s427 + $0x18] sm:$0xf]
  %v435 = vld [vmem:[%s427 + $0x1c] sm:$0xf]
  %v436 = vld [vmem:[%s427 + $0x20] sm:$0xf]
  %v437 = vld [vmem:[%s427 + $0x24] sm:$0xf]
  %v438 = vld [vmem:[%s427 + $0x28] sm:$0xf]
  %v439 = vld [vmem:[%s427 + $0x2c] sm:$0xf]
  %v440 = vld [vmem:[%s427 + $0x30] sm:$0xf]
  %v441 = vld [vmem:[%s427 + $0x34] sm:$0xf]
  %v442 = vld [vmem:[%s427 + $0x38] sm:$0xf]
  %v443 = vld [vmem:[%s427 + $0x3c] sm:$0xf]
  %v444 = vld [vmem:[%s427 + $0x40] sm:$0xf]
  %v445 = vld [vmem:[%s427 + $0x44] sm:$0xf]
  %v446 = vld [vmem:[%s427 + $0x48] sm:$0xf]
  %v447 = vld [vmem:[%s427 + $0x4c] sm:$0xf]
  %v448 = vld [vmem:[%s427 + $0x50] sm:$0xf]
  %v449 = vld [vmem:[%s427 + $0x54] sm:$0xf]
  %v450 = vld [vmem:[%s427 + $0x58] sm:$0xf]
  %v451 = vld [vmem:[%s427 + $0x5c] sm:$0xf]
  %v452 = vld [vmem:[%s427 + $0x60] sm:$0xf]
  %v453 = vld [vmem:[%s427 + $0x64] sm:$0xf]
  %v454 = vld [vmem:[%s427 + $0x68] sm:$0xf]
  %v455 = vld [vmem:[%s427 + $0x6c] sm:$0xf]
  %v456 = vld [vmem:[%s427 + $0x70] sm:$0xf]
  %v457 = vld [vmem:[%s427 + $0x74] sm:$0xf]
  %v458 = vld [vmem:[%s427 + $0x78] sm:$0xf]
  %v459 = vld [vmem:[%s427 + $0x7c] sm:$0xf]
  %v464 = vunpack.c.l.b16 %v423
  %v465 = vunpack.c.h.b16 %v423
  %v466 = vunpack.c.l.b16 %v424
  %v467 = vunpack.c.h.b16 %v424
  %v468 = vunpack.c.l.b16 %v425
  %v469 = vunpack.c.h.b16 %v425
  %v470 = vunpack.c.l.b16 %v426
  %v471 = vunpack.c.h.b16 %v426
  %v472 = vpack.c.b16 %v466, %v464
  %v473 = vpack.c.b16 %v467, %v465
  %v474 = vpack.c.b16 %v470, %v468
  %v475 = vpack.c.b16 %v471, %v469
  %v512 = vunpack.c.l.b16 %v428
  %v513 = vunpack.c.l.b16 %v429
  %v514 = vunpack.c.l.b16 %v430
  %v515 = vunpack.c.l.b16 %v431
  %v516 = vunpack.c.l.b16 %v432
  %v517 = vunpack.c.l.b16 %v433
  %v518 = vunpack.c.l.b16 %v434
  %v519 = vunpack.c.l.b16 %v435
  %v520 = vunpack.c.l.b16 %v436
  %v521 = vunpack.c.l.b16 %v437
  %v522 = vunpack.c.l.b16 %v438
  %v523 = vunpack.c.l.b16 %v439
  %v524 = vunpack.c.l.b16 %v440
  %v525 = vunpack.c.l.b16 %v441
  %v526 = vunpack.c.l.b16 %v442
  %v527 = vunpack.c.l.b16 %v443
  %v528 = vunpack.c.l.b16 %v444
  %v529 = vunpack.c.l.b16 %v445
  %v530 = vunpack.c.l.b16 %v446
  %v531 = vunpack.c.l.b16 %v447
  %v532 = vunpack.c.l.b16 %v448
  %v533 = vunpack.c.l.b16 %v449
  %v534 = vunpack.c.l.b16 %v450
  %v535 = vunpack.c.l.b16 %v451
  %v536 = vunpack.c.l.b16 %v452
  %v537 = vunpack.c.l.b16 %v453
  %v538 = vunpack.c.l.b16 %v454
  %v539 = vunpack.c.l.b16 %v455
  %v540 = vunpack.c.l.b16 %v456
  %v541 = vunpack.c.l.b16 %v457
  %v542 = vunpack.c.l.b16 %v458
  %v543 = vunpack.c.l.b16 %v459
  %v544 = vpack.c.b16 %v513, %v512
  %v545 = vpack.c.b16 %v515, %v514
  %v546 = vpack.c.b16 %v517, %v516
  %v547 = vpack.c.b16 %v519, %v518
  %v548 = vpack.c.b16 %v521, %v520
  %v549 = vpack.c.b16 %v523, %v522
  %v550 = vpack.c.b16 %v525, %v524
  %v551 = vpack.c.b16 %v527, %v526
  %v552 = vpack.c.b16 %v529, %v528
  %v553 = vpack.c.b16 %v531, %v530
  %v554 = vpack.c.b16 %v533, %v532
  %v555 = vpack.c.b16 %v535, %v534
  %v556 = vpack.c.b16 %v537, %v536
  %v557 = vpack.c.b16 %v539, %v538
  %v558 = vpack.c.b16 %v541, %v540
  %v559 = vpack.c.b16 %v543, %v542
  %576 = vmatprep.subr.bf16.mxu0 0
  %577 = vmatpush1.bf16.msra.mxu0 %v551
  %578 = vmatprep.subr.bf16.mxu0 0
  %579 = vmatpush1.bf16.msra.mxu0 %v550
  %580 = vmatprep.subr.bf16.mxu0 0
  %581 = vmatpush1.bf16.msra.mxu0 %v549
  %582 = vmatprep.subr.bf16.mxu0 0
  %583 = vmatpush1.bf16.msra.mxu0 %v548
  %584 = vmatprep.subr.bf16.mxu0 0
  %585 = vmatpush1.bf16.msra.mxu0 %v547
  %586 = vmatprep.subr.bf16.mxu0 0
  %587 = vmatpush1.bf16.msra.mxu0 %v546
  %588 = vmatprep.subr.bf16.mxu0 0
  %589 = vmatpush1.bf16.msra.mxu0 %v545
  %590 = vmatprep.subr.bf16.mxu0 0
  %591 = vmatpush1.bf16.msra.mxu0 %v544
  %592 = vmatprep.subr.bf16.mxu0 0
  %593 = vmatpush2.bf16.msra.mxu0 %v559
  %594 = vmatprep.subr.bf16.mxu0 0
  %595 = vmatpush2.bf16.msra.mxu0 %v558
  %596 = vmatprep.subr.bf16.mxu0 0
  %597 = vmatpush2.bf16.msra.mxu0 %v557
  %598 = vmatprep.subr.bf16.mxu0 0
  %599 = vmatpush2.bf16.msra.mxu0 %v556
  %600 = vmatprep.subr.bf16.mxu0 0
  %601 = vmatpush2.bf16.msra.mxu0 %v555
  %602 = vmatprep.subr.bf16.mxu0 0
  %603 = vmatpush2.bf16.msra.mxu0 %v554
  %604 = vmatprep.subr.bf16.mxu0 0
  %605 = vmatpush2.bf16.msra.mxu0 %v553
  %606 = vmatprep.subr.bf16.mxu0 0
  %607 = vmatpush2.bf16.msra.mxu0 %v552
  %608 = vmatprep.mubr.bf16.mxu0 %v473
  %609 = vmatmul.mubr.bf16.gmra.mxu0 %v472
  %v610 = vpop.f32.mrf.mxu0
  %v611 = vadd.f32 0.0, %v610
  %v612 = vpop.f32.mrf.mxu0
  %v613 = vpop.f32.mrf.mxu0
  %v614 = vadd.f32 0.0, %v613
  %v615 = vpop.f32.mrf.mxu0
  %616 = vmatprep.mubr.bf16.mxu0 %v475
  %617 = vmatmul.mubr.bf16.gmra.mxu0 %v474
  %v618 = vpop.f32.mrf.mxu0
  %v619 = vadd.f32 0.0, %v618
  %v620 = vpop.f32.mrf.mxu0
  %v621 = vpop.f32.mrf.mxu0
  %v622 = vadd.f32 0.0, %v621
  %v623 = vpop.f32.mrf.mxu0
  %624 = vdwg.mxu0
  %s625 = scalar_lea.vmem %s1, 96
  %v626 = vld [vmem:[%s625] sm:$0xff]
  %v627 = vld [vmem:[%s625 + $0x8] sm:$0xff]
  %v628 = vld [vmem:[%s625 + $0x10] sm:$0xff]
  %v629 = vld [vmem:[%s625 + $0x18] sm:$0xff]
  %s630 = scalar_lea.vmem %s0, 384
  %v631 = vld [vmem:[%s630] sm:$0xf]
  %v632 = vld [vmem:[%s630 + $0x4] sm:$0xf]
  %v633 = vld [vmem:[%s630 + $0x8] sm:$0xf]
  %v634 = vld [vmem:[%s630 + $0xc] sm:$0xf]
  %v635 = vld [vmem:[%s630 + $0x10] sm:$0xf]
  %v636 = vld [vmem:[%s630 + $0x14] sm:$0xf]
  %v637 = vld [vmem:[%s630 + $0x18] sm:$0xf]
  %v638 = vld [vmem:[%s630 + $0x1c] sm:$0xf]
  %v639 = vld [vmem:[%s630 + $0x20] sm:$0xf]
  %v640 = vld [vmem:[%s630 + $0x24] sm:$0xf]
  %v641 = vld [vmem:[%s630 + $0x28] sm:$0xf]
  %v642 = vld [vmem:[%s630 + $0x2c] sm:$0xf]
  %v643 = vld [vmem:[%s630 + $0x30] sm:$0xf]
  %v644 = vld [vmem:[%s630 + $0x34] sm:$0xf]
  %v645 = vld [vmem:[%s630 + $0x38] sm:$0xf]
  %v646 = vld [vmem:[%s630 + $0x3c] sm:$0xf]
  %v647 = vld [vmem:[%s630 + $0x40] sm:$0xf]
  %v648 = vld [vmem:[%s630 + $0x44] sm:$0xf]
  %v649 = vld [vmem:[%s630 + $0x48] sm:$0xf]
  %v650 = vld [vmem:[%s630 + $0x4c] sm:$0xf]
  %v651 = vld [vmem:[%s630 + $0x50] sm:$0xf]
  %v652 = vld [vmem:[%s630 + $0x54] sm:$0xf]
  %v653 = vld [vmem:[%s630 + $0x58] sm:$0xf]
  %v654 = vld [vmem:[%s630 + $0x5c] sm:$0xf]
  %v655 = vld [vmem:[%s630 + $0x60] sm:$0xf]
  %v656 = vld [vmem:[%s630 + $0x64] sm:$0xf]
  %v657 = vld [vmem:[%s630 + $0x68] sm:$0xf]
  %v658 = vld [vmem:[%s630 + $0x6c] sm:$0xf]
  %v659 = vld [vmem:[%s630 + $0x70] sm:$0xf]
  %v660 = vld [vmem:[%s630 + $0x74] sm:$0xf]
  %v661 = vld [vmem:[%s630 + $0x78] sm:$0xf]
  %v662 = vld [vmem:[%s630 + $0x7c] sm:$0xf]
  %v667 = vunpack.c.l.b16 %v626
  %v668 = vunpack.c.h.b16 %v626
  %v669 = vunpack.c.l.b16 %v627
  %v670 = vunpack.c.h.b16 %v627
  %v671 = vunpack.c.l.b16 %v628
  %v672 = vunpack.c.h.b16 %v628
  %v673 = vunpack.c.l.b16 %v629
  %v674 = vunpack.c.h.b16 %v629
  %v675 = vpack.c.b16 %v669, %v667
  %v676 = vpack.c.b16 %v670, %v668
  %v677 = vpack.c.b16 %v673, %v671
  %v678 = vpack.c.b16 %v674, %v672
  %v715 = vunpack.c.l.b16 %v631
  %v716 = vunpack.c.l.b16 %v632
  %v717 = vunpack.c.l.b16 %v633
  %v718 = vunpack.c.l.b16 %v634
  %v719 = vunpack.c.l.b16 %v635
  %v720 = vunpack.c.l.b16 %v636
  %v721 = vunpack.c.l.b16 %v637
  %v722 = vunpack.c.l.b16 %v638
  %v723 = vunpack.c.l.b16 %v639
  %v724 = vunpack.c.l.b16 %v640
  %v725 = vunpack.c.l.b16 %v641
  %v726 = vunpack.c.l.b16 %v642
  %v727 = vunpack.c.l.b16 %v643
  %v728 = vunpack.c.l.b16 %v644
  %v729 = vunpack.c.l.b16 %v645
  %v730 = vunpack.c.l.b16 %v646
  %v731 = vunpack.c.l.b16 %v647
  %v732 = vunpack.c.l.b16 %v648
  %v733 = vunpack.c.l.b16 %v649
  %v734 = vunpack.c.l.b16 %v650
  %v735 = vunpack.c.l.b16 %v651
  %v736 = vunpack.c.l.b16 %v652
  %v737 = vunpack.c.l.b16 %v653
  %v738 = vunpack.c.l.b16 %v654
  %v739 = vunpack.c.l.b16 %v655
  %v740 = vunpack.c.l.b16 %v656
  %v741 = vunpack.c.l.b16 %v657
  %v742 = vunpack.c.l.b16 %v658
  %v743 = vunpack.c.l.b16 %v659
  %v744 = vunpack.c.l.b16 %v660
  %v745 = vunpack.c.l.b16 %v661
  %v746 = vunpack.c.l.b16 %v662
  %v747 = vpack.c.b16 %v716, %v715
  %v748 = vpack.c.b16 %v718, %v717
  %v749 = vpack.c.b16 %v720, %v719
  %v750 = vpack.c.b16 %v722, %v721
  %v751 = vpack.c.b16 %v724, %v723
  %v752 = vpack.c.b16 %v726, %v725
  %v753 = vpack.c.b16 %v728, %v727
  %v754 = vpack.c.b16 %v730, %v729
  %v755 = vpack.c.b16 %v732, %v731
  %v756 = vpack.c.b16 %v734, %v733
  %v757 = vpack.c.b16 %v736, %v735
  %v758 = vpack.c.b16 %v738, %v737
  %v759 = vpack.c.b16 %v740, %v739
  %v760 = vpack.c.b16 %v742, %v741
  %v761 = vpack.c.b16 %v744, %v743
  %v762 = vpack.c.b16 %v746, %v745
  %779 = vmatprep.subr.bf16.mxu0 0
  %780 = vmatpush1.bf16.msra.mxu0 %v754
  %781 = vmatprep.subr.bf16.mxu0 0
  %782 = vmatpush1.bf16.msra.mxu0 %v753
  %783 = vmatprep.subr.bf16.mxu0 0
  %784 = vmatpush1.bf16.msra.mxu0 %v752
  %785 = vmatprep.subr.bf16.mxu0 0
  %786 = vmatpush1.bf16.msra.mxu0 %v751
  %787 = vmatprep.subr.bf16.mxu0 0
  %788 = vmatpush1.bf16.msra.mxu0 %v750
  %789 = vmatprep.subr.bf16.mxu0 0
  %790 = vmatpush1.bf16.msra.mxu0 %v749
  %791 = vmatprep.subr.bf16.mxu0 0
  %792 = vmatpush1.bf16.msra.mxu0 %v748
  %793 = vmatprep.subr.bf16.mxu0 0
  %794 = vmatpush1.bf16.msra.mxu0 %v747
  %795 = vmatprep.subr.bf16.mxu0 0
  %796 = vmatpush2.bf16.msra.mxu0 %v762
  %797 = vmatprep.subr.bf16.mxu0 0
  %798 = vmatpush2.bf16.msra.mxu0 %v761
  %799 = vmatprep.subr.bf16.mxu0 0
  %800 = vmatpush2.bf16.msra.mxu0 %v760
  %801 = vmatprep.subr.bf16.mxu0 0
  %802 = vmatpush2.bf16.msra.mxu0 %v759
  %803 = vmatprep.subr.bf16.mxu0 0
  %804 = vmatpush2.bf16.msra.mxu0 %v758
  %805 = vmatprep.subr.bf16.mxu0 0
  %806 = vmatpush2.bf16.msra.mxu0 %v757
  %807 = vmatprep.subr.bf16.mxu0 0
  %808 = vmatpush2.bf16.msra.mxu0 %v756
  %809 = vmatprep.subr.bf16.mxu0 0
  %810 = vmatpush2.bf16.msra.mxu0 %v755
  %811 = vmatprep.mubr.bf16.mxu0 %v676
  %812 = vmatmul.mubr.bf16.gmra.mxu0 %v675
  %v813 = vpop.f32.mrf.mxu0
  %v814 = vadd.f32 0.0, %v813
  %v815 = vpop.f32.mrf.mxu0
  %v816 = vpop.f32.mrf.mxu0
  %v817 = vadd.f32 0.0, %v816
  %v818 = vpop.f32.mrf.mxu0
  %819 = vmatprep.mubr.bf16.mxu0 %v678
  %820 = vmatmul.mubr.bf16.gmra.mxu0 %v677
  %v821 = vpop.f32.mrf.mxu0
  %v822 = vadd.f32 0.0, %v821
  %v823 = vpop.f32.mrf.mxu0
  %v824 = vpop.f32.mrf.mxu0
  %v825 = vadd.f32 0.0, %v824
  %v826 = vpop.f32.mrf.mxu0
  %827 = vdwg.mxu0
  %vm828 = vcmask 64512
  %v829 = vsel %vm828, %v205, 0.0
  %830 = vadd.xlane.f32.xlu0 %v829
  %v831 = vpop.xlane.xlu0 %830
  %v832 = vsel %vm828, %v208, 0.0
  %833 = vadd.xlane.f32.xlu0 %v832
  %v834 = vpop.xlane.xlu0 %833
  %v835 = vsel %vm828, %v213, 0.0
  %836 = vadd.xlane.f32.xlu0 %v835
  %v837 = vpop.xlane.xlu0 %836
  %v838 = vsel %vm828, %v216, 0.0
  %839 = vadd.xlane.f32.xlu0 %v838
  %v840 = vpop.xlane.xlu0 %839
  %v841 = vadd.f32 %v831, 0.0
  %v842 = vadd.f32 %v834, 0.0
  %v843 = vadd.f32 %v837, 0.0
  %v844 = vadd.f32 %v840, 0.0
  %v845 = vsel %vm828, %v408, 0.0
  %846 = vadd.xlane.f32.xlu0 %v845
  %v847 = vpop.xlane.xlu0 %846
  %v848 = vsel %vm828, %v411, 0.0
  %849 = vadd.xlane.f32.xlu0 %v848
  %v850 = vpop.xlane.xlu0 %849
  %v851 = vsel %vm828, %v416, 0.0
  %852 = vadd.xlane.f32.xlu0 %v851
  %v853 = vpop.xlane.xlu0 %852
  %v854 = vsel %vm828, %v419, 0.0
  %855 = vadd.xlane.f32.xlu0 %v854
  %v856 = vpop.xlane.xlu0 %855
  %v857 = vadd.f32 %v841, %v847
  %v858 = vadd.f32 %v842, %v850
  %v859 = vadd.f32 %v843, %v853
  %v860 = vadd.f32 %v844, %v856
  %v861 = vsel %vm828, %v611, 0.0
  %862 = vadd.xlane.f32.xlu0 %v861
  %v863 = vpop.xlane.xlu0 %862
  %v864 = vsel %vm828, %v614, 0.0
  %865 = vadd.xlane.f32.xlu0 %v864
  %v866 = vpop.xlane.xlu0 %865
  %v867 = vsel %vm828, %v619, 0.0
  %868 = vadd.xlane.f32.xlu0 %v867
  %v869 = vpop.xlane.xlu0 %868
  %v870 = vsel %vm828, %v622, 0.0
  %871 = vadd.xlane.f32.xlu0 %v870
  %v872 = vpop.xlane.xlu0 %871
  %v873 = vadd.f32 %v857, %v863
  %v874 = vadd.f32 %v858, %v866
  %v875 = vadd.f32 %v859, %v869
  %v876 = vadd.f32 %v860, %v872
  %v877 = vsel %vm828, %v814, 0.0
  %878 = vadd.xlane.f32.xlu0 %v877
  %v879 = vpop.xlane.xlu0 %878
  %v880 = vsel %vm828, %v817, 0.0
  %881 = vadd.xlane.f32.xlu0 %v880
  %v882 = vpop.xlane.xlu0 %881
  %v883 = vsel %vm828, %v822, 0.0
  %884 = vadd.xlane.f32.xlu0 %v883
  %v885 = vpop.xlane.xlu0 %884
  %v886 = vsel %vm828, %v825, 0.0
  %887 = vadd.xlane.f32.xlu0 %v886
  %v888 = vpop.xlane.xlu0 %887
  %v889 = vadd.f32 %v873, %v879
  %v890 = vadd.f32 %v874, %v882
  %v891 = vadd.f32 %v875, %v885
  %v892 = vadd.f32 %v876, %v888
  %v893 = vmul.f32 %v205, %v205
  %v894 = vmul.f32 %v208, %v208
  %v895 = vmul.f32 %v213, %v213
  %v896 = vmul.f32 %v216, %v216
  %v897 = vsel %vm828, %v893, 0.0
  %898 = vadd.xlane.f32.xlu0 %v897
  %v899 = vpop.xlane.xlu0 %898
  %v900 = vsel %vm828, %v894, 0.0
  %901 = vadd.xlane.f32.xlu0 %v900
  %v902 = vpop.xlane.xlu0 %901
  %v903 = vsel %vm828, %v895, 0.0
  %904 = vadd.xlane.f32.xlu0 %v903
  %v905 = vpop.xlane.xlu0 %904
  %v906 = vsel %vm828, %v896, 0.0
  %907 = vadd.xlane.f32.xlu0 %v906
  %v908 = vpop.xlane.xlu0 %907
  %v909 = vadd.f32 %v899, 0.0
  %v910 = vadd.f32 %v902, 0.0
  %v911 = vadd.f32 %v905, 0.0
  %v912 = vadd.f32 %v908, 0.0
  %v913 = vmul.f32 %v408, %v408
  %v914 = vmul.f32 %v411, %v411
  %v915 = vmul.f32 %v416, %v416
  %v916 = vmul.f32 %v419, %v419
  %v917 = vsel %vm828, %v913, 0.0
  %918 = vadd.xlane.f32.xlu0 %v917
  %v919 = vpop.xlane.xlu0 %918
  %v920 = vsel %vm828, %v914, 0.0
  %921 = vadd.xlane.f32.xlu0 %v920
  %v922 = vpop.xlane.xlu0 %921
  %v923 = vsel %vm828, %v915, 0.0
  %924 = vadd.xlane.f32.xlu0 %v923
  %v925 = vpop.xlane.xlu0 %924
  %v926 = vsel %vm828, %v916, 0.0
  %927 = vadd.xlane.f32.xlu0 %v926
  %v928 = vpop.xlane.xlu0 %927
  %v929 = vadd.f32 %v909, %v919
  %v930 = vadd.f32 %v910, %v922
  %v931 = vadd.f32 %v911, %v925
  %v932 = vadd.f32 %v912, %v928
  %v933 = vmul.f32 %v611, %v611
  %v934 = vmul.f32 %v614, %v614
  %v935 = vmul.f32 %v619, %v619
  %v936 = vmul.f32 %v622, %v622
  %v937 = vsel %vm828, %v933, 0.0
  %938 = vadd.xlane.f32.xlu0 %v937
  %v939 = vpop.xlane.xlu0 %938
  %v940 = vsel %vm828, %v934, 0.0
  %941 = vadd.xlane.f32.xlu0 %v940
  %v942 = vpop.xlane.xlu0 %941
  %v943 = vsel %vm828, %v935, 0.0
  %944 = vadd.xlane.f32.xlu0 %v943
  %v945 = vpop.xlane.xlu0 %944
  %v946 = vsel %vm828, %v936, 0.0
  %947 = vadd.xlane.f32.xlu0 %v946
  %v948 = vpop.xlane.xlu0 %947
  %v949 = vadd.f32 %v929, %v939
  %v950 = vadd.f32 %v930, %v942
  %v951 = vadd.f32 %v931, %v945
  %v952 = vadd.f32 %v932, %v948
  %v953 = vmul.f32 %v814, %v814
  %v954 = vmul.f32 %v817, %v817
  %v955 = vmul.f32 %v822, %v822
  %v956 = vmul.f32 %v825, %v825
  %v957 = vsel %vm828, %v953, 0.0
  %958 = vadd.xlane.f32.xlu0 %v957
  %v959 = vpop.xlane.xlu0 %958
  %v960 = vsel %vm828, %v954, 0.0
  %961 = vadd.xlane.f32.xlu0 %v960
  %v962 = vpop.xlane.xlu0 %961
  %v963 = vsel %vm828, %v955, 0.0
  %964 = vadd.xlane.f32.xlu0 %v963
  %v965 = vpop.xlane.xlu0 %964
  %v966 = vsel %vm828, %v956, 0.0
  %967 = vadd.xlane.f32.xlu0 %v966
  %v968 = vpop.xlane.xlu0 %967
  %v969 = vadd.f32 %v949, %v959
  %v970 = vadd.f32 %v950, %v962
  %v971 = vadd.f32 %v951, %v965
  %v972 = vadd.f32 %v952, %v968
  %v973 = vmul.f32 %v889, 0.03125
  %v974 = vmul.f32 %v890, 0.03125
  %v975 = vmul.f32 %v891, 0.03125
  %v976 = vmul.f32 %v892, 0.03125
  %v977 = vmul.f32 %v969, 0.03125
  %v978 = vmul.f32 %v970, 0.03125
  %v979 = vmul.f32 %v971, 0.03125
  %v980 = vmul.f32 %v972, 0.03125
  %v981 = vmul.f32 %v973, %v973
  %v982 = vmul.f32 %v974, %v974
  %v983 = vmul.f32 %v975, %v975
  %v984 = vmul.f32 %v976, %v976
  %v985 = vsub.f32 %v977, %v981
  %v986 = vsub.f32 %v978, %v982
  %v987 = vsub.f32 %v979, %v983
  %v988 = vsub.f32 %v980, %v984
  %v989 = vld [vmem:[%s2] sm:$0xff]
  %v990 = vld [vmem:[%s2 + $0x8] sm:$0xff]
  %v991 = vld [vmem:[%s2 + $0x10] sm:$0xff]
  %v992 = vld [vmem:[%s2 + $0x18] sm:$0xff]
  %v993 = vadd.f32 %v985, 1e-05
  %v994 = vadd.f32 %v986, 1e-05
  %v995 = vadd.f32 %v987, 1e-05
  %v996 = vadd.f32 %v988, 1e-05
  %v997 = vrsqrt.pop %v993
  %v998 = vrsqrt.pop %v994
  %v999 = vrsqrt.pop %v995
  %v1000 = vrsqrt.pop %v996
  %v1001 = vmul.f32 %v989, %v997
  %v1002 = vmul.f32 %v990, %v998
  %v1003 = vmul.f32 %v991, %v999
  %v1004 = vmul.f32 %v992, %v1000
  %v1005 = vld [vmem:[%s3] sm:$0xff]
  %v1006 = vld [vmem:[%s3 + $0x8] sm:$0xff]
  %v1007 = vld [vmem:[%s3 + $0x10] sm:$0xff]
  %v1008 = vld [vmem:[%s3 + $0x18] sm:$0xff]
  %v1009 = vmul.f32 %v973, %v1001
  %v1010 = vmul.f32 %v974, %v1002
  %v1011 = vmul.f32 %v975, %v1003
  %v1012 = vmul.f32 %v976, %v1004
  %v1013 = vsub.f32 %v1005, %v1009
  %v1014 = vsub.f32 %v1006, %v1010
  %v1015 = vsub.f32 %v1007, %v1011
  %v1016 = vsub.f32 %v1008, %v1012
  %1018 = vset.pattern.permute.xlu0 0
  %1019 = vperm.xlu0 %1018, %v1001
  %v1020 = vpop.permute.xlu0 %1019
  %1023 = vset.pattern.permute.xlu0 0
  %1024 = vperm.xlu0 %1023, %v1002
  %v1025 = vpop.permute.xlu0 %1024
  %1028 = vset.pattern.permute.xlu0 0
  %1029 = vperm.xlu0 %1028, %v1003
  %v1030 = vpop.permute.xlu0 %1029
  %1033 = vset.pattern.permute.xlu0 0
  %1034 = vperm.xlu0 %1033, %v1004
  %v1035 = vpop.permute.xlu0 %1034
  %v1037 = vmul.f32 %v205, %v1020
  %v1038 = vmul.f32 %v208, %v1025
  %v1039 = vmul.f32 %v213, %v1030
  %v1040 = vmul.f32 %v216, %v1035
  %1042 = vset.pattern.permute.xlu0 0
  %1043 = vperm.xlu0 %1042, %v1013
  %v1044 = vpop.permute.xlu0 %1043
  %1047 = vset.pattern.permute.xlu0 0
  %1048 = vperm.xlu0 %1047, %v1014
  %v1049 = vpop.permute.xlu0 %1048
  %1052 = vset.pattern.permute.xlu0 0
  %1053 = vperm.xlu0 %1052, %v1015
  %v1054 = vpop.permute.xlu0 %1053
  %1057 = vset.pattern.permute.xlu0 0
  %1058 = vperm.xlu0 %1057, %v1016
  %v1059 = vpop.permute.xlu0 %1058
  %v1061 = vadd.f32 %v1037, %v1044
  %v1062 = vadd.f32 %v1038, %v1049
  %v1063 = vadd.f32 %v1039, %v1054
  %v1064 = vadd.f32 %v1040, %v1059
  %v1065 = vmax.f32 %v1061, 0.0
  %v1066 = vmax.f32 %v1062, 0.0
  %v1067 = vmax.f32 %v1063, 0.0
  %v1068 = vmax.f32 %v1064, 0.0
  %v1069 = vpack.c.bf16 %v1066, %v1065
  %v1070 = vpack.c.bf16 %v1068, %v1067
  %v1073 = vunpack.c.l.b16 %v1069
  %v1074 = vunpack.c.h.b16 %v1069
  %v1075 = vunpack.c.l.b16 %v1070
  %v1076 = vunpack.c.h.b16 %v1070
  %v1077 = vpack.c.b16 %v1073, %v1073
  %v1078 = vpack.c.b16 %v1074, %v1074
  %v1079 = vpack.c.b16 %v1075, %v1075
  %v1080 = vpack.c.b16 %v1076, %v1076
  %vm1085 = vcmask 60416
  %1086 = vst.msk [vmem:[%s4] sm:$0xf] %vm1085, %v1077
  %1087 = vst.msk [vmem:[%s4 + $0x4] sm:$0xf] %vm1085, %v1078
  %1088 = vst.msk [vmem:[%s4 + $0x8] sm:$0xf] %vm1085, %v1079
  %1089 = vst.msk [vmem:[%s4 + $0xc] sm:$0xf] %vm1085, %v1080
  %v1090 = vmul.f32 %v408, %v1020
  %v1091 = vmul.f32 %v411, %v1025
  %v1092 = vmul.f32 %v416, %v1030
  %v1093 = vmul.f32 %v419, %v1035
  %v1094 = vadd.f32 %v1090, %v1044
  %v1095 = vadd.f32 %v1091, %v1049
  %v1096 = vadd.f32 %v1092, %v1054
  %v1097 = vadd.f32 %v1093, %v1059
  %v1098 = vmax.f32 %v1094, 0.0
  %v1099 = vmax.f32 %v1095, 0.0
  %v1100 = vmax.f32 %v1096, 0.0
  %v1101 = vmax.f32 %v1097, 0.0
  %v1102 = vpack.c.bf16 %v1099, %v1098
  %v1103 = vpack.c.bf16 %v1101, %v1100
  %v1106 = vunpack.c.l.b16 %v1102
  %v1107 = vunpack.c.h.b16 %v1102
  %v1108 = vunpack.c.l.b16 %v1103
  %v1109 = vunpack.c.h.b16 %v1103
  %v1110 = vpack.c.b16 %v1106, %v1106
  %v1111 = vpack.c.b16 %v1107, %v1107
  %v1112 = vpack.c.b16 %v1108, %v1108
  %v1113 = vpack.c.b16 %v1109, %v1109
  %s1118 = scalar_lea.vmem %s4, 16
  %1119 = vst.msk [vmem:[%s1118] sm:$0xf] %vm1085, %v1110
  %1120 = vst.msk [vmem:[%s1118 + $0x4] sm:$0xf] %vm1085, %v1111
  %1121 = vst.msk [vmem:[%s1118 + $0x8] sm:$0xf] %vm1085, %v1112
  %1122 = vst.msk [vmem:[%s1118 + $0xc] sm:$0xf] %vm1085, %v1113
  %v1123 = vmul.f32 %v611, %v1020
  %v1124 = vmul.f32 %v614, %v1025
  %v1125 = vmul.f32 %v619, %v1030
  %v1126 = vmul.f32 %v622, %v1035
  %v1127 = vadd.f32 %v1123, %v1044
  %v1128 = vadd.f32 %v1124, %v1049
  %v1129 = vadd.f32 %v1125, %v1054
  %v1130 = vadd.f32 %v1126, %v1059
  %v1131 = vmax.f32 %v1127, 0.0
  %v1132 = vmax.f32 %v1128, 0.0
  %v1133 = vmax.f32 %v1129, 0.0
  %v1134 = vmax.f32 %v1130, 0.0
  %v1135 = vpack.c.bf16 %v1132, %v1131
  %v1136 = vpack.c.bf16 %v1134, %v1133
  %v1139 = vunpack.c.l.b16 %v1135
  %v1140 = vunpack.c.h.b16 %v1135
  %v1141 = vunpack.c.l.b16 %v1136
  %v1142 = vunpack.c.h.b16 %v1136
  %v1143 = vpack.c.b16 %v1139, %v1139
  %v1144 = vpack.c.b16 %v1140, %v1140
  %v1145 = vpack.c.b16 %v1141, %v1141
  %v1146 = vpack.c.b16 %v1142, %v1142
  %s1151 = scalar_lea.vmem %s4, 32
  %1152 = vst.msk [vmem:[%s1151] sm:$0xf] %vm1085, %v1143
  %1153 = vst.msk [vmem:[%s1151 + $0x4] sm:$0xf] %vm1085, %v1144
  %1154 = vst.msk [vmem:[%s1151 + $0x8] sm:$0xf] %vm1085, %v1145
  %1155 = vst.msk [vmem:[%s1151 + $0xc] sm:$0xf] %vm1085, %v1146
  %v1156 = vmul.f32 %v814, %v1020
  %v1157 = vmul.f32 %v817, %v1025
  %v1158 = vmul.f32 %v822, %v1030
  %v1159 = vmul.f32 %v825, %v1035
  %v1160 = vadd.f32 %v1156, %v1044
  %v1161 = vadd.f32 %v1157, %v1049
  %v1162 = vadd.f32 %v1158, %v1054
  %v1163 = vadd.f32 %v1159, %v1059
  %v1164 = vmax.f32 %v1160, 0.0
  %v1165 = vmax.f32 %v1161, 0.0
  %v1166 = vmax.f32 %v1162, 0.0
  %v1167 = vmax.f32 %v1163, 0.0
  %v1168 = vpack.c.bf16 %v1165, %v1164
  %v1169 = vpack.c.bf16 %v1167, %v1166
  %v1172 = vunpack.c.l.b16 %v1168
  %v1173 = vunpack.c.h.b16 %v1168
  %v1174 = vunpack.c.l.b16 %v1169
  %v1175 = vunpack.c.h.b16 %v1169
  %v1176 = vpack.c.b16 %v1172, %v1172
  %v1177 = vpack.c.b16 %v1173, %v1173
  %v1178 = vpack.c.b16 %v1174, %v1174
  %v1179 = vpack.c.b16 %v1175, %v1175
  %s1184 = scalar_lea.vmem %s4, 48
  %1185 = vst.msk [vmem:[%s1184] sm:$0xf] %vm1085, %v1176
  %1186 = vst.msk [vmem:[%s1184 + $0x4] sm:$0xf] %vm1085, %v1177
  %1187 = vst.msk [vmem:[%s1184 + $0x8] sm:$0xf] %vm1085, %v1178
  %1188 = vst.msk [vmem:[%s1184 + $0xc] sm:$0xf] %vm1085, %v1179
  // Predicated region
  $region18: #{generator_forward.12} parent=0 // pred_check
    _
  $region19: #{generator_forward.12} parent=0 // pred_check_branch
    %1190 = sbr.rel (0) target = $region21
  $region20: #{generator_forward.12} parent=0 // pred_region
    _
  $region21: #{generator_forward.12} parent=0 // pred_fallthru
    _
  // Predicated region
  $region22: #{generator_forward.12} parent=0 // pred_check
    _
  $region23: #{generator_forward.12} parent=0 // pred_check_branch
    %1192 = sbr.rel (0) target = $region25
  $region24: #{generator_forward.12} parent=0 // pred_region
    _
  $region25: #{generator_forward.12} parent=0 // pred_fallthru
    _

// kernel: generator_forward.13
$region0: #{generator_forward.13}
  #allocation0 [shape = 'u32[]', space=smem, size = 0x4, offset = 0x4, fixed_abs, tag = 'smem constant byte address 0x4 - core index']
  #allocation1 [shape = 'u32[144,128]{1,0:T(1,128)}', space=vmem, size = 0x12000, scoped, tag = 'internal scratch']
  %s0 = inlined_call_operand.vmem [shape: bf16[4,128,32], index: 0, kind: input, shape index: {}]
  %s1 = inlined_call_operand.vmem [shape: bf16[4,16,128], index: 1, kind: input, shape index: {}]
  %s2 = inlined_call_operand.vmem [shape: f32[16,1], index: 2, kind: input, shape index: {}]
  %s3 = inlined_call_operand.vmem [shape: f32[16,1], index: 3, kind: input, shape index: {}]
  %s4 = inlined_call_operand.vmem [shape: bf16[4,16,32], index: 4, kind: output, shape index: {}]
  %s5 = sld [smem:[#allocation0]]
  $region26: #{generator_forward.13} parent=0
    _
  %s7 = ssub.s32 1, %s5
  %s8 = scalar_select 0, %s7, %s5
  // Predicated region
  $region2: #{generator_forward.13} parent=0 // pred_check
    _
  $region3: #{generator_forward.13} parent=0 // pred_check_branch
    %10 = sbr.rel (0) target = $region5
  $region4: #{generator_forward.13} parent=0 // pred_region
    _
  $region5: #{generator_forward.13} parent=0 // pred_fallthru
    _
  // Predicated region
  $region6: #{generator_forward.13} parent=0 // pred_check
    _
  $region7: #{generator_forward.13} parent=0 // pred_check_branch
    %12 = sbr.rel (0) target = $region9
  $region8: #{generator_forward.13} parent=0 // pred_region
    _
  $region9: #{generator_forward.13} parent=0 // pred_fallthru
    _
  // Predicated region
  $region10: #{generator_forward.13} parent=0 // pred_check
    _
  $region11: #{generator_forward.13} parent=0 // pred_check_branch
    %14 = sbr.rel (0) target = $region13
  $region12: #{generator_forward.13} parent=0 // pred_region
    _
  $region13: #{generator_forward.13} parent=0 // pred_fallthru
    _
  // Predicated region
  $region14: #{generator_forward.13} parent=0 // pred_check
    _
  $region15: #{generator_forward.13} parent=0 // pred_check_branch
    %16 = sbr.rel (0) target = $region17
  $region16: #{generator_forward.13} parent=0 // pred_region
    _
  $region17: #{generator_forward.13} parent=0 // pred_fallthru
    _
  %v18 = vld [vmem:[%s1] sm:$0xf]
  %v19 = vld [vmem:[%s1 + $0x4] sm:$0xf]
  %v20 = vld [vmem:[%s0] sm:$0xf]
  %v21 = vld [vmem:[%s0 + $0x4] sm:$0xf]
  %v22 = vld [vmem:[%s0 + $0x8] sm:$0xf]
  %v23 = vld [vmem:[%s0 + $0xc] sm:$0xf]
  %v24 = vld [vmem:[%s0 + $0x10] sm:$0xf]
  %v25 = vld [vmem:[%s0 + $0x14] sm:$0xf]
  %v26 = vld [vmem:[%s0 + $0x18] sm:$0xf]
  %v27 = vld [vmem:[%s0 + $0x1c] sm:$0xf]
  %v28 = vld [vmem:[%s0 + $0x20] sm:$0xf]
  %v29 = vld [vmem:[%s0 + $0x24] sm:$0xf]
  %v30 = vld [vmem:[%s0 + $0x28] sm:$0xf]
  %v31 = vld [vmem:[%s0 + $0x2c] sm:$0xf]
  %v32 = vld [vmem:[%s0 + $0x30] sm:$0xf]
  %v33 = vld [vmem:[%s0 + $0x34] sm:$0xf]
  %v34 = vld [vmem:[%s0 + $0x38] sm:$0xf]
  %v35 = vld [vmem:[%s0 + $0x3c] sm:$0xf]
  %v38 = vunpack.c.l.b16 %v18
  %v39 = vunpack.c.l.b16 %v19
  %v40 = vpack.c.b16 %v39, %v38
  %v58 = vunpack.c.l.b16 %v20
  %v59 = vunpack.c.l.b16 %v21
  %v60 = vunpack.c.l.b16 %v22
  %v61 = vunpack.c.l.b16 %v23
  %v62 = vunpack.c.l.b16 %v24
  %v63 = vunpack.c.l.b16 %v25
  %v64 = vunpack.c.l.b16 %v26
  %v65 = vunpack.c.l.b16 %v27
  %v66 = vunpack.c.l.b16 %v28
  %v67 = vunpack.c.l.b16 %v29
  %v68 = vunpack.c.l.b16 %v30
  %v69 = vunpack.c.l.b16 %v31
  %v70 = vunpack.c.l.b16 %v32
  %v71 = vunpack.c.l.b16 %v33
  %v72 = vunpack.c.l.b16 %v34
  %v73 = vunpack.c.l.b16 %v35
  %v74 = vpack.c.b16 %v59, %v58
  %v75 = vpack.c.b16 %v61, %v60
  %v76 = vpack.c.b16 %v63, %v62
  %v77 = vpack.c.b16 %v65, %v64
  %v78 = vpack.c.b16 %v67, %v66
  %v79 = vpack.c.b16 %v69, %v68
  %v80 = vpack.c.b16 %v71, %v70
  %v81 = vpack.c.b16 %v73, %v72
  %90 = vmatprep.subr.bf16.mxu0 0
  %91 = vmatpush1.bf16.msra.mxu0 %v81
  %92 = vmatprep.subr.bf16.mxu0 0
  %93 = vmatpush1.bf16.msra.mxu0 %v80
  %94 = vmatprep.subr.bf16.mxu0 0
  %95 = vmatpush1.bf16.msra.mxu0 %v79
  %96 = vmatprep.subr.bf16.mxu0 0
  %97 = vmatpush1.bf16.msra.mxu0 %v78
  %98 = vmatprep.subr.bf16.mxu0 0
  %99 = vmatpush1.bf16.msra.mxu0 %v77
  %100 = vmatprep.subr.bf16.mxu0 0
  %101 = vmatpush1.bf16.msra.mxu0 %v76
  %102 = vmatprep.subr.bf16.mxu0 0
  %103 = vmatpush1.bf16.msra.mxu0 %v75
  %104 = vmatprep.subr.bf16.mxu0 0
  %105 = vmatpush1.bf16.msra.mxu0 %v74
  %106 = vmatprep.subr.bf16.mxu0 0
  %107 = vmatpush2.bf16.msra.mxu0 0
  %108 = vmatprep.subr.bf16.mxu0 0
  %109 = vmatpush2.bf16.msra.mxu0 0
  %110 = vmatprep.subr.bf16.mxu0 0
  %111 = vmatpush2.bf16.msra.mxu0 0
  %112 = vmatprep.subr.bf16.mxu0 0
  %113 = vmatpush2.bf16.msra.mxu0 0
  %114 = vmatprep.subr.bf16.mxu0 0
  %115 = vmatpush2.bf16.msra.mxu0 0
  %116 = vmatprep.subr.bf16.mxu0 0
  %117 = vmatpush2.bf16.msra.mxu0 0
  %118 = vmatprep.subr.bf16.mxu0 0
  %119 = vmatpush2.bf16.msra.mxu0 0
  %120 = vmatprep.subr.bf16.mxu0 0
  %121 = vmatpush2.bf16.msra.mxu0 0
  %122 = vmatprep.mubr.bf16.mxu0 0
  %123 = vmatmul.mubr.bf16.gmra.mxu0 %v40
  %v124 = vpop.f32.mrf.mxu0
  %v125 = vadd.f32 0.0, %v124
  %v126 = vpop.f32.mrf.mxu0
  %v127 = vpop.f32.mrf.mxu0
  %v128 = vadd.f32 0.0, %v127
  %v129 = vpop.f32.mrf.mxu0
  %130 = vdwg.mxu0
  %s131 = scalar_lea.vmem %s1, 8
  %v132 = vld [vmem:[%s131] sm:$0xf]
  %v133 = vld [vmem:[%s131 + $0x4] sm:$0xf]
  %s134 = scalar_lea.vmem %s0, 64
  %v135 = vld [vmem:[%s134] sm:$0xf]
  %v136 = vld [vmem:[%s134 + $0x4] sm:$0xf]
  %v137 = vld [vmem:[%s134 + $0x8] sm:$0xf]
  %v138 = vld [vmem:[%s134 + $0xc] sm:$0xf]
  %v139 = vld [vmem:[%s134 + $0x10] sm:$0xf]
  %v140 = vld [vmem:[%s134 + $0x14] sm:$0xf]
  %v141 = vld [vmem:[%s134 + $0x18] sm:$0xf]
  %v142 = vld [vmem:[%s134 + $0x1c] sm:$0xf]
  %v143 = vld [vmem:[%s134 + $0x20] sm:$0xf]
  %v144 = vld [vmem:[%s134 + $0x24] sm:$0xf]
  %v145 = vld [vmem:[%s134 + $0x28] sm:$0xf]
  %v146 = vld [vmem:[%s134 + $0x2c] sm:$0xf]
  %v147 = vld [vmem:[%s134 + $0x30] sm:$0xf]
  %v148 = vld [vmem:[%s134 + $0x34] sm:$0xf]
  %v149 = vld [vmem:[%s134 + $0x38] sm:$0xf]
  %v150 = vld [vmem:[%s134 + $0x3c] sm:$0xf]
  %v153 = vunpack.c.l.b16 %v132
  %v154 = vunpack.c.l.b16 %v133
  %v155 = vpack.c.b16 %v154, %v153
  %v173 = vunpack.c.l.b16 %v135
  %v174 = vunpack.c.l.b16 %v136
  %v175 = vunpack.c.l.b16 %v137
  %v176 = vunpack.c.l.b16 %v138
  %v177 = vunpack.c.l.b16 %v139
  %v178 = vunpack.c.l.b16 %v140
  %v179 = vunpack.c.l.b16 %v141
  %v180 = vunpack.c.l.b16 %v142
  %v181 = vunpack.c.l.b16 %v143
  %v182 = vunpack.c.l.b16 %v144
  %v183 = vunpack.c.l.b16 %v145
  %v184 = vunpack.c.l.b16 %v146
  %v185 = vunpack.c.l.b16 %v147
  %v186 = vunpack.c.l.b16 %v148
  %v187 = vunpack.c.l.b16 %v149
  %v188 = vunpack.c.l.b16 %v150
  %v189 = vpack.c.b16 %v174, %v173
  %v190 = vpack.c.b16 %v176, %v175
  %v191 = vpack.c.b16 %v178, %v177
  %v192 = vpack.c.b16 %v180, %v179
  %v193 = vpack.c.b16 %v182, %v181
  %v194 = vpack.c.b16 %v184, %v183
  %v195 = vpack.c.b16 %v186, %v185
  %v196 = vpack.c.b16 %v188, %v187
  %205 = vmatprep.subr.bf16.mxu0 0
  %206 = vmatpush1.bf16.msra.mxu0 %v196
  %207 = vmatprep.subr.bf16.mxu0 0
  %208 = vmatpush1.bf16.msra.mxu0 %v195
  %209 = vmatprep.subr.bf16.mxu0 0
  %210 = vmatpush1.bf16.msra.mxu0 %v194
  %211 = vmatprep.subr.bf16.mxu0 0
  %212 = vmatpush1.bf16.msra.mxu0 %v193
  %213 = vmatprep.subr.bf16.mxu0 0
  %214 = vmatpush1.bf16.msra.mxu0 %v192
  %215 = vmatprep.subr.bf16.mxu0 0
  %216 = vmatpush1.bf16.msra.mxu0 %v191
  %217 = vmatprep.subr.bf16.mxu0 0
  %218 = vmatpush1.bf16.msra.mxu0 %v190
  %219 = vmatprep.subr.bf16.mxu0 0
  %220 = vmatpush1.bf16.msra.mxu0 %v189
  %221 = vmatprep.subr.bf16.mxu0 0
  %222 = vmatpush2.bf16.msra.mxu0 0
  %223 = vmatprep.subr.bf16.mxu0 0
  %224 = vmatpush2.bf16.msra.mxu0 0
  %225 = vmatprep.subr.bf16.mxu0 0
  %226 = vmatpush2.bf16.msra.mxu0 0
  %227 = vmatprep.subr.bf16.mxu0 0
  %228 = vmatpush2.bf16.msra.mxu0 0
  %229 = vmatprep.subr.bf16.mxu0 0
  %230 = vmatpush2.bf16.msra.mxu0 0
  %231 = vmatprep.subr.bf16.mxu0 0
  %232 = vmatpush2.bf16.msra.mxu0 0
  %233 = vmatprep.subr.bf16.mxu0 0
  %234 = vmatpush2.bf16.msra.mxu0 0
  %235 = vmatprep.subr.bf16.mxu0 0
  %236 = vmatpush2.bf16.msra.mxu0 0
  %237 = vmatprep.mubr.bf16.mxu0 0
  %238 = vmatmul.mubr.bf16.gmra.mxu0 %v155
  %v239 = vpop.f32.mrf.mxu0
  %v240 = vadd.f32 0.0, %v239
  %v241 = vpop.f32.mrf.mxu0
  %v242 = vpop.f32.mrf.mxu0
  %v243 = vadd.f32 0.0, %v242
  %v244 = vpop.f32.mrf.mxu0
  %245 = vdwg.mxu0
  %s246 = scalar_lea.vmem %s1, 16
  %v247 = vld [vmem:[%s246] sm:$0xf]
  %v248 = vld [vmem:[%s246 + $0x4] sm:$0xf]
  %s249 = scalar_lea.vmem %s0, 128
  %v250 = vld [vmem:[%s249] sm:$0xf]
  %v251 = vld [vmem:[%s249 + $0x4] sm:$0xf]
  %v252 = vld [vmem:[%s249 + $0x8] sm:$0xf]
  %v253 = vld [vmem:[%s249 + $0xc] sm:$0xf]
  %v254 = vld [vmem:[%s249 + $0x10] sm:$0xf]
  %v255 = vld [vmem:[%s249 + $0x14] sm:$0xf]
  %v256 = vld [vmem:[%s249 + $0x18] sm:$0xf]
  %v257 = vld [vmem:[%s249 + $0x1c] sm:$0xf]
  %v258 = vld [vmem:[%s249 + $0x20] sm:$0xf]
  %v259 = vld [vmem:[%s249 + $0x24] sm:$0xf]
  %v260 = vld [vmem:[%s249 + $0x28] sm:$0xf]
  %v261 = vld [vmem:[%s249 + $0x2c] sm:$0xf]
  %v262 = vld [vmem:[%s249 + $0x30] sm:$0xf]
  %v263 = vld [vmem:[%s249 + $0x34] sm:$0xf]
  %v264 = vld [vmem:[%s249 + $0x38] sm:$0xf]
  %v265 = vld [vmem:[%s249 + $0x3c] sm:$0xf]
  %v268 = vunpack.c.l.b16 %v247
  %v269 = vunpack.c.l.b16 %v248
  %v270 = vpack.c.b16 %v269, %v268
  %v288 = vunpack.c.l.b16 %v250
  %v289 = vunpack.c.l.b16 %v251
  %v290 = vunpack.c.l.b16 %v252
  %v291 = vunpack.c.l.b16 %v253
  %v292 = vunpack.c.l.b16 %v254
  %v293 = vunpack.c.l.b16 %v255
  %v294 = vunpack.c.l.b16 %v256
  %v295 = vunpack.c.l.b16 %v257
  %v296 = vunpack.c.l.b16 %v258
  %v297 = vunpack.c.l.b16 %v259
  %v298 = vunpack.c.l.b16 %v260
  %v299 = vunpack.c.l.b16 %v261
  %v300 = vunpack.c.l.b16 %v262
  %v301 = vunpack.c.l.b16 %v263
  %v302 = vunpack.c.l.b16 %v264
  %v303 = vunpack.c.l.b16 %v265
  %v304 = vpack.c.b16 %v289, %v288
  %v305 = vpack.c.b16 %v291, %v290
  %v306 = vpack.c.b16 %v293, %v292
  %v307 = vpack.c.b16 %v295, %v294
  %v308 = vpack.c.b16 %v297, %v296
  %v309 = vpack.c.b16 %v299, %v298
  %v310 = vpack.c.b16 %v301, %v300
  %v311 = vpack.c.b16 %v303, %v302
  %320 = vmatprep.subr.bf16.mxu0 0
  %321 = vmatpush1.bf16.msra.mxu0 %v311
  %322 = vmatprep.subr.bf16.mxu0 0
  %323 = vmatpush1.bf16.msra.mxu0 %v310
  %324 = vmatprep.subr.bf16.mxu0 0
  %325 = vmatpush1.bf16.msra.mxu0 %v309
  %326 = vmatprep.subr.bf16.mxu0 0
  %327 = vmatpush1.bf16.msra.mxu0 %v308
  %328 = vmatprep.subr.bf16.mxu0 0
  %329 = vmatpush1.bf16.msra.mxu0 %v307
  %330 = vmatprep.subr.bf16.mxu0 0
  %331 = vmatpush1.bf16.msra.mxu0 %v306
  %332 = vmatprep.subr.bf16.mxu0 0
  %333 = vmatpush1.bf16.msra.mxu0 %v305
  %334 = vmatprep.subr.bf16.mxu0 0
  %335 = vmatpush1.bf16.msra.mxu0 %v304
  %336 = vmatprep.subr.bf16.mxu0 0
  %337 = vmatpush2.bf16.msra.mxu0 0
  %338 = vmatprep.subr.bf16.mxu0 0
  %339 = vmatpush2.bf16.msra.mxu0 0
  %340 = vmatprep.subr.bf16.mxu0 0
  %341 = vmatpush2.bf16.msra.mxu0 0
  %342 = vmatprep.subr.bf16.mxu0 0
  %343 = vmatpush2.bf16.msra.mxu0 0
  %344 = vmatprep.subr.bf16.mxu0 0
  %345 = vmatpush2.bf16.msra.mxu0 0
  %346 = vmatprep.subr.bf16.mxu0 0
  %347 = vmatpush2.bf16.msra.mxu0 0
  %348 = vmatprep.subr.bf16.mxu0 0
  %349 = vmatpush2.bf16.msra.mxu0 0
  %350 = vmatprep.subr.bf16.mxu0 0
  %351 = vmatpush2.bf16.msra.mxu0 0
  %352 = vmatprep.mubr.bf16.mxu0 0
  %353 = vmatmul.mubr.bf16.gmra.mxu0 %v270
  %v354 = vpop.f32.mrf.mxu0
  %v355 = vadd.f32 0.0, %v354
  %v356 = vpop.f32.mrf.mxu0
  %v357 = vpop.f32.mrf.mxu0
  %v358 = vadd.f32 0.0, %v357
  %v359 = vpop.f32.mrf.mxu0
  %360 = vdwg.mxu0
  %s361 = scalar_lea.vmem %s1, 24
  %v362 = vld [vmem:[%s361] sm:$0xf]
  %v363 = vld [vmem:[%s361 + $0x4] sm:$0xf]
  %s364 = scalar_lea.vmem %s0, 192
  %v365 = vld [vmem:[%s364] sm:$0xf]
  %v366 = vld [vmem:[%s364 + $0x4] sm:$0xf]
  %v367 = vld [vmem:[%s364 + $0x8] sm:$0xf]
  %v368 = vld [vmem:[%s364 + $0xc] sm:$0xf]
  %v369 = vld [vmem:[%s364 + $0x10] sm:$0xf]
  %v370 = vld [vmem:[%s364 + $0x14] sm:$0xf]
  %v371 = vld [vmem:[%s364 + $0x18] sm:$0xf]
  %v372 = vld [vmem:[%s364 + $0x1c] sm:$0xf]
  %v373 = vld [vmem:[%s364 + $0x20] sm:$0xf]
  %v374 = vld [vmem:[%s364 + $0x24] sm:$0xf]
  %v375 = vld [vmem:[%s364 + $0x28] sm:$0xf]
  %v376 = vld [vmem:[%s364 + $0x2c] sm:$0xf]
  %v377 = vld [vmem:[%s364 + $0x30] sm:$0xf]
  %v378 = vld [vmem:[%s364 + $0x34] sm:$0xf]
  %v379 = vld [vmem:[%s364 + $0x38] sm:$0xf]
  %v380 = vld [vmem:[%s364 + $0x3c] sm:$0xf]
  %v383 = vunpack.c.l.b16 %v362
  %v384 = vunpack.c.l.b16 %v363
  %v385 = vpack.c.b16 %v384, %v383
  %v403 = vunpack.c.l.b16 %v365
  %v404 = vunpack.c.l.b16 %v366
  %v405 = vunpack.c.l.b16 %v367
  %v406 = vunpack.c.l.b16 %v368
  %v407 = vunpack.c.l.b16 %v369
  %v408 = vunpack.c.l.b16 %v370
  %v409 = vunpack.c.l.b16 %v371
  %v410 = vunpack.c.l.b16 %v372
  %v411 = vunpack.c.l.b16 %v373
  %v412 = vunpack.c.l.b16 %v374
  %v413 = vunpack.c.l.b16 %v375
  %v414 = vunpack.c.l.b16 %v376
  %v415 = vunpack.c.l.b16 %v377
  %v416 = vunpack.c.l.b16 %v378
  %v417 = vunpack.c.l.b16 %v379
  %v418 = vunpack.c.l.b16 %v380
  %v419 = vpack.c.b16 %v404, %v403
  %v420 = vpack.c.b16 %v406, %v405
  %v421 = vpack.c.b16 %v408, %v407
  %v422 = vpack.c.b16 %v410, %v409
  %v423 = vpack.c.b16 %v412, %v411
  %v424 = vpack.c.b16 %v414, %v413
  %v425 = vpack.c.b16 %v416, %v415
  %v426 = vpack.c.b16 %v418, %v417
  %435 = vmatprep.subr.bf16.mxu0 0
  %436 = vmatpush1.bf16.msra.mxu0 %v426
  %437 = vmatprep.subr.bf16.mxu0 0
  %438 = vmatpush1.bf16.msra.mxu0 %v425
  %439 = vmatprep.subr.bf16.mxu0 0
  %440 = vmatpush1.bf16.msra.mxu0 %v424
  %441 = vmatprep.subr.bf16.mxu0 0
  %442 = vmatpush1.bf16.msra.mxu0 %v423
  %443 = vmatprep.subr.bf16.mxu0 0
  %444 = vmatpush1.bf16.msra.mxu0 %v422
  %445 = vmatprep.subr.bf16.mxu0 0
  %446 = vmatpush1.bf16.msra.mxu0 %v421
  %447 = vmatprep.subr.bf16.mxu0 0
  %448 = vmatpush1.bf16.msra.mxu0 %v420
  %449 = vmatprep.subr.bf16.mxu0 0
  %450 = vmatpush1.bf16.msra.mxu0 %v419
  %451 = vmatprep.subr.bf16.mxu0 0
  %452 = vmatpush2.bf16.msra.mxu0 0
  %453 = vmatprep.subr.bf16.mxu0 0
  %454 = vmatpush2.bf16.msra.mxu0 0
  %455 = vmatprep.subr.bf16.mxu0 0
  %456 = vmatpush2.bf16.msra.mxu0 0
  %457 = vmatprep.subr.bf16.mxu0 0
  %458 = vmatpush2.bf16.msra.mxu0 0
  %459 = vmatprep.subr.bf16.mxu0 0
  %460 = vmatpush2.bf16.msra.mxu0 0
  %461 = vmatprep.subr.bf16.mxu0 0
  %462 = vmatpush2.bf16.msra.mxu0 0
  %463 = vmatprep.subr.bf16.mxu0 0
  %464 = vmatpush2.bf16.msra.mxu0 0
  %465 = vmatprep.subr.bf16.mxu0 0
  %466 = vmatpush2.bf16.msra.mxu0 0
  %467 = vmatprep.mubr.bf16.mxu0 0
  %468 = vmatmul.mubr.bf16.gmra.mxu0 %v385
  %v469 = vpop.f32.mrf.mxu0
  %v470 = vadd.f32 0.0, %v469
  %v471 = vpop.f32.mrf.mxu0
  %v472 = vpop.f32.mrf.mxu0
  %v473 = vadd.f32 0.0, %v472
  %v474 = vpop.f32.mrf.mxu0
  %475 = vdwg.mxu0
  %vm476 = vcmask 261120
  %v477 = vsel %vm476, %v125, 0.0
  %478 = vadd.xlane.f32.xlu0 %v477
  %v479 = vpop.xlane.xlu0 %478
  %v480 = vsel %vm476, %v128, 0.0
  %481 = vadd.xlane.f32.xlu0 %v480
  %v482 = vpop.xlane.xlu0 %481
  %v483 = vadd.f32 %v479, 0.0
  %v484 = vadd.f32 %v482, 0.0
  %v485 = vsel %vm476, %v240, 0.0
  %486 = vadd.xlane.f32.xlu0 %v485
  %v487 = vpop.xlane.xlu0 %486
  %v488 = vsel %vm476, %v243, 0.0
  %489 = vadd.xlane.f32.xlu0 %v488
  %v490 = vpop.xlane.xlu0 %489
  %v491 = vadd.f32 %v483, %v487
  %v492 = vadd.f32 %v484, %v490
  %v493 = vsel %vm476, %v355, 0.0
  %494 = vadd.xlane.f32.xlu0 %v493
  %v495 = vpop.xlane.xlu0 %494
  %v496 = vsel %vm476, %v358, 0.0
  %497 = vadd.xlane.f32.xlu0 %v496
  %v498 = vpop.xlane.xlu0 %497
  %v499 = vadd.f32 %v491, %v495
  %v500 = vadd.f32 %v492, %v498
  %v501 = vsel %vm476, %v470, 0.0
  %502 = vadd.xlane.f32.xlu0 %v501
  %v503 = vpop.xlane.xlu0 %502
  %v504 = vsel %vm476, %v473, 0.0
  %505 = vadd.xlane.f32.xlu0 %v504
  %v506 = vpop.xlane.xlu0 %505
  %v507 = vadd.f32 %v499, %v503
  %v508 = vadd.f32 %v500, %v506
  %v509 = vmul.f32 %v125, %v125
  %v510 = vmul.f32 %v128, %v128
  %v511 = vsel %vm476, %v509, 0.0
  %512 = vadd.xlane.f32.xlu0 %v511
  %v513 = vpop.xlane.xlu0 %512
  %v514 = vsel %vm476, %v510, 0.0
  %515 = vadd.xlane.f32.xlu0 %v514
  %v516 = vpop.xlane.xlu0 %515
  %v517 = vadd.f32 %v513, 0.0
  %v518 = vadd.f32 %v516, 0.0
  %v519 = vmul.f32 %v240, %v240
  %v520 = vmul.f32 %v243, %v243
  %v521 = vsel %vm476, %v519, 0.0
  %522 = vadd.xlane.f32.xlu0 %v521
  %v523 = vpop.xlane.xlu0 %522
  %v524 = vsel %vm476, %v520, 0.0
  %525 = vadd.xlane.f32.xlu0 %v524
  %v526 = vpop.xlane.xlu0 %525
  %v527 = vadd.f32 %v517, %v523
  %v528 = vadd.f32 %v518, %v526
  %v529 = vmul.f32 %v355, %v355
  %v530 = vmul.f32 %v358, %v358
  %v531 = vsel %vm476, %v529, 0.0
  %532 = vadd.xlane.f32.xlu0 %v531
  %v533 = vpop.xlane.xlu0 %532
  %v534 = vsel %vm476, %v530, 0.0
  %535 = vadd.xlane.f32.xlu0 %v534
  %v536 = vpop.xlane.xlu0 %535
  %v537 = vadd.f32 %v527, %v533
  %v538 = vadd.f32 %v528, %v536
  %v539 = vmul.f32 %v470, %v470
  %v540 = vmul.f32 %v473, %v473
  %v541 = vsel %vm476, %v539, 0.0
  %542 = vadd.xlane.f32.xlu0 %v541
  %v543 = vpop.xlane.xlu0 %542
  %v544 = vsel %vm476, %v540, 0.0
  %545 = vadd.xlane.f32.xlu0 %v544
  %v546 = vpop.xlane.xlu0 %545
  %v547 = vadd.f32 %v537, %v543
  %v548 = vadd.f32 %v538, %v546
  %v549 = vmul.f32 %v507, 0.0078125
  %v550 = vmul.f32 %v508, 0.0078125
  %v551 = vmul.f32 %v547, 0.0078125
  %v552 = vmul.f32 %v548, 0.0078125
  %v553 = vmul.f32 %v549, %v549
  %v554 = vmul.f32 %v550, %v550
  %v555 = vsub.f32 %v551, %v553
  %v556 = vsub.f32 %v552, %v554
  %v557 = vld [vmem:[%s2] sm:$0xff]
  %v558 = vld [vmem:[%s2 + $0x8] sm:$0xff]
  %v559 = vadd.f32 %v555, 1e-05
  %v560 = vadd.f32 %v556, 1e-05
  %v561 = vrsqrt.pop %v559
  %v562 = vrsqrt.pop %v560
  %v563 = vmul.f32 %v557, %v561
  %v564 = vmul.f32 %v558, %v562
  %v565 = vld [vmem:[%s3] sm:$0xff]
  %v566 = vld [vmem:[%s3 + $0x8] sm:$0xff]
  %v567 = vmul.f32 %v549, %v563
  %v568 = vmul.f32 %v550, %v564
  %v569 = vsub.f32 %v565, %v567
  %v570 = vsub.f32 %v566, %v568
  %572 = vset.pattern.permute.xlu0 0
  %573 = vperm.xlu0 %572, %v563
  %v574 = vpop.permute.xlu0 %573
  %577 = vset.pattern.permute.xlu0 0
  %578 = vperm.xlu0 %577, %v564
  %v579 = vpop.permute.xlu0 %578
  %v581 = vmul.f32 %v125, %v574
  %v582 = vmul.f32 %v128, %v579
  %584 = vset.pattern.permute.xlu0 0
  %585 = vperm.xlu0 %584, %v569
  %v586 = vpop.permute.xlu0 %585
  %589 = vset.pattern.permute.xlu0 0
  %590 = vperm.xlu0 %589, %v570
  %v591 = vpop.permute.xlu0 %590
  %v593 = vadd.f32 %v581, %v586
  %v594 = vadd.f32 %v582, %v591
  %v595 = vmax.f32 %v593, 0.0
  %v596 = vmax.f32 %v594, 0.0
  %v597 = vpack.c.bf16 %v596, %v595
  %v599 = vunpack.c.l.b16 %v597
  %v600 = vunpack.c.h.b16 %v597
  %v601 = vpack.c.b16 %v599, %v599
  %v602 = vpack.c.b16 %v600, %v600
  %vm605 = vcmask 257024
  %606 = vst.msk [vmem:[%s4] sm:$0xf] %vm605, %v601
  %607 = vst.msk [vmem:[%s4 + $0x4] sm:$0xf] %vm605, %v602
  %v608 = vmul.f32 %v240, %v574
  %v609 = vmul.f32 %v243, %v579
  %v610 = vadd.f32 %v608, %v586
  %v611 = vadd.f32 %v609, %v591
  %v612 = vmax.f32 %v610, 0.0
  %v613 = vmax.f32 %v611, 0.0
  %v614 = vpack.c.bf16 %v613, %v612
  %v616 = vunpack.c.l.b16 %v614
  %v617 = vunpack.c.h.b16 %v614
  %v618 = vpack.c.b16 %v616, %v616
  %v619 = vpack.c.b16 %v617, %v617
  %s622 = scalar_lea.vmem %s4, 8
  %623 = vst.msk [vmem:[%s622] sm:$0xf] %vm605, %v618
  %624 = vst.msk [vmem:[%s622 + $0x4] sm:$0xf] %vm605, %v619
  %v625 = vmul.f32 %v355, %v574
  %v626 = vmul.f32 %v358, %v579
  %v627 = vadd.f32 %v625, %v586
  %v628 = vadd.f32 %v626, %v591
  %v629 = vmax.f32 %v627, 0.0
  %v630 = vmax.f32 %v628, 0.0
  %v631 = vpack.c.bf16 %v630, %v629
  %v633 = vunpack.c.l.b16 %v631
  %v634 = vunpack.c.h.b16 %v631
  %v635 = vpack.c.b16 %v633, %v633
  %v636 = vpack.c.b16 %v634, %v634
  %s639 = scalar_lea.vmem %s4, 16
  %640 = vst.msk [vmem:[%s639] sm:$0xf] %vm605, %v635
  %641 = vst.msk [vmem:[%s639 + $0x4] sm:$0xf] %vm605, %v636
  %v642 = vmul.f32 %v470, %v574
  %v643 = vmul.f32 %v473, %v579
  %v644 = vadd.f32 %v642, %v586
  %v645 = vadd.f32 %v643, %v591
  %v646 = vmax.f32 %v644, 0.0
  %v647 = vmax.f32 %v645, 0.0
  %v648 = vpack.c.bf16 %v647, %v646
  %v650 = vunpack.c.l.b16 %v648
  %v651 = vunpack.c.h.b16 %v648
  %v652 = vpack.c.b16 %v650, %v650
  %v653 = vpack.c.b16 %v651, %v651
  %s656 = scalar_lea.vmem %s4, 24
  %657 = vst.msk [vmem:[%s656] sm:$0xf] %vm605, %v652
  %658 = vst.msk [vmem:[%s656 + $0x4] sm:$0xf] %vm605, %v653
  // Predicated region
  $region18: #{generator_forward.13} parent=0 // pred_check
    _
  $region19: #{generator_forward.13} parent=0 // pred_check_branch
    %660 = sbr.rel (0) target = $region21
  $region20: #{generator_forward.13} parent=0 // pred_region
    _
  $region21: #{generator_forward.13} parent=0 // pred_fallthru
    _
  // Predicated region
  $region22: #{generator_forward.13} parent=0 // pred_check
    _
  $region23: #{generator_forward.13} parent=0 // pred_check_branch
    %662 = sbr.rel (0) target = $region25
  $region24: #{generator_forward.13} parent=0 // pred_region
    _
  $region25: #{generator_forward.13} parent=0 // pred_fallthru
    _

// kernel: generator_forward.14
$region0: #{generator_forward.14}
  #allocation0 [shape = 'u32[]', space=smem, size = 0x4, offset = 0x4, fixed_abs, tag = 'smem constant byte address 0x4 - core index']
  #allocation1 [shape = 'u32[144,128]{1,0:T(1,128)}', space=vmem, size = 0x12000, scoped, tag = 'internal scratch']
  %s0 = inlined_call_operand.vmem [shape: bf16[4,64,128], index: 0, kind: input, shape index: {}]
  %s1 = inlined_call_operand.vmem [shape: bf16[4,8,64], index: 1, kind: input, shape index: {}]
  %s2 = inlined_call_operand.vmem [shape: f32[8,1], index: 2, kind: input, shape index: {}]
  %s3 = inlined_call_operand.vmem [shape: f32[8,1], index: 3, kind: input, shape index: {}]
  %s4 = inlined_call_operand.vmem [shape: bf16[4,8,128], index: 4, kind: output, shape index: {}]
  %s5 = sld [smem:[#allocation0]]
  $region26: #{generator_forward.14} parent=0
    _
  %s7 = ssub.s32 1, %s5
  %s8 = scalar_select 0, %s7, %s5
  // Predicated region
  $region2: #{generator_forward.14} parent=0 // pred_check
    _
  $region3: #{generator_forward.14} parent=0 // pred_check_branch
    %10 = sbr.rel (0) target = $region5
  $region4: #{generator_forward.14} parent=0 // pred_region
    _
  $region5: #{generator_forward.14} parent=0 // pred_fallthru
    _
  // Predicated region
  $region6: #{generator_forward.14} parent=0 // pred_check
    _
  $region7: #{generator_forward.14} parent=0 // pred_check_branch
    %12 = sbr.rel (0) target = $region9
  $region8: #{generator_forward.14} parent=0 // pred_region
    _
  $region9: #{generator_forward.14} parent=0 // pred_fallthru
    _
  // Predicated region
  $region10: #{generator_forward.14} parent=0 // pred_check
    _
  $region11: #{generator_forward.14} parent=0 // pred_check_branch
    %14 = sbr.rel (0) target = $region13
  $region12: #{generator_forward.14} parent=0 // pred_region
    _
  $region13: #{generator_forward.14} parent=0 // pred_fallthru
    _
  // Predicated region
  $region14: #{generator_forward.14} parent=0 // pred_check
    _
  $region15: #{generator_forward.14} parent=0 // pred_check_branch
    %16 = sbr.rel (0) target = $region17
  $region16: #{generator_forward.14} parent=0 // pred_region
    _
  $region17: #{generator_forward.14} parent=0 // pred_fallthru
    _
  %v18 = vld [vmem:[%s1] sm:$0xf]
  %v19 = vld [vmem:[%s0] sm:$0xf]
  %v20 = vld [vmem:[%s0 + $0x4] sm:$0xf]
  %v21 = vld [vmem:[%s0 + $0x8] sm:$0xf]
  %v22 = vld [vmem:[%s0 + $0xc] sm:$0xf]
  %v23 = vld [vmem:[%s0 + $0x10] sm:$0xf]
  %v24 = vld [vmem:[%s0 + $0x14] sm:$0xf]
  %v25 = vld [vmem:[%s0 + $0x18] sm:$0xf]
  %v26 = vld [vmem:[%s0 + $0x1c] sm:$0xf]
  %v35 = vunpack.c.l.b16 %v19
  %v36 = vunpack.c.l.b16 %v20
  %v37 = vunpack.c.l.b16 %v21
  %v38 = vunpack.c.l.b16 %v22
  %v39 = vunpack.c.l.b16 %v23
  %v40 = vunpack.c.l.b16 %v24
  %v41 = vunpack.c.l.b16 %v25
  %v42 = vunpack.c.l.b16 %v26
  %v43 = vpack.c.b16 %v36, %v35
  %v44 = vpack.c.b16 %v38, %v37
  %v45 = vpack.c.b16 %v40, %v39
  %v46 = vpack.c.b16 %v42, %v41
  %vm51 = vcmask 523264
  %v53 = vsel %vm51, %v18, 0
  %55 = vmatprep.subr.bf16.mxu0 0
  %56 = vmatpush1.bf16.msra.mxu0 0
  %57 = vmatprep.subr.bf16.mxu0 0
  %58 = vmatpush1.bf16.msra.mxu0 0
  %59 = vmatprep.subr.bf16.mxu0 0
  %60 = vmatpush1.bf16.msra.mxu0 0
  %61 = vmatprep.subr.bf16.mxu0 0
  %62 = vmatpush1.bf16.msra.mxu0 0
  %63 = vmatprep.subr.bf16.mxu0 0
  %64 = vmatpush1.bf16.msra.mxu0 %v46
  %65 = vmatprep.subr.bf16.mxu0 0
  %66 = vmatpush1.bf16.msra.mxu0 %v45
  %67 = vmatprep.subr.bf16.mxu0 0
  %68 = vmatpush1.bf16.msra.mxu0 %v44
  %69 = vmatprep.subr.bf16.mxu0 0
  %70 = vmatpush1.bf16.msra.mxu0 %v43
  %71 = vmatprep.subr.bf16.mxu0 0
  %72 = vmatpush2.bf16.msra.mxu0 0
  %73 = vmatprep.subr.bf16.mxu0 0
  %74 = vmatpush2.bf16.msra.mxu0 0
  %75 = vmatprep.subr.bf16.mxu0 0
  %76 = vmatpush2.bf16.msra.mxu0 0
  %77 = vmatprep.subr.bf16.mxu0 0
  %78 = vmatpush2.bf16.msra.mxu0 0
  %79 = vmatprep.subr.bf16.mxu0 0
  %80 = vmatpush2.bf16.msra.mxu0 0
  %81 = vmatprep.subr.bf16.mxu0 0
  %82 = vmatpush2.bf16.msra.mxu0 0
  %83 = vmatprep.subr.bf16.mxu0 0
  %84 = vmatpush2.bf16.msra.mxu0 0
  %85 = vmatprep.subr.bf16.mxu0 0
  %86 = vmatpush2.bf16.msra.mxu0 0
  %87 = vmatprep.mubr.bf16.mxu0 0
  %88 = vmatmul.mubr.bf16.gmra.mxu0 %v53
  %v89 = vpop.f32.mrf.mxu0
  %v90 = vadd.f32 0.0, %v89
  %v91 = vpop.f32.mrf.mxu0
  %v92 = vpop.f32.mrf.mxu0
  %v93 = vpop.f32.mrf.mxu0
  %94 = vdwg.mxu0
  %s95 = scalar_lea.vmem %s1, 4
  %v96 = vld [vmem:[%s95] sm:$0xf]
  %s97 = scalar_lea.vmem %s0, 32
  %v98 = vld [vmem:[%s97] sm:$0xf]
  %v99 = vld [vmem:[%s97 + $0x4] sm:$0xf]
  %v100 = vld [vmem:[%s97 + $0x8] sm:$0xf]
  %v101 = vld [vmem:[%s97 + $0xc] sm:$0xf]
  %v102 = vld [vmem:[%s97 + $0x10] sm:$0xf]
  %v103 = vld [vmem:[%s97 + $0x14] sm:$0xf]
  %v104 = vld [vmem:[%s97 + $0x18] sm:$0xf]
  %v105 = vld [vmem:[%s97 + $0x1c] sm:$0xf]
  %v114 = vunpack.c.l.b16 %v98
  %v115 = vunpack.c.l.b16 %v99
  %v116 = vunpack.c.l.b16 %v100
  %v117 = vunpack.c.l.b16 %v101
  %v118 = vunpack.c.l.b16 %v102
  %v119 = vunpack.c.l.b16 %v103
  %v120 = vunpack.c.l.b16 %v104
  %v121 = vunpack.c.l.b16 %v105
  %v122 = vpack.c.b16 %v115, %v114
  %v123 = vpack.c.b16 %v117, %v116
  %v124 = vpack.c.b16 %v119, %v118
  %v125 = vpack.c.b16 %v121, %v120
  %v131 = vsel %vm51, %v96, 0
  %133 = vmatprep.subr.bf16.mxu0 0
  %134 = vmatpush1.bf16.msra.mxu0 0
  %135 = vmatprep.subr.bf16.mxu0 0
  %136 = vmatpush1.bf16.msra.mxu0 0
  %137 = vmatprep.subr.bf16.mxu0 0
  %138 = vmatpush1.bf16.msra.mxu0 0
  %139 = vmatprep.subr.bf16.mxu0 0
  %140 = vmatpush1.bf16.msra.mxu0 0
  %141 = vmatprep.subr.bf16.mxu0 0
  %142 = vmatpush1.bf16.msra.mxu0 %v125
  %143 = vmatprep.subr.bf16.mxu0 0
  %144 = vmatpush1.bf16.msra.mxu0 %v124
  %145 = vmatprep.subr.bf16.mxu0 0
  %146 = vmatpush1.bf16.msra.mxu0 %v123
  %147 = vmatprep.subr.bf16.mxu0 0
  %148 = vmatpush1.bf16.msra.mxu0 %v122
  %149 = vmatprep.subr.bf16.mxu0 0
  %150 = vmatpush2.bf16.msra.mxu0 0
  %151 = vmatprep.subr.bf16.mxu0 0
  %152 = vmatpush2.bf16.msra.mxu0 0
  %153 = vmatprep.subr.bf16.mxu0 0
  %154 = vmatpush2.bf16.msra.mxu0 0
  %155 = vmatprep.subr.bf16.mxu0 0
  %156 = vmatpush2.bf16.msra.mxu0 0
  %157 = vmatprep.subr.bf16.mxu0 0
  %158 = vmatpush2.bf16.msra.mxu0 0
  %159 = vmatprep.subr.bf16.mxu0 0
  %160 = vmatpush2.bf16.msra.mxu0 0
  %161 = vmatprep.subr.bf16.mxu0 0
  %162 = vmatpush2.bf16.msra.mxu0 0
  %163 = vmatprep.subr.bf16.mxu0 0
  %164 = vmatpush2.bf16.msra.mxu0 0
  %165 = vmatprep.mubr.bf16.mxu0 0
  %166 = vmatmul.mubr.bf16.gmra.mxu0 %v131
  %v167 = vpop.f32.mrf.mxu0
  %v168 = vadd.f32 0.0, %v167
  %v169 = vpop.f32.mrf.mxu0
  %v170 = vpop.f32.mrf.mxu0
  %v171 = vpop.f32.mrf.mxu0
  %172 = vdwg.mxu0
  %s173 = scalar_lea.vmem %s1, 8
  %v174 = vld [vmem:[%s173] sm:$0xf]
  %s175 = scalar_lea.vmem %s0, 64
  %v176 = vld [vmem:[%s175] sm:$0xf]
  %v177 = vld [vmem:[%s175 + $0x4] sm:$0xf]
  %v178 = vld [vmem:[%s175 + $0x8] sm:$0xf]
  %v179 = vld [vmem:[%s175 + $0xc] sm:$0xf]
  %v180 = vld [vmem:[%s175 + $0x10] sm:$0xf]
  %v181 = vld [vmem:[%s175 + $0x14] sm:$0xf]
  %v182 = vld [vmem:[%s175 + $0x18] sm:$0xf]
  %v183 = vld [vmem:[%s175 + $0x1c] sm:$0xf]
  %v192 = vunpack.c.l.b16 %v176
  %v193 = vunpack.c.l.b16 %v177
  %v194 = vunpack.c.l.b16 %v178
  %v195 = vunpack.c.l.b16 %v179
  %v196 = vunpack.c.l.b16 %v180
  %v197 = vunpack.c.l.b16 %v181
  %v198 = vunpack.c.l.b16 %v182
  %v199 = vunpack.c.l.b16 %v183
  %v200 = vpack.c.b16 %v193, %v192
  %v201 = vpack.c.b16 %v195, %v194
  %v202 = vpack.c.b16 %v197, %v196
  %v203 = vpack.c.b16 %v199, %v198
  %v209 = vsel %vm51, %v174, 0
  %211 = vmatprep.subr.bf16.mxu0 0
  %212 = vmatpush1.bf16.msra.mxu0 0
  %213 = vmatprep.subr.bf16.mxu0 0
  %214 = vmatpush1.bf16.msra.mxu0 0
  %215 = vmatprep.subr.bf16.mxu0 0
  %216 = vmatpush1.bf16.msra.mxu0 0
  %217 = vmatprep.subr.bf16.mxu0 0
  %218 = vmatpush1.bf16.msra.mxu0 0
  %219 = vmatprep.subr.bf16.mxu0 0
  %220 = vmatpush1.bf16.msra.mxu0 %v203
  %221 = vmatprep.subr.bf16.mxu0 0
  %222 = vmatpush1.bf16.msra.mxu0 %v202
  %223 = vmatprep.subr.bf16.mxu0 0
  %224 = vmatpush1.bf16.msra.mxu0 %v201
  %225 = vmatprep.subr.bf16.mxu0 0
  %226 = vmatpush1.bf16.msra.mxu0 %v200
  %227 = vmatprep.subr.bf16.mxu0 0
  %228 = vmatpush2.bf16.msra.mxu0 0
  %229 = vmatprep.subr.bf16.mxu0 0
  %230 = vmatpush2.bf16.msra.mxu0 0
  %231 = vmatprep.subr.bf16.mxu0 0
  %232 = vmatpush2.bf16.msra.mxu0 0
  %233 = vmatprep.subr.bf16.mxu0 0
  %234 = vmatpush2.bf16.msra.mxu0 0
  %235 = vmatprep.subr.bf16.mxu0 0
  %236 = vmatpush2.bf16.msra.mxu0 0
  %237 = vmatprep.subr.bf16.mxu0 0
  %238 = vmatpush2.bf16.msra.mxu0 0
  %239 = vmatprep.subr.bf16.mxu0 0
  %240 = vmatpush2.bf16.msra.mxu0 0
  %241 = vmatprep.subr.bf16.mxu0 0
  %242 = vmatpush2.bf16.msra.mxu0 0
  %243 = vmatprep.mubr.bf16.mxu0 0
  %244 = vmatmul.mubr.bf16.gmra.mxu0 %v209
  %v245 = vpop.f32.mrf.mxu0
  %v246 = vadd.f32 0.0, %v245
  %v247 = vpop.f32.mrf.mxu0
  %v248 = vpop.f32.mrf.mxu0
  %v249 = vpop.f32.mrf.mxu0
  %250 = vdwg.mxu0
  %s251 = scalar_lea.vmem %s1, 12
  %v252 = vld [vmem:[%s251] sm:$0xf]
  %s253 = scalar_lea.vmem %s0, 96
  %v254 = vld [vmem:[%s253] sm:$0xf]
  %v255 = vld [vmem:[%s253 + $0x4] sm:$0xf]
  %v256 = vld [vmem:[%s253 + $0x8] sm:$0xf]
  %v257 = vld [vmem:[%s253 + $0xc] sm:$0xf]
  %v258 = vld [vmem:[%s253 + $0x10] sm:$0xf]
  %v259 = vld [vmem:[%s253 + $0x14] sm:$0xf]
  %v260 = vld [vmem:[%s253 + $0x18] sm:$0xf]
  %v261 = vld [vmem:[%s253 + $0x1c] sm:$0xf]
  %v270 = vunpack.c.l.b16 %v254
  %v271 = vunpack.c.l.b16 %v255
  %v272 = vunpack.c.l.b16 %v256
  %v273 = vunpack.c.l.b16 %v257
  %v274 = vunpack.c.l.b16 %v258
  %v275 = vunpack.c.l.b16 %v259
  %v276 = vunpack.c.l.b16 %v260
  %v277 = vunpack.c.l.b16 %v261
  %v278 = vpack.c.b16 %v271, %v270
  %v279 = vpack.c.b16 %v273, %v272
  %v280 = vpack.c.b16 %v275, %v274
  %v281 = vpack.c.b16 %v277, %v276
  %v287 = vsel %vm51, %v252, 0
  %289 = vmatprep.subr.bf16.mxu0 0
  %290 = vmatpush1.bf16.msra.mxu0 0
  %291 = vmatprep.subr.bf16.mxu0 0
  %292 = vmatpush1.bf16.msra.mxu0 0
  %293 = vmatprep.subr.bf16.mxu0 0
  %294 = vmatpush1.bf16.msra.mxu0 0
  %295 = vmatprep.subr.bf16.mxu0 0
  %296 = vmatpush1.bf16.msra.mxu0 0
  %297 = vmatprep.subr.bf16.mxu0 0
  %298 = vmatpush1.bf16.msra.mxu0 %v281
  %299 = vmatprep.subr.bf16.mxu0 0
  %300 = vmatpush1.bf16.msra.mxu0 %v280
  %301 = vmatprep.subr.bf16.mxu0 0
  %302 = vmatpush1.bf16.msra.mxu0 %v279
  %303 = vmatprep.subr.bf16.mxu0 0
  %304 = vmatpush1.bf16.msra.mxu0 %v278
  %305 = vmatprep.subr.bf16.mxu0 0
  %306 = vmatpush2.bf16.msra.mxu0 0
  %307 = vmatprep.subr.bf16.mxu0 0
  %308 = vmatpush2.bf16.msra.mxu0 0
  %309 = vmatprep.subr.bf16.mxu0 0
  %310 = vmatpush2.bf16.msra.mxu0 0
  %311 = vmatprep.subr.bf16.mxu0 0
  %312 = vmatpush2.bf16.msra.mxu0 0
  %313 = vmatprep.subr.bf16.mxu0 0
  %314 = vmatpush2.bf16.msra.mxu0 0
  %315 = vmatprep.subr.bf16.mxu0 0
  %316 = vmatpush2.bf16.msra.mxu0 0
  %317 = vmatprep.subr.bf16.mxu0 0
  %318 = vmatpush2.bf16.msra.mxu0 0
  %319 = vmatprep.subr.bf16.mxu0 0
  %320 = vmatpush2.bf16.msra.mxu0 0
  %321 = vmatprep.mubr.bf16.mxu0 0
  %322 = vmatmul.mubr.bf16.gmra.mxu0 %v287
  %v323 = vpop.f32.mrf.mxu0
  %v324 = vadd.f32 0.0, %v323
  %v325 = vpop.f32.mrf.mxu0
  %v326 = vpop.f32.mrf.mxu0
  %v327 = vpop.f32.mrf.mxu0
  %328 = vdwg.mxu0
  %329 = vadd.xlane.f32.xlu0 %v90
  %v330 = vpop.xlane.xlu0 %329
  %v331 = vadd.f32 %v330, 0.0
  %332 = vadd.xlane.f32.xlu0 %v168
  %v333 = vpop.xlane.xlu0 %332
  %v334 = vadd.f32 %v331, %v333
  %335 = vadd.xlane.f32.xlu0 %v246
  %v336 = vpop.xlane.xlu0 %335
  %v337 = vadd.f32 %v334, %v336
  %338 = vadd.xlane.f32.xlu0 %v324
  %v339 = vpop.xlane.xlu0 %338
  %v340 = vadd.f32 %v337, %v339
  %v341 = vmul.f32 %v90, %v90
  %342 = vadd.xlane.f32.xlu0 %v341
  %v343 = vpop.xlane.xlu0 %342
  %v344 = vadd.f32 %v343, 0.0
  %v345 = vmul.f32 %v168, %v168
  %346 = vadd.xlane.f32.xlu0 %v345
  %v347 = vpop.xlane.xlu0 %346
  %v348 = vadd.f32 %v344, %v347
  %v349 = vmul.f32 %v246, %v246
  %350 = vadd.xlane.f32.xlu0 %v349
  %v351 = vpop.xlane.xlu0 %350
  %v352 = vadd.f32 %v348, %v351
  %v353 = vmul.f32 %v324, %v324
  %354 = vadd.xlane.f32.xlu0 %v353
  %v355 = vpop.xlane.xlu0 %354
  %v356 = vadd.f32 %v352, %v355
  %v357 = vmul.f32 %v340, 0.001953125
  %v358 = vmul.f32 %v356, 0.001953125
  %v359 = vmul.f32 %v357, %v357
  %v360 = vsub.f32 %v358, %v359
  %v361 = vld [vmem:[%s2] sm:$0xff]
  %v362 = vadd.f32 %v360, 1e-05
  %v363 = vrsqrt.pop %v362
  %v364 = vmul.f32 %v361, %v363
  %v365 = vld [vmem:[%s3] sm:$0xff]
  %v366 = vmul.f32 %v357, %v364
  %v367 = vsub.f32 %v365, %v366
  %369 = vset.pattern.permute.xlu0 0
  %370 = vperm.xlu0 %369, %v364
  %v371 = vpop.permute.xlu0 %370
  %v373 = vmul.f32 %v90, %v371
  %375 = vset.pattern.permute.xlu0 0
  %376 = vperm.xlu0 %375, %v367
  %v377 = vpop.permute.xlu0 %376
  %v379 = vadd.f32 %v373, %v377
  %v380 = vmax.f32 %v379, 0.0
  %v381 = vpack.c.bf16 %v380, %v380
  %382 = vst [vmem:[%s4] sm:$0xf] %v381
  %v383 = vmul.f32 %v168, %v371
  %v384 = vadd.f32 %v383, %v377
  %v385 = vmax.f32 %v384, 0.0
  %v386 = vpack.c.bf16 %v385, %v385
  %s387 = scalar_lea.vmem %s4, 4
  %388 = vst [vmem:[%s387] sm:$0xf] %v386
  %v389 = vmul.f32 %v246, %v371
  %v390 = vadd.f32 %v389, %v377
  %v391 = vmax.f32 %v390, 0.0
  %v392 = vpack.c.bf16 %v391, %v391
  %s393 = scalar_lea.vmem %s4, 8
  %394 = vst [vmem:[%s393] sm:$0xf] %v392
  %v395 = vmul.f32 %v324, %v371
  %v396 = vadd.f32 %v395, %v377
  %v397 = vmax.f32 %v396, 0.0
  %v398 = vpack.c.bf16 %v397, %v397
  %s399 = scalar_lea.vmem %s4, 12
  %400 = vst [vmem:[%s399] sm:$0xf] %v398
  // Predicated region
  $region18: #{generator_forward.14} parent=0 // pred_check
    _
  $region19: #{generator_forward.14} parent=0 // pred_check_branch
    %402 = sbr.rel (0) target = $region21
  $region20: #{generator_forward.14} parent=0 // pred_region
    _
  $region21: #{generator_forward.14} parent=0 // pred_fallthru
    _
  // Predicated region
  $region22: #{generator_forward.14} parent=0 // pred_check
    _
  $region23: #{generator_forward.14} parent=0 // pred_check_branch
    %404 = sbr.rel (0) target = $region25
  $region24: #{generator_forward.14} parent=0 // pred_region
    _
  $region25: #{generator_forward.14} parent=0 // pred_fallthru
    _

// kernel: generator_forward.15
$region0: #{generator_forward.15}
  #allocation0 [shape = 'u32[]', space=smem, size = 0x4, offset = 0x4, fixed_abs, tag = 'smem constant byte address 0x4 - core index']
  #allocation1 [shape = 'u32[144,128]{1,0:T(1,128)}', space=vmem, size = 0x12000, scoped, tag = 'internal scratch']
  %s0 = inlined_call_operand.vmem [shape: bf16[4,32,512], index: 0, kind: input, shape index: {}]
  %s1 = inlined_call_operand.vmem [shape: bf16[4,3,32], index: 1, kind: input, shape index: {}]
  %s2 = inlined_call_operand.vmem [shape: f32[3,1], index: 2, kind: input, shape index: {}]
  %s3 = inlined_call_operand.vmem [shape: f32[3,1], index: 3, kind: input, shape index: {}]
  %s4 = inlined_call_operand.vmem [shape: f32[4,3,512], index: 4, kind: output, shape index: {}]
  %s5 = sld [smem:[#allocation0]]
  $region26: #{generator_forward.15} parent=0
    _
  %s7 = ssub.s32 1, %s5
  %s8 = scalar_select 0, %s7, %s5
  // Predicated region
  $region2: #{generator_forward.15} parent=0 // pred_check
    _
  $region3: #{generator_forward.15} parent=0 // pred_check_branch
    %10 = sbr.rel (0) target = $region5
  $region4: #{generator_forward.15} parent=0 // pred_region
    _
  $region5: #{generator_forward.15} parent=0 // pred_fallthru
    _
  // Predicated region
  $region6: #{generator_forward.15} parent=0 // pred_check
    _
  $region7: #{generator_forward.15} parent=0 // pred_check_branch
    %12 = sbr.rel (0) target = $region9
  $region8: #{generator_forward.15} parent=0 // pred_region
    _
  $region9: #{generator_forward.15} parent=0 // pred_fallthru
    _
  // Predicated region
  $region10: #{generator_forward.15} parent=0 // pred_check
    _
  $region11: #{generator_forward.15} parent=0 // pred_check_branch
    %14 = sbr.rel (0) target = $region13
  $region12: #{generator_forward.15} parent=0 // pred_region
    _
  $region13: #{generator_forward.15} parent=0 // pred_fallthru
    _
  // Predicated region
  $region14: #{generator_forward.15} parent=0 // pred_check
    _
  $region15: #{generator_forward.15} parent=0 // pred_check_branch
    %16 = sbr.rel (0) target = $region17
  $region16: #{generator_forward.15} parent=0 // pred_region
    _
  $region17: #{generator_forward.15} parent=0 // pred_fallthru
    _
  %v18 = vld [vmem:[%s1] sm:$0x3]
  %v19 = vld [vmem:[%s0] sm:$0xff]
  %v20 = vld [vmem:[%s0 + $0x8] sm:$0xff]
  %v21 = vld [vmem:[%s0 + $0x10] sm:$0xff]
  %v22 = vld [vmem:[%s0 + $0x18] sm:$0xff]
  %v23 = vld [vmem:[%s0 + $0x20] sm:$0xff]
  %v24 = vld [vmem:[%s0 + $0x28] sm:$0xff]
  %v25 = vld [vmem:[%s0 + $0x30] sm:$0xff]
  %v26 = vld [vmem:[%s0 + $0x38] sm:$0xff]
  %s27 = scalar_lea.vmem %s1, 2
  %v28 = vld [vmem:[%s27] sm:$0x3]
  %s29 = scalar_lea.vmem %s0, 64
  %v30 = vld [vmem:[%s29] sm:$0xff]
  %v31 = vld [vmem:[%s29 + $0x8] sm:$0xff]
  %v32 = vld [vmem:[%s29 + $0x10] sm:$0xff]
  %v33 = vld [vmem:[%s29 + $0x18] sm:$0xff]
  %v34 = vld [vmem:[%s29 + $0x20] sm:$0xff]
  %v35 = vld [vmem:[%s29 + $0x28] sm:$0xff]
  %v36 = vld [vmem:[%s29 + $0x30] sm:$0xff]
  %v37 = vld [vmem:[%s29 + $0x38] sm:$0xff]
  %s38 = scalar_lea.vmem %s1, 4
  %v39 = vld [vmem:[%s38] sm:$0x3]
  %s40 = scalar_lea.vmem %s0, 128
  %v41 = vld [vmem:[%s40] sm:$0xff]
  %v42 = vld [vmem:[%s40 + $0x8] sm:$0xff]
  %v43 = vld [vmem:[%s40 + $0x10] sm:$0xff]
  %v44 = vld [vmem:[%s40 + $0x18] sm:$0xff]
  %v45 = vld [vmem:[%s40 + $0x20] sm:$0xff]
  %v46 = vld [vmem:[%s40 + $0x28] sm:$0xff]
  %v47 = vld [vmem:[%s40 + $0x30] sm:$0xff]
  %v48 = vld [vmem:[%s40 + $0x38] sm:$0xff]
  %s49 = scalar_lea.vmem %s1, 6
  %v50 = vld [vmem:[%s49] sm:$0x3]
  %s51 = scalar_lea.vmem %s0, 192
  %v52 = vld [vmem:[%s51] sm:$0xff]
  %v53 = vld [vmem:[%s51 + $0x8] sm:$0xff]
  %v54 = vld [vmem:[%s51 + $0x10] sm:$0xff]
  %v55 = vld [vmem:[%s51 + $0x18] sm:$0xff]
  %v56 = vld [vmem:[%s51 + $0x20] sm:$0xff]
  %v57 = vld [vmem:[%s51 + $0x28] sm:$0xff]
  %v58 = vld [vmem:[%s51 + $0x30] sm:$0xff]
  %v59 = vld [vmem:[%s51 + $0x38] sm:$0xff]
  %v60 = vld [vmem:[%s2] sm:$0x7]
  %62 = vset.pattern.permute.xlu0 0
  %63 = vperm.xlu0 %62, %v60
  %v64 = vpop.permute.xlu0 %63
  %v74 = vunpack.c.l.b16 %v19
  %v75 = vunpack.c.h.b16 %v19
  %v76 = vunpack.c.l.b16 %v20
  %v77 = vunpack.c.h.b16 %v20
  %v78 = vunpack.c.l.b16 %v21
  %v79 = vunpack.c.h.b16 %v21
  %v80 = vunpack.c.l.b16 %v22
  %v81 = vunpack.c.h.b16 %v22
  %v82 = vunpack.c.l.b16 %v23
  %v83 = vunpack.c.h.b16 %v23
  %v84 = vunpack.c.l.b16 %v24
  %v85 = vunpack.c.h.b16 %v24
  %v86 = vunpack.c.l.b16 %v25
  %v87 = vunpack.c.h.b16 %v25
  %v88 = vunpack.c.l.b16 %v26
  %v89 = vunpack.c.h.b16 %v26
  %v90 = vpack.c.b16 %v78, %v74
  %v91 = vpack.c.b16 %v79, %v75
  %v92 = vpack.c.b16 %v80, %v76
  %v93 = vpack.c.b16 %v81, %v77
  %v94 = vpack.c.b16 %v86, %v82
  %v95 = vpack.c.b16 %v87, %v83
  %v96 = vpack.c.b16 %v88, %v84
  %v97 = vpack.c.b16 %v89, %v85
  %vm106 = vcmask 261120
  %v108 = vsel %vm106, %v18, 0
  %110 = vmatprep.subr.bf16.mxu0 0
  %111 = vmatpush1.bf16.msra.mxu0 0
  %112 = vmatprep.subr.bf16.mxu0 0
  %113 = vmatpush1.bf16.msra.mxu0 0
  %114 = vmatprep.subr.bf16.mxu0 0
  %115 = vmatpush1.bf16.msra.mxu0 0
  %116 = vmatprep.subr.bf16.mxu0 0
  %117 = vmatpush1.bf16.msra.mxu0 0
  %118 = vmatprep.subr.bf16.mxu0 0
  %119 = vmatpush1.bf16.msra.mxu0 0
  %120 = vmatprep.subr.bf16.mxu0 0
  %121 = vmatpush1.bf16.msra.mxu0 0
  %122 = vmatprep.subr.bf16.mxu0 %v95
  %123 = vmatpush1.bf16.msra.mxu0 %v94
  %124 = vmatprep.subr.bf16.mxu0 %v91
  %125 = vmatpush1.bf16.msra.mxu0 %v90
  %126 = vmatprep.subr.bf16.mxu0 0
  %127 = vmatpush2.bf16.msra.mxu0 0
  %128 = vmatprep.subr.bf16.mxu0 0
  %129 = vmatpush2.bf16.msra.mxu0 0
  %130 = vmatprep.subr.bf16.mxu0 0
  %131 = vmatpush2.bf16.msra.mxu0 0
  %132 = vmatprep.subr.bf16.mxu0 0
  %133 = vmatpush2.bf16.msra.mxu0 0
  %134 = vmatprep.subr.bf16.mxu0 0
  %135 = vmatpush2.bf16.msra.mxu0 0
  %136 = vmatprep.subr.bf16.mxu0 0
  %137 = vmatpush2.bf16.msra.mxu0 0
  %138 = vmatprep.subr.bf16.mxu0 0
  %139 = vmatpush2.bf16.msra.mxu0 0
  %140 = vmatprep.subr.bf16.mxu0 0
  %141 = vmatpush2.bf16.msra.mxu0 0
  %142 = vmatprep.mubr.bf16.mxu0 0
  %143 = vmatmul.mubr.bf16.gmra.mxu0 %v108
  %v144 = vpop.f32.mrf.mxu0
  %v145 = vadd.f32 %v64, %v144
  %v146 = vpop.f32.mrf.mxu0
  %v147 = vadd.f32 %v64, %v146
  %v148 = vpop.f32.mrf.mxu0
  %v149 = vpop.f32.mrf.mxu0
  %150 = vdwg.mxu0
  %151 = vmatprep.subr.bf16.mxu0 0
  %152 = vmatpush1.bf16.msra.mxu0 0
  %153 = vmatprep.subr.bf16.mxu0 0
  %154 = vmatpush1.bf16.msra.mxu0 0
  %155 = vmatprep.subr.bf16.mxu0 0
  %156 = vmatpush1.bf16.msra.mxu0 0
  %157 = vmatprep.subr.bf16.mxu0 0
  %158 = vmatpush1.bf16.msra.mxu0 0
  %159 = vmatprep.subr.bf16.mxu0 0
  %160 = vmatpush1.bf16.msra.mxu0 0
  %161 = vmatprep.subr.bf16.mxu0 0
  %162 = vmatpush1.bf16.msra.mxu0 0
  %163 = vmatprep.subr.bf16.mxu0 %v97
  %164 = vmatpush1.bf16.msra.mxu0 %v96
  %165 = vmatprep.subr.bf16.mxu0 %v93
  %166 = vmatpush1.bf16.msra.mxu0 %v92
  %167 = vmatprep.subr.bf16.mxu0 0
  %168 = vmatpush2.bf16.msra.mxu0 0
  %169 = vmatprep.subr.bf16.mxu0 0
  %170 = vmatpush2.bf16.msra.mxu0 0
  %171 = vmatprep.subr.bf16.mxu0 0
  %172 = vmatpush2.bf16.msra.mxu0 0
  %173 = vmatprep.subr.bf16.mxu0 0
  %174 = vmatpush2.bf16.msra.mxu0 0
  %175 = vmatprep.subr.bf16.mxu0 0
  %176 = vmatpush2.bf16.msra.mxu0 0
  %177 = vmatprep.subr.bf16.mxu0 0
  %178 = vmatpush2.bf16.msra.mxu0 0
  %179 = vmatprep.subr.bf16.mxu0 0
  %180 = vmatpush2.bf16.msra.mxu0 0
  %181 = vmatprep.subr.bf16.mxu0 0
  %182 = vmatpush2.bf16.msra.mxu0 0
  %183 = vmatprep.mubr.bf16.mxu0 0
  %184 = vmatmul.mubr.bf16.gmra.mxu0 %v108
  %v185 = vpop.f32.mrf.mxu0
  %v186 = vadd.f32 %v64, %v185
  %v187 = vpop.f32.mrf.mxu0
  %v188 = vadd.f32 %v64, %v187
  %v189 = vpop.f32.mrf.mxu0
  %v190 = vpop.f32.mrf.mxu0
  %191 = vdwg.mxu0
  %v192 = vtanh.pop %v145
  %v193 = vtanh.pop %v147
  %v194 = vtanh.pop %v186
  %v195 = vtanh.pop %v188
  %v200 = vcombine.low %v192, %v193
  %v201 = vcombine.low %v194, %v195
  %204 = vst [vmem:[%s4] sm:$0x77] %v200
  %205 = vst [vmem:[%s4 + $0x8] sm:$0x77] %v201
  %v214 = vunpack.c.l.b16 %v30
  %v215 = vunpack.c.h.b16 %v30
  %v216 = vunpack.c.l.b16 %v31
  %v217 = vunpack.c.h.b16 %v31
  %v218 = vunpack.c.l.b16 %v32
  %v219 = vunpack.c.h.b16 %v32
  %v220 = vunpack.c.l.b16 %v33
  %v221 = vunpack.c.h.b16 %v33
  %v222 = vunpack.c.l.b16 %v34
  %v223 = vunpack.c.h.b16 %v34
  %v224 = vunpack.c.l.b16 %v35
  %v225 = vunpack.c.h.b16 %v35
  %v226 = vunpack.c.l.b16 %v36
  %v227 = vunpack.c.h.b16 %v36
  %v228 = vunpack.c.l.b16 %v37
  %v229 = vunpack.c.h.b16 %v37
  %v230 = vpack.c.b16 %v218, %v214
  %v231 = vpack.c.b16 %v219, %v215
  %v232 = vpack.c.b16 %v220, %v216
  %v233 = vpack.c.b16 %v221, %v217
  %v234 = vpack.c.b16 %v226, %v222
  %v235 = vpack.c.b16 %v227, %v223
  %v236 = vpack.c.b16 %v228, %v224
  %v237 = vpack.c.b16 %v229, %v225
  %v247 = vsel %vm106, %v28, 0
  %249 = vmatprep.subr.bf16.mxu0 0
  %250 = vmatpush1.bf16.msra.mxu0 0
  %251 = vmatprep.subr.bf16.mxu0 0
  %252 = vmatpush1.bf16.msra.mxu0 0
  %253 = vmatprep.subr.bf16.mxu0 0
  %254 = vmatpush1.bf16.msra.mxu0 0
  %255 = vmatprep.subr.bf16.mxu0 0
  %256 = vmatpush1.bf16.msra.mxu0 0
  %257 = vmatprep.subr.bf16.mxu0 0
  %258 = vmatpush1.bf16.msra.mxu0 0
  %259 = vmatprep.subr.bf16.mxu0 0
  %260 = vmatpush1.bf16.msra.mxu0 0
  %261 = vmatprep.subr.bf16.mxu0 %v235
  %262 = vmatpush1.bf16.msra.mxu0 %v234
  %263 = vmatprep.subr.bf16.mxu0 %v231
  %264 = vmatpush1.bf16.msra.mxu0 %v230
  %265 = vmatprep.subr.bf16.mxu0 0
  %266 = vmatpush2.bf16.msra.mxu0 0
  %267 = vmatprep.subr.bf16.mxu0 0
  %268 = vmatpush2.bf16.msra.mxu0 0
  %269 = vmatprep.subr.bf16.mxu0 0
  %270 = vmatpush2.bf16.msra.mxu0 0
  %271 = vmatprep.subr.bf16.mxu0 0
  %272 = vmatpush2.bf16.msra.mxu0 0
  %273 = vmatprep.subr.bf16.mxu0 0
  %274 = vmatpush2.bf16.msra.mxu0 0
  %275 = vmatprep.subr.bf16.mxu0 0
  %276 = vmatpush2.bf16.msra.mxu0 0
  %277 = vmatprep.subr.bf16.mxu0 0
  %278 = vmatpush2.bf16.msra.mxu0 0
  %279 = vmatprep.subr.bf16.mxu0 0
  %280 = vmatpush2.bf16.msra.mxu0 0
  %281 = vmatprep.mubr.bf16.mxu0 0
  %282 = vmatmul.mubr.bf16.gmra.mxu0 %v247
  %v283 = vpop.f32.mrf.mxu0
  %v284 = vadd.f32 %v64, %v283
  %v285 = vpop.f32.mrf.mxu0
  %v286 = vadd.f32 %v64, %v285
  %v287 = vpop.f32.mrf.mxu0
  %v288 = vpop.f32.mrf.mxu0
  %289 = vdwg.mxu0
  %290 = vmatprep.subr.bf16.mxu0 0
  %291 = vmatpush1.bf16.msra.mxu0 0
  %292 = vmatprep.subr.bf16.mxu0 0
  %293 = vmatpush1.bf16.msra.mxu0 0
  %294 = vmatprep.subr.bf16.mxu0 0
  %295 = vmatpush1.bf16.msra.mxu0 0
  %296 = vmatprep.subr.bf16.mxu0 0
  %297 = vmatpush1.bf16.msra.mxu0 0
  %298 = vmatprep.subr.bf16.mxu0 0
  %299 = vmatpush1.bf16.msra.mxu0 0
  %300 = vmatprep.subr.bf16.mxu0 0
  %301 = vmatpush1.bf16.msra.mxu0 0
  %302 = vmatprep.subr.bf16.mxu0 %v237
  %303 = vmatpush1.bf16.msra.mxu0 %v236
  %304 = vmatprep.subr.bf16.mxu0 %v233
  %305 = vmatpush1.bf16.msra.mxu0 %v232
  %306 = vmatprep.subr.bf16.mxu0 0
  %307 = vmatpush2.bf16.msra.mxu0 0
  %308 = vmatprep.subr.bf16.mxu0 0
  %309 = vmatpush2.bf16.msra.mxu0 0
  %310 = vmatprep.subr.bf16.mxu0 0
  %311 = vmatpush2.bf16.msra.mxu0 0
  %312 = vmatprep.subr.bf16.mxu0 0
  %313 = vmatpush2.bf16.msra.mxu0 0
  %314 = vmatprep.subr.bf16.mxu0 0
  %315 = vmatpush2.bf16.msra.mxu0 0
  %316 = vmatprep.subr.bf16.mxu0 0
  %317 = vmatpush2.bf16.msra.mxu0 0
  %318 = vmatprep.subr.bf16.mxu0 0
  %319 = vmatpush2.bf16.msra.mxu0 0
  %320 = vmatprep.subr.bf16.mxu0 0
  %321 = vmatpush2.bf16.msra.mxu0 0
  %322 = vmatprep.mubr.bf16.mxu0 0
  %323 = vmatmul.mubr.bf16.gmra.mxu0 %v247
  %v324 = vpop.f32.mrf.mxu0
  %v325 = vadd.f32 %v64, %v324
  %v326 = vpop.f32.mrf.mxu0
  %v327 = vadd.f32 %v64, %v326
  %v328 = vpop.f32.mrf.mxu0
  %v329 = vpop.f32.mrf.mxu0
  %330 = vdwg.mxu0
  %v331 = vtanh.pop %v284
  %v332 = vtanh.pop %v286
  %v333 = vtanh.pop %v325
  %v334 = vtanh.pop %v327
  %v339 = vcombine.low %v331, %v332
  %v340 = vcombine.low %v333, %v334
  %s343 = scalar_lea.vmem %s4, 16
  %344 = vst [vmem:[%s343] sm:$0x77] %v339
  %345 = vst [vmem:[%s343 + $0x8] sm:$0x77] %v340
  %v354 = vunpack.c.l.b16 %v41
  %v355 = vunpack.c.h.b16 %v41
  %v356 = vunpack.c.l.b16 %v42
  %v357 = vunpack.c.h.b16 %v42
  %v358 = vunpack.c.l.b16 %v43
  %v359 = vunpack.c.h.b16 %v43
  %v360 = vunpack.c.l.b16 %v44
  %v361 = vunpack.c.h.b16 %v44
  %v362 = vunpack.c.l.b16 %v45
  %v363 = vunpack.c.h.b16 %v45
  %v364 = vunpack.c.l.b16 %v46
  %v365 = vunpack.c.h.b16 %v46
  %v366 = vunpack.c.l.b16 %v47
  %v367 = vunpack.c.h.b16 %v47
  %v368 = vunpack.c.l.b16 %v48
  %v369 = vunpack.c.h.b16 %v48
  %v370 = vpack.c.b16 %v358, %v354
  %v371 = vpack.c.b16 %v359, %v355
  %v372 = vpack.c.b16 %v360, %v356
  %v373 = vpack.c.b16 %v361, %v357
  %v374 = vpack.c.b16 %v366, %v362
  %v375 = vpack.c.b16 %v367, %v363
  %v376 = vpack.c.b16 %v368, %v364
  %v377 = vpack.c.b16 %v369, %v365
  %v387 = vsel %vm106, %v39, 0
  %389 = vmatprep.subr.bf16.mxu0 0
  %390 = vmatpush1.bf16.msra.mxu0 0
  %391 = vmatprep.subr.bf16.mxu0 0
  %392 = vmatpush1.bf16.msra.mxu0 0
  %393 = vmatprep.subr.bf16.mxu0 0
  %394 = vmatpush1.bf16.msra.mxu0 0
  %395 = vmatprep.subr.bf16.mxu0 0
  %396 = vmatpush1.bf16.msra.mxu0 0
  %397 = vmatprep.subr.bf16.mxu0 0
  %398 = vmatpush1.bf16.msra.mxu0 0
  %399 = vmatprep.subr.bf16.mxu0 0
  %400 = vmatpush1.bf16.msra.mxu0 0
  %401 = vmatprep.subr.bf16.mxu0 %v375
  %402 = vmatpush1.bf16.msra.mxu0 %v374
  %403 = vmatprep.subr.bf16.mxu0 %v371
  %404 = vmatpush1.bf16.msra.mxu0 %v370
  %405 = vmatprep.subr.bf16.mxu0 0
  %406 = vmatpush2.bf16.msra.mxu0 0
  %407 = vmatprep.subr.bf16.mxu0 0
  %408 = vmatpush2.bf16.msra.mxu0 0
  %409 = vmatprep.subr.bf16.mxu0 0
  %410 = vmatpush2.bf16.msra.mxu0 0
  %411 = vmatprep.subr.bf16.mxu0 0
  %412 = vmatpush2.bf16.msra.mxu0 0
  %413 = vmatprep.subr.bf16.mxu0 0
  %414 = vmatpush2.bf16.msra.mxu0 0
  %415 = vmatprep.subr.bf16.mxu0 0
  %416 = vmatpush2.bf16.msra.mxu0 0
  %417 = vmatprep.subr.bf16.mxu0 0
  %418 = vmatpush2.bf16.msra.mxu0 0
  %419 = vmatprep.subr.bf16.mxu0 0
  %420 = vmatpush2.bf16.msra.mxu0 0
  %421 = vmatprep.mubr.bf16.mxu0 0
  %422 = vmatmul.mubr.bf16.gmra.mxu0 %v387
  %v423 = vpop.f32.mrf.mxu0
  %v424 = vadd.f32 %v64, %v423
  %v425 = vpop.f32.mrf.mxu0
  %v426 = vadd.f32 %v64, %v425
  %v427 = vpop.f32.mrf.mxu0
  %v428 = vpop.f32.mrf.mxu0
  %429 = vdwg.mxu0
  %430 = vmatprep.subr.bf16.mxu0 0
  %431 = vmatpush1.bf16.msra.mxu0 0
  %432 = vmatprep.subr.bf16.mxu0 0
  %433 = vmatpush1.bf16.msra.mxu0 0
  %434 = vmatprep.subr.bf16.mxu0 0
  %435 = vmatpush1.bf16.msra.mxu0 0
  %436 = vmatprep.subr.bf16.mxu0 0
  %437 = vmatpush1.bf16.msra.mxu0 0
  %438 = vmatprep.subr.bf16.mxu0 0
  %439 = vmatpush1.bf16.msra.mxu0 0
  %440 = vmatprep.subr.bf16.mxu0 0
  %441 = vmatpush1.bf16.msra.mxu0 0
  %442 = vmatprep.subr.bf16.mxu0 %v377
  %443 = vmatpush1.bf16.msra.mxu0 %v376
  %444 = vmatprep.subr.bf16.mxu0 %v373
  %445 = vmatpush1.bf16.msra.mxu0 %v372
  %446 = vmatprep.subr.bf16.mxu0 0
  %447 = vmatpush2.bf16.msra.mxu0 0
  %448 = vmatprep.subr.bf16.mxu0 0
  %449 = vmatpush2.bf16.msra.mxu0 0
  %450 = vmatprep.subr.bf16.mxu0 0
  %451 = vmatpush2.bf16.msra.mxu0 0
  %452 = vmatprep.subr.bf16.mxu0 0
  %453 = vmatpush2.bf16.msra.mxu0 0
  %454 = vmatprep.subr.bf16.mxu0 0
  %455 = vmatpush2.bf16.msra.mxu0 0
  %456 = vmatprep.subr.bf16.mxu0 0
  %457 = vmatpush2.bf16.msra.mxu0 0
  %458 = vmatprep.subr.bf16.mxu0 0
  %459 = vmatpush2.bf16.msra.mxu0 0
  %460 = vmatprep.subr.bf16.mxu0 0
  %461 = vmatpush2.bf16.msra.mxu0 0
  %462 = vmatprep.mubr.bf16.mxu0 0
  %463 = vmatmul.mubr.bf16.gmra.mxu0 %v387
  %v464 = vpop.f32.mrf.mxu0
  %v465 = vadd.f32 %v64, %v464
  %v466 = vpop.f32.mrf.mxu0
  %v467 = vadd.f32 %v64, %v466
  %v468 = vpop.f32.mrf.mxu0
  %v469 = vpop.f32.mrf.mxu0
  %470 = vdwg.mxu0
  %v471 = vtanh.pop %v424
  %v472 = vtanh.pop %v426
  %v473 = vtanh.pop %v465
  %v474 = vtanh.pop %v467
  %v479 = vcombine.low %v471, %v472
  %v480 = vcombine.low %v473, %v474
  %s483 = scalar_lea.vmem %s4, 32
  %484 = vst [vmem:[%s483] sm:$0x77] %v479
  %485 = vst [vmem:[%s483 + $0x8] sm:$0x77] %v480
  %v494 = vunpack.c.l.b16 %v52
  %v495 = vunpack.c.h.b16 %v52
  %v496 = vunpack.c.l.b16 %v53
  %v497 = vunpack.c.h.b16 %v53
  %v498 = vunpack.c.l.b16 %v54
  %v499 = vunpack.c.h.b16 %v54
  %v500 = vunpack.c.l.b16 %v55
  %v501 = vunpack.c.h.b16 %v55
  %v502 = vunpack.c.l.b16 %v56
  %v503 = vunpack.c.h.b16 %v56
  %v504 = vunpack.c.l.b16 %v57
  %v505 = vunpack.c.h.b16 %v57
  %v506 = vunpack.c.l.b16 %v58
  %v507 = vunpack.c.h.b16 %v58
  %v508 = vunpack.c.l.b16 %v59
  %v509 = vunpack.c.h.b16 %v59
  %v510 = vpack.c.b16 %v498, %v494
  %v511 = vpack.c.b16 %v499, %v495
  %v512 = vpack.c.b16 %v500, %v496
  %v513 = vpack.c.b16 %v501, %v497
  %v514 = vpack.c.b16 %v506, %v502
  %v515 = vpack.c.b16 %v507, %v503
  %v516 = vpack.c.b16 %v508, %v504
  %v517 = vpack.c.b16 %v509, %v505
  %v527 = vsel %vm106, %v50, 0
  %529 = vmatprep.subr.bf16.mxu0 0
  %530 = vmatpush1.bf16.msra.mxu0 0
  %531 = vmatprep.subr.bf16.mxu0 0
  %532 = vmatpush1.bf16.msra.mxu0 0
  %533 = vmatprep.subr.bf16.mxu0 0
  %534 = vmatpush1.bf16.msra.mxu0 0
  %535 = vmatprep.subr.bf16.mxu0 0
  %536 = vmatpush1.bf16.msra.mxu0 0
  %537 = vmatprep.subr.bf16.mxu0 0
  %538 = vmatpush1.bf16.msra.mxu0 0
  %539 = vmatprep.subr.bf16.mxu0 0
  %540 = vmatpush1.bf16.msra.mxu0 0
  %541 = vmatprep.subr.bf16.mxu0 %v515
  %542 = vmatpush1.bf16.msra.mxu0 %v514
  %543 = vmatprep.subr.bf16.mxu0 %v511
  %544 = vmatpush1.bf16.msra.mxu0 %v510
  %545 = vmatprep.subr.bf16.mxu0 0
  %546 = vmatpush2.bf16.msra.mxu0 0
  %547 = vmatprep.subr.bf16.mxu0 0
  %548 = vmatpush2.bf16.msra.mxu0 0
  %549 = vmatprep.subr.bf16.mxu0 0
  %550 = vmatpush2.bf16.msra.mxu0 0
  %551 = vmatprep.subr.bf16.mxu0 0
  %552 = vmatpush2.bf16.msra.mxu0 0
  %553 = vmatprep.subr.bf16.mxu0 0
  %554 = vmatpush2.bf16.msra.mxu0 0
  %555 = vmatprep.subr.bf16.mxu0 0
  %556 = vmatpush2.bf16.msra.mxu0 0
  %557 = vmatprep.subr.bf16.mxu0 0
  %558 = vmatpush2.bf16.msra.mxu0 0
  %559 = vmatprep.subr.bf16.mxu0 0
  %560 = vmatpush2.bf16.msra.mxu0 0
  %561 = vmatprep.mubr.bf16.mxu0 0
  %562 = vmatmul.mubr.bf16.gmra.mxu0 %v527
  %v563 = vpop.f32.mrf.mxu0
  %v564 = vadd.f32 %v64, %v563
  %v565 = vpop.f32.mrf.mxu0
  %v566 = vadd.f32 %v64, %v565
  %v567 = vpop.f32.mrf.mxu0
  %v568 = vpop.f32.mrf.mxu0
  %569 = vdwg.mxu0
  %570 = vmatprep.subr.bf16.mxu0 0
  %571 = vmatpush1.bf16.msra.mxu0 0
  %572 = vmatprep.subr.bf16.mxu0 0
  %573 = vmatpush1.bf16.msra.mxu0 0
  %574 = vmatprep.subr.bf16.mxu0 0
  %575 = vmatpush1.bf16.msra.mxu0 0
  %576 = vmatprep.subr.bf16.mxu0 0
  %577 = vmatpush1.bf16.msra.mxu0 0
  %578 = vmatprep.subr.bf16.mxu0 0
  %579 = vmatpush1.bf16.msra.mxu0 0
  %580 = vmatprep.subr.bf16.mxu0 0
  %581 = vmatpush1.bf16.msra.mxu0 0
  %582 = vmatprep.subr.bf16.mxu0 %v517
  %583 = vmatpush1.bf16.msra.mxu0 %v516
  %584 = vmatprep.subr.bf16.mxu0 %v513
  %585 = vmatpush1.bf16.msra.mxu0 %v512
  %586 = vmatprep.subr.bf16.mxu0 0
  %587 = vmatpush2.bf16.msra.mxu0 0
  %588 = vmatprep.subr.bf16.mxu0 0
  %589 = vmatpush2.bf16.msra.mxu0 0
  %590 = vmatprep.subr.bf16.mxu0 0
  %591 = vmatpush2.bf16.msra.mxu0 0
  %592 = vmatprep.subr.bf16.mxu0 0
  %593 = vmatpush2.bf16.msra.mxu0 0
  %594 = vmatprep.subr.bf16.mxu0 0
  %595 = vmatpush2.bf16.msra.mxu0 0
  %596 = vmatprep.subr.bf16.mxu0 0
  %597 = vmatpush2.bf16.msra.mxu0 0
  %598 = vmatprep.subr.bf16.mxu0 0
  %599 = vmatpush2.bf16.msra.mxu0 0
  %600 = vmatprep.subr.bf16.mxu0 0
  %601 = vmatpush2.bf16.msra.mxu0 0
  %602 = vmatprep.mubr.bf16.mxu0 0
  %603 = vmatmul.mubr.bf16.gmra.mxu0 %v527
  %v604 = vpop.f32.mrf.mxu0
  %v605 = vadd.f32 %v64, %v604
  %v606 = vpop.f32.mrf.mxu0
  %v607 = vadd.f32 %v64, %v606
  %v608 = vpop.f32.mrf.mxu0
  %v609 = vpop.f32.mrf.mxu0
  %610 = vdwg.mxu0
  %v611 = vtanh.pop %v564
  %v612 = vtanh.pop %v566
  %v613 = vtanh.pop %v605
  %v614 = vtanh.pop %v607
  %v619 = vcombine.low %v611, %v612
  %v620 = vcombine.low %v613, %v614
  %s623 = scalar_lea.vmem %s4, 48
  %624 = vst [vmem:[%s623] sm:$0x77] %v619
  %625 = vst [vmem:[%s623 + $0x8] sm:$0x77] %v620
  // Predicated region
  $region18: #{generator_forward.15} parent=0 // pred_check
    _
  $region19: #{generator_forward.15} parent=0 // pred_check_branch
    %627 = sbr.rel (0) target = $region21
  $region20: #{generator_forward.15} parent=0 // pred_region
    _
  $region21: #{generator_forward.15} parent=0 // pred_fallthru
    _
  // Predicated region
  $region22: #{generator_forward.15} parent=0 // pred_check
    _
  $region23: #{generator_forward.15} parent=0 // pred_check_branch
    %629 = sbr.rel (0) target = $region25
  $region24: #{generator_forward.15} parent=0 // pred_region
    _
  $region25: #{generator_forward.15} parent=0 // pred_fallthru
    _

</llo_original>
